<compile_context>
chip_gen: v7x
topology: tpu7x:2x2x1
jax: 0.10.0
libtpu: 0.0.40
codegen_flags: <defaults>
</compile_context>

<pallas_src>
import functools

import jax
import jax.numpy as jnp
from jax import lax
from jax.experimental import pallas as pl
from jax.experimental.pallas import tpu as pltpu


def _grouping_kernel(starts_ref, x_ref, y_ref, z_ref, pts_ref,
                     groups_ref, centers_ref,
                     *, num_groups, group_size, idx_bits):
    BB, N = x_ref.shape
    C = pts_ref.shape[2]
    G = num_groups
    K = group_size

    M = (1 << idx_bits) - 1             # lane-index mask, M >= N - 1
    notM = jnp.int32(~M)
    INT_MAX = jnp.int32(2**31 - 1)

    x = x_ref[...]                      # [BB, N]  (N on lanes, clouds on sublanes)
    y = y_ref[...]
    z = z_ref[...]
    pts = pts_ref[...]                  # [BB, N, C]

    lane_n = lax.broadcasted_iota(jnp.int32, (BB, N), 1)        # [BB, N]
    col_g = lax.broadcasted_iota(jnp.int32, (1, G), 1)          # [1, G]

    # coords of the (random) start point of each cloud: masked lane reduction
    start = starts_ref[...]                                     # [BB, 1] int32
    m0 = lane_n == start
    cx = jnp.sum(jnp.where(m0, x, 0.0), axis=1, keepdims=True)  # [BB, 1]
    cy = jnp.sum(jnp.where(m0, y, 0.0), axis=1, keepdims=True)
    cz = jnp.sum(jnp.where(m0, z, 0.0), axis=1, keepdims=True)

    # ---------------- Farthest point sampling (serial over G) ----------------
    def fps_body(g, carry):
        min_d, cx, cy, cz, cxg, cyg, czg = carry
        # record the current center in slot g
        at_g = col_g == g
        cxg = jnp.where(at_g, cx, cxg)
        cyg = jnp.where(at_g, cy, cyg)
        czg = jnp.where(at_g, cz, czg)
        # exact squared distance current-center -> every point (pure VPU)
        dx = x - cx
        dy = y - cy
        dz = z - cz
        min_d = jnp.minimum(min_d, dx * dx + dy * dy + dz * dz)
        # fused max+argmax: single cross-lane reduction on a packed int32 key
        bits = pltpu.bitcast(min_d, jnp.int32)          # non-negative f32 -> ordered int
        packed = (bits & notM) | (M - lane_n)           # ties -> lowest index
        pmax = jnp.max(packed, axis=1, keepdims=True)   # [BB, 1]
        nxt = M - (pmax & M)                            # index of farthest point
        # gather the next center coords with masked lane reductions (no MXU)
        sel = lane_n == nxt
        cx = jnp.sum(jnp.where(sel, x, 0.0), axis=1, keepdims=True)
        cy = jnp.sum(jnp.where(sel, y, 0.0), axis=1, keepdims=True)
        cz = jnp.sum(jnp.where(sel, z, 0.0), axis=1, keepdims=True)
        return (min_d, cx, cy, cz, cxg, cyg, czg)

    init = (jnp.full((BB, N), jnp.inf, dtype=jnp.float32),
            cx, cy, cz,
            jnp.zeros((BB, G), jnp.float32),
            jnp.zeros((BB, G), jnp.float32),
            jnp.zeros((BB, G), jnp.float32))
    _, _, _, _, cxg, cyg, czg = lax.fori_loop(0, G, fps_body, init,
                                              unroll=(G <= 16))

    # one lane-dense store of all centers ([BB, 3, G]; transposed in wrapper)
    centers_ref[...] = jnp.concatenate(
        [cxg[:, None, :], cyg[:, None, :], czg[:, None, :]], axis=1)

    # ------------------- KNN (group_radius is None branch) -------------------
    dxc = x[:, None, :] - cxg[:, :, None]            # [BB, G, N]
    dyc = y[:, None, :] - cyg[:, :, None]
    dzc = z[:, None, :] - czg[:, :, None]
    dist = dxc * dxc + dyc * dyc + dzc * dzc         # exact, >= 0
    # NOTE: for very large G*N tile this over N chunks (v7x VMEM = 64 MiB).

    lane_n3 = lax.broadcasted_iota(jnp.int32, (BB, G, N), 2)
    keys0 = (pltpu.bitcast(dist, jnp.int32) & notM) | lane_n3
    k_iota = lax.broadcasted_iota(jnp.int32, (1, 1, K), 2)

    def knn_body(k, carry):
        keys, idx = carry
        kmin = jnp.min(keys, axis=2, keepdims=True)  # fused min+argmin, [BB, G, 1]
        idx_k = kmin & M
        keys = jnp.where(lane_n3 == idx_k, INT_MAX, keys)   # mask selected column
        idx = jnp.where(k_iota == k, idx_k, idx)             # record k-th index
        return keys, idx

    _, idx = lax.fori_loop(0, K, knn_body,
                           (keys0, jnp.zeros((BB, G, K), jnp.int32)),
                           unroll=(K <= 16))

    # all G*K gathers fused into ONE batched one-hot matmul on the MXU
    lane_n4 = lax.broadcasted_iota(jnp.int32, (1, 1, 1, N), 3)
    ohs = (lane_n4 == idx[:, :, :, None]).astype(jnp.float32)  # [BB, G, K, N]
    gathered = jnp.einsum("bmn,bnc->bmc", ohs.reshape(BB, G * K, N), pts,
                          preferred_element_type=jnp.float32)  # [BB, G*K, C]
    gathered = gathered.reshape(BB, G, K, C)

    # subtract the group center from the xyz channels only
    ch = lax.broadcasted_iota(jnp.int32, (1, 1, 1, C), 3)
    offset = (jnp.where(ch == 0, cxg[:, :, None, None], 0.0)
              + jnp.where(ch == 1, cyg[:, :, None, None], 0.0)
              + jnp.where(ch == 2, czg[:, :, None, None], 0.0))  # [BB, G, 1, C]
    groups_ref[...] = gathered - offset              # single slab store


def pointcloud_grouping(points, num_groups, group_size, start_idx, group_radius=None):
    """JAX/Pallas equivalent of PointcloudGrouping.forward (group_radius=None)."""
    # TODO(synk): ball_query + fill_empty_indices + /radius path (group_radius is not None)
    assert group_radius is None, "only the KNN (group_radius=None) path is implemented"
    B, N, C = points.shape
    assert C >= 3 and group_size <= N and num_groups <= N

    points = points.astype(jnp.float32)
    # coordinate planes [B, N]: inside the kernel each is (clouds x lanes), so the
    # whole serial FPS chain runs on full vregs (BB sublanes x N lanes).
    x = points[:, :, 0]
    y = points[:, :, 1]
    z = points[:, :, 2]
    starts = start_idx.astype(jnp.int32).reshape(B, 1)

    # pack several clouds per program to fill vreg sublanes; block must be a
    # multiple of 8 or the full batch (Mosaic tiling rule for 2-D inputs).
    BB = 8 if B % 8 == 0 else B
    grid = (B // BB,)
    idx_bits = max((N - 1).bit_length(), 1)

    kernel = functools.partial(_grouping_kernel, num_groups=num_groups,
                               group_size=group_size, idx_bits=idx_bits)

    grid_spec = pltpu.PrefetchScalarGridSpec(
        num_scalar_prefetch=0,
        grid=grid,
        in_specs=[
            pl.BlockSpec((BB, 1), lambda i: (i, 0)),          # start indices
            pl.BlockSpec((BB, N), lambda i: (i, 0)),          # x plane
            pl.BlockSpec((BB, N), lambda i: (i, 0)),          # y plane
            pl.BlockSpec((BB, N), lambda i: (i, 0)),          # z plane
            pl.BlockSpec((BB, N, C), lambda i: (i, 0, 0)),    # full point features
        ],
        out_specs=[
            pl.BlockSpec((BB, num_groups, group_size, C), lambda i: (i, 0, 0, 0)),
            pl.BlockSpec((BB, 3, num_groups), lambda i: (i, 0, 0)),
        ],
    )

    groups, centers_t = pl.pallas_call(
        kernel,
        out_shape=(
            jax.ShapeDtypeStruct((B, num_groups, group_size, C), jnp.float32),
            jax.ShapeDtypeStruct((B, 3, num_groups), jnp.float32),
        ),
        grid_spec=grid_spec,
        compiler_params=pltpu.CompilerParams(dimension_semantics=("parallel",)),
    )(starts, x, y, z, points)

    group_centers = jnp.transpose(centers_t, (0, 2, 1))       # [B, G, 3]
    return groups, group_centers


if __name__ == "__main__":
    key = jax.random.PRNGKey(0)
    kp, ks = jax.random.split(key)

    B, N, C = 16, 128, 6          # 16 clouds, 128 points, xyz + 3 extra feats
    num_groups, group_size = 8, 8

    points = jax.random.normal(kp, (B, N, C), dtype=jnp.float32)
    # random_start_point=True -> deterministic random start index per cloud
    start_idx = jax.random.randint(ks, (B,), 0, N, dtype=jnp.int32)

    groups, group_centers = pointcloud_grouping(points, num_groups, group_size, start_idx)
    jax.block_until_ready((groups, group_centers))

    assert groups.shape == (B, num_groups, group_size, C)
    assert group_centers.shape == (B, num_groups, 3)
    # sanity: each group center is itself a cloud point, so its nearest
    # neighbour is itself and the centered xyz of neighbour 0 must be ~0.
    assert bool(jnp.all(jnp.abs(groups[:, :, 0, :3]) < 1e-4))
    print("KERNEL_OK")
</pallas_src>

<mosaic_0001>
module attributes {stable_mosaic.version = 11 : i64} {
  func.func @_grouping_kernel(%arg0: i32, %arg1: memref<8x1xi32, #tpu.memory_space<vmem>>, %arg2: memref<8x128xf32, #tpu.memory_space<vmem>>, %arg3: memref<8x128xf32, #tpu.memory_space<vmem>>, %arg4: memref<8x128xf32, #tpu.memory_space<vmem>>, %arg5: memref<8x128x6xf32, #tpu.memory_space<vmem>>, %arg6: memref<8x8x8x6xf32, #tpu.memory_space<vmem>>, %arg7: memref<8x3x8xf32, #tpu.memory_space<vmem>>) attributes {dimension_semantics = [#tpu.dimension_semantics<parallel>], iteration_bounds = array<i64: 2>, scalar_prefetch = 0 : i64, scratch_operands = 0 : i64, tpu.core_type = #tpu.core_type<tc>, window_params = [{transform_indices = @transform_0, window_bounds = array<i64: 8, 1>}, {transform_indices = @transform_1, window_bounds = array<i64: 8, 128>}, {transform_indices = @transform_2, window_bounds = array<i64: 8, 128>}, {transform_indices = @transform_3, window_bounds = array<i64: 8, 128>}, {transform_indices = @transform_4, window_bounds = array<i64: 8, 128, 6>}, {transform_indices = @transform_5, window_bounds = array<i64: 8, 8, 8, 6>}, {transform_indices = @transform_6, window_bounds = array<i64: 8, 3, 8>}]} {
    %c0 = arith.constant 0 : index
    %c0_0 = arith.constant 0 : index
    %0 = vector.load %arg2[%c0, %c0_0] : memref<8x128xf32, #tpu.memory_space<vmem>>, vector<8x128xf32>
    %c0_1 = arith.constant 0 : index
    %c0_2 = arith.constant 0 : index
    %1 = vector.load %arg3[%c0_1, %c0_2] : memref<8x128xf32, #tpu.memory_space<vmem>>, vector<8x128xf32>
    %c0_3 = arith.constant 0 : index
    %c0_4 = arith.constant 0 : index
    %2 = vector.load %arg4[%c0_3, %c0_4] : memref<8x128xf32, #tpu.memory_space<vmem>>, vector<8x128xf32>
    %c0_5 = arith.constant 0 : index
    %c0_6 = arith.constant 0 : index
    %c0_7 = arith.constant 0 : index
    %3 = vector.load %arg5[%c0_5, %c0_6, %c0_7] : memref<8x128x6xf32, #tpu.memory_space<vmem>>, vector<8x128x6xf32>
    %4 = tpu.iota {dimensions = array<i32: 1>} : vector<8x128xi32>
    %5 = tpu.iota {dimensions = array<i32: 1>} : vector<1x8xi32>
    %c0_8 = arith.constant 0 : index
    %c0_9 = arith.constant 0 : index
    %6 = vector.load %arg1[%c0_8, %c0_9] : memref<8x1xi32, #tpu.memory_space<vmem>>, vector<8x1xi32>
    %7 = vector.broadcast %6 : vector<8x1xi32> to vector<8x128xi32>
    %8 = arith.cmpi eq, %4, %7 : vector<8x128xi32>
    %cst = arith.constant 0.000000e+00 : f32
    %9 = vector.broadcast %cst : f32 to vector<8x128xf32>
    %10 = arith.select %8, %0, %9 : vector<8x128xi1>, vector<8x128xf32>
    %cst_10 = arith.constant dense<0.000000e+00> : vector<8xf32>
    %11 = vector.multi_reduction <add>, %10, %cst_10 [1] : vector<8x128xf32> to vector<8xf32>
    %12 = vector.shape_cast %11 : vector<8xf32> to vector<8x1xf32>
    %cst_11 = arith.constant 0.000000e+00 : f32
    %13 = vector.broadcast %cst_11 : f32 to vector<8x128xf32>
    %14 = arith.select %8, %1, %13 : vector<8x128xi1>, vector<8x128xf32>
    %cst_12 = arith.constant dense<0.000000e+00> : vector<8xf32>
    %15 = vector.multi_reduction <add>, %14, %cst_12 [1] : vector<8x128xf32> to vector<8xf32>
    %16 = vector.shape_cast %15 : vector<8xf32> to vector<8x1xf32>
    %cst_13 = arith.constant 0.000000e+00 : f32
    %17 = vector.broadcast %cst_13 : f32 to vector<8x128xf32>
    %18 = arith.select %8, %2, %17 : vector<8x128xi1>, vector<8x128xf32>
    %cst_14 = arith.constant dense<0.000000e+00> : vector<8xf32>
    %19 = vector.multi_reduction <add>, %18, %cst_14 [1] : vector<8x128xf32> to vector<8xf32>
    %20 = vector.shape_cast %19 : vector<8xf32> to vector<8x1xf32>
    %cst_15 = arith.constant 0x7F800000 : f32
    %21 = vector.broadcast %cst_15 : f32 to vector<8x128xf32>
    %cst_16 = arith.constant 0.000000e+00 : f32
    %22 = vector.broadcast %cst_16 : f32 to vector<8x8xf32>
    %cst_17 = arith.constant 0.000000e+00 : f32
    %23 = vector.broadcast %cst_17 : f32 to vector<8x8xf32>
    %cst_18 = arith.constant 0.000000e+00 : f32
    %24 = vector.broadcast %cst_18 : f32 to vector<8x8xf32>
    %c-128_i32 = arith.constant -128 : i32
    %c0_i32 = arith.constant 0 : i32
    %25 = vector.broadcast %c0_i32 : i32 to vector<1x8xi32>
    %26 = arith.cmpi eq, %5, %25 : vector<1x8xi32>
    %27 = vector.shape_cast %26 : vector<1x8xi1> to vector<1x8xi1>
    %28 = vector.broadcast %27 : vector<1x8xi1> to vector<8x8xi1>
    %29 = vector.shape_cast %12 : vector<8x1xf32> to vector<8x1xf32>
    %30 = vector.broadcast %29 : vector<8x1xf32> to vector<8x8xf32>
    %31 = arith.select %28, %30, %22 : vector<8x8xi1>, vector<8x8xf32>
    %32 = vector.shape_cast %26 : vector<1x8xi1> to vector<1x8xi1>
    %33 = vector.broadcast %32 : vector<1x8xi1> to vector<8x8xi1>
    %34 = vector.shape_cast %16 : vector<8x1xf32> to vector<8x1xf32>
    %35 = vector.broadcast %34 : vector<8x1xf32> to vector<8x8xf32>
    %36 = arith.select %33, %35, %23 : vector<8x8xi1>, vector<8x8xf32>
    %37 = vector.shape_cast %26 : vector<1x8xi1> to vector<1x8xi1>
    %38 = vector.broadcast %37 : vector<1x8xi1> to vector<8x8xi1>
    %39 = vector.shape_cast %20 : vector<8x1xf32> to vector<8x1xf32>
    %40 = vector.broadcast %39 : vector<8x1xf32> to vector<8x8xf32>
    %41 = arith.select %38, %40, %24 : vector<8x8xi1>, vector<8x8xf32>
    %42 = vector.broadcast %12 : vector<8x1xf32> to vector<8x128xf32>
    %43 = arith.subf %0, %42 : vector<8x128xf32>
    %44 = vector.broadcast %16 : vector<8x1xf32> to vector<8x128xf32>
    %45 = arith.subf %1, %44 : vector<8x128xf32>
    %46 = vector.broadcast %20 : vector<8x1xf32> to vector<8x128xf32>
    %47 = arith.subf %2, %46 : vector<8x128xf32>
    %48 = arith.mulf %43, %43 : vector<8x128xf32>
    %49 = arith.mulf %45, %45 : vector<8x128xf32>
    %50 = arith.addf %48, %49 : vector<8x128xf32>
    %51 = arith.mulf %47, %47 : vector<8x128xf32>
    %52 = arith.addf %50, %51 : vector<8x128xf32>
    %53 = arith.minimumf %21, %52 : vector<8x128xf32>
    %54 = tpu.bitcast %53 : vector<8x128xf32> -> vector<8x128xi32>
    %55 = vector.broadcast %c-128_i32 : i32 to vector<8x128xi32>
    %56 = arith.andi %54, %55 : vector<8x128xi32>
    %c127_i32 = arith.constant 127 : i32
    %57 = vector.broadcast %c127_i32 : i32 to vector<8x128xi32>
    %58 = arith.subi %57, %4 : vector<8x128xi32>
    %59 = arith.ori %56, %58 : vector<8x128xi32>
    %cst_19 = arith.constant dense<-2147483648> : vector<8xi32>
    %60 = vector.multi_reduction <maxsi>, %59, %cst_19 [1] : vector<8x128xi32> to vector<8xi32>
    %61 = vector.shape_cast %60 : vector<8xi32> to vector<8x1xi32>
    %c127_i32_20 = arith.constant 127 : i32
    %62 = vector.broadcast %c127_i32_20 : i32 to vector<8x1xi32>
    %63 = arith.andi %61, %62 : vector<8x1xi32>
    %c127_i32_21 = arith.constant 127 : i32
    %64 = vector.broadcast %c127_i32_21 : i32 to vector<8x1xi32>
    %65 = arith.subi %64, %63 : vector<8x1xi32>
    %66 = vector.broadcast %65 : vector<8x1xi32> to vector<8x128xi32>
    %67 = arith.cmpi eq, %4, %66 : vector<8x128xi32>
    %cst_22 = arith.constant 0.000000e+00 : f32
    %68 = vector.broadcast %cst_22 : f32 to vector<8x128xf32>
    %69 = arith.select %67, %0, %68 : vector<8x128xi1>, vector<8x128xf32>
    %cst_23 = arith.constant dense<0.000000e+00> : vector<8xf32>
    %70 = vector.multi_reduction <add>, %69, %cst_23 [1] : vector<8x128xf32> to vector<8xf32>
    %71 = vector.shape_cast %70 : vector<8xf32> to vector<8x1xf32>
    %cst_24 = arith.constant 0.000000e+00 : f32
    %72 = vector.broadcast %cst_24 : f32 to vector<8x128xf32>
    %73 = arith.select %67, %1, %72 : vector<8x128xi1>, vector<8x128xf32>
    %cst_25 = arith.constant dense<0.000000e+00> : vector<8xf32>
    %74 = vector.multi_reduction <add>, %73, %cst_25 [1] : vector<8x128xf32> to vector<8xf32>
    %75 = vector.shape_cast %74 : vector<8xf32> to vector<8x1xf32>
    %cst_26 = arith.constant 0.000000e+00 : f32
    %76 = vector.broadcast %cst_26 : f32 to vector<8x128xf32>
    %77 = arith.select %67, %2, %76 : vector<8x128xi1>, vector<8x128xf32>
    %cst_27 = arith.constant dense<0.000000e+00> : vector<8xf32>
    %78 = vector.multi_reduction <add>, %77, %cst_27 [1] : vector<8x128xf32> to vector<8xf32>
    %79 = vector.shape_cast %78 : vector<8xf32> to vector<8x1xf32>
    %c1_i32 = arith.constant 1 : i32
    %80 = vector.broadcast %c1_i32 : i32 to vector<1x8xi32>
    %81 = arith.cmpi eq, %5, %80 : vector<1x8xi32>
    %82 = vector.shape_cast %81 : vector<1x8xi1> to vector<1x8xi1>
    %83 = vector.broadcast %82 : vector<1x8xi1> to vector<8x8xi1>
    %84 = vector.shape_cast %71 : vector<8x1xf32> to vector<8x1xf32>
    %85 = vector.broadcast %84 : vector<8x1xf32> to vector<8x8xf32>
    %86 = arith.select %83, %85, %31 : vector<8x8xi1>, vector<8x8xf32>
    %87 = vector.shape_cast %81 : vector<1x8xi1> to vector<1x8xi1>
    %88 = vector.broadcast %87 : vector<1x8xi1> to vector<8x8xi1>
    %89 = vector.shape_cast %75 : vector<8x1xf32> to vector<8x1xf32>
    %90 = vector.broadcast %89 : vector<8x1xf32> to vector<8x8xf32>
    %91 = arith.select %88, %90, %36 : vector<8x8xi1>, vector<8x8xf32>
    %92 = vector.shape_cast %81 : vector<1x8xi1> to vector<1x8xi1>
    %93 = vector.broadcast %92 : vector<1x8xi1> to vector<8x8xi1>
    %94 = vector.shape_cast %79 : vector<8x1xf32> to vector<8x1xf32>
    %95 = vector.broadcast %94 : vector<8x1xf32> to vector<8x8xf32>
    %96 = arith.select %93, %95, %41 : vector<8x8xi1>, vector<8x8xf32>
    %97 = vector.broadcast %71 : vector<8x1xf32> to vector<8x128xf32>
    %98 = arith.subf %0, %97 : vector<8x128xf32>
    %99 = vector.broadcast %75 : vector<8x1xf32> to vector<8x128xf32>
    %100 = arith.subf %1, %99 : vector<8x128xf32>
    %101 = vector.broadcast %79 : vector<8x1xf32> to vector<8x128xf32>
    %102 = arith.subf %2, %101 : vector<8x128xf32>
    %103 = arith.mulf %98, %98 : vector<8x128xf32>
    %104 = arith.mulf %100, %100 : vector<8x128xf32>
    %105 = arith.addf %103, %104 : vector<8x128xf32>
    %106 = arith.mulf %102, %102 : vector<8x128xf32>
    %107 = arith.addf %105, %106 : vector<8x128xf32>
    %108 = arith.minimumf %53, %107 : vector<8x128xf32>
    %109 = tpu.bitcast %108 : vector<8x128xf32> -> vector<8x128xi32>
    %110 = vector.broadcast %c-128_i32 : i32 to vector<8x128xi32>
    %111 = arith.andi %109, %110 : vector<8x128xi32>
    %c127_i32_28 = arith.constant 127 : i32
    %112 = vector.broadcast %c127_i32_28 : i32 to vector<8x128xi32>
    %113 = arith.subi %112, %4 : vector<8x128xi32>
    %114 = arith.ori %111, %113 : vector<8x128xi32>
    %cst_29 = arith.constant dense<-2147483648> : vector<8xi32>
    %115 = vector.multi_reduction <maxsi>, %114, %cst_29 [1] : vector<8x128xi32> to vector<8xi32>
    %116 = vector.shape_cast %115 : vector<8xi32> to vector<8x1xi32>
    %c127_i32_30 = arith.constant 127 : i32
    %117 = vector.broadcast %c127_i32_30 : i32 to vector<8x1xi32>
    %118 = arith.andi %116, %117 : vector<8x1xi32>
    %c127_i32_31 = arith.constant 127 : i32
    %119 = vector.broadcast %c127_i32_31 : i32 to vector<8x1xi32>
    %120 = arith.subi %119, %118 : vector<8x1xi32>
    %121 = vector.broadcast %120 : vector<8x1xi32> to vector<8x128xi32>
    %122 = arith.cmpi eq, %4, %121 : vector<8x128xi32>
    %cst_32 = arith.constant 0.000000e+00 : f32
    %123 = vector.broadcast %cst_32 : f32 to vector<8x128xf32>
    %124 = arith.select %122, %0, %123 : vector<8x128xi1>, vector<8x128xf32>
    %cst_33 = arith.constant dense<0.000000e+00> : vector<8xf32>
    %125 = vector.multi_reduction <add>, %124, %cst_33 [1] : vector<8x128xf32> to vector<8xf32>
    %126 = vector.shape_cast %125 : vector<8xf32> to vector<8x1xf32>
    %cst_34 = arith.constant 0.000000e+00 : f32
    %127 = vector.broadcast %cst_34 : f32 to vector<8x128xf32>
    %128 = arith.select %122, %1, %127 : vector<8x128xi1>, vector<8x128xf32>
    %cst_35 = arith.constant dense<0.000000e+00> : vector<8xf32>
    %129 = vector.multi_reduction <add>, %128, %cst_35 [1] : vector<8x128xf32> to vector<8xf32>
    %130 = vector.shape_cast %129 : vector<8xf32> to vector<8x1xf32>
    %cst_36 = arith.constant 0.000000e+00 : f32
    %131 = vector.broadcast %cst_36 : f32 to vector<8x128xf32>
    %132 = arith.select %122, %2, %131 : vector<8x128xi1>, vector<8x128xf32>
    %cst_37 = arith.constant dense<0.000000e+00> : vector<8xf32>
    %133 = vector.multi_reduction <add>, %132, %cst_37 [1] : vector<8x128xf32> to vector<8xf32>
    %134 = vector.shape_cast %133 : vector<8xf32> to vector<8x1xf32>
    %c2_i32 = arith.constant 2 : i32
    %135 = vector.broadcast %c2_i32 : i32 to vector<1x8xi32>
    %136 = arith.cmpi eq, %5, %135 : vector<1x8xi32>
    %137 = vector.shape_cast %136 : vector<1x8xi1> to vector<1x8xi1>
    %138 = vector.broadcast %137 : vector<1x8xi1> to vector<8x8xi1>
    %139 = vector.shape_cast %126 : vector<8x1xf32> to vector<8x1xf32>
    %140 = vector.broadcast %139 : vector<8x1xf32> to vector<8x8xf32>
    %141 = arith.select %138, %140, %86 : vector<8x8xi1>, vector<8x8xf32>
    %142 = vector.shape_cast %136 : vector<1x8xi1> to vector<1x8xi1>
    %143 = vector.broadcast %142 : vector<1x8xi1> to vector<8x8xi1>
    %144 = vector.shape_cast %130 : vector<8x1xf32> to vector<8x1xf32>
    %145 = vector.broadcast %144 : vector<8x1xf32> to vector<8x8xf32>
    %146 = arith.select %143, %145, %91 : vector<8x8xi1>, vector<8x8xf32>
    %147 = vector.shape_cast %136 : vector<1x8xi1> to vector<1x8xi1>
    %148 = vector.broadcast %147 : vector<1x8xi1> to vector<8x8xi1>
    %149 = vector.shape_cast %134 : vector<8x1xf32> to vector<8x1xf32>
    %150 = vector.broadcast %149 : vector<8x1xf32> to vector<8x8xf32>
    %151 = arith.select %148, %150, %96 : vector<8x8xi1>, vector<8x8xf32>
    %152 = vector.broadcast %126 : vector<8x1xf32> to vector<8x128xf32>
    %153 = arith.subf %0, %152 : vector<8x128xf32>
    %154 = vector.broadcast %130 : vector<8x1xf32> to vector<8x128xf32>
    %155 = arith.subf %1, %154 : vector<8x128xf32>
    %156 = vector.broadcast %134 : vector<8x1xf32> to vector<8x128xf32>
    %157 = arith.subf %2, %156 : vector<8x128xf32>
    %158 = arith.mulf %153, %153 : vector<8x128xf32>
    %159 = arith.mulf %155, %155 : vector<8x128xf32>
    %160 = arith.addf %158, %159 : vector<8x128xf32>
    %161 = arith.mulf %157, %157 : vector<8x128xf32>
    %162 = arith.addf %160, %161 : vector<8x128xf32>
    %163 = arith.minimumf %108, %162 : vector<8x128xf32>
    %164 = tpu.bitcast %163 : vector<8x128xf32> -> vector<8x128xi32>
    %165 = vector.broadcast %c-128_i32 : i32 to vector<8x128xi32>
    %166 = arith.andi %164, %165 : vector<8x128xi32>
    %c127_i32_38 = arith.constant 127 : i32
    %167 = vector.broadcast %c127_i32_38 : i32 to vector<8x128xi32>
    %168 = arith.subi %167, %4 : vector<8x128xi32>
    %169 = arith.ori %166, %168 : vector<8x128xi32>
    %cst_39 = arith.constant dense<-2147483648> : vector<8xi32>
    %170 = vector.multi_reduction <maxsi>, %169, %cst_39 [1] : vector<8x128xi32> to vector<8xi32>
    %171 = vector.shape_cast %170 : vector<8xi32> to vector<8x1xi32>
    %c127_i32_40 = arith.constant 127 : i32
    %172 = vector.broadcast %c127_i32_40 : i32 to vector<8x1xi32>
    %173 = arith.andi %171, %172 : vector<8x1xi32>
    %c127_i32_41 = arith.constant 127 : i32
    %174 = vector.broadcast %c127_i32_41 : i32 to vector<8x1xi32>
    %175 = arith.subi %174, %173 : vector<8x1xi32>
    %176 = vector.broadcast %175 : vector<8x1xi32> to vector<8x128xi32>
    %177 = arith.cmpi eq, %4, %176 : vector<8x128xi32>
    %cst_42 = arith.constant 0.000000e+00 : f32
    %178 = vector.broadcast %cst_42 : f32 to vector<8x128xf32>
    %179 = arith.select %177, %0, %178 : vector<8x128xi1>, vector<8x128xf32>
    %cst_43 = arith.constant dense<0.000000e+00> : vector<8xf32>
    %180 = vector.multi_reduction <add>, %179, %cst_43 [1] : vector<8x128xf32> to vector<8xf32>
    %181 = vector.shape_cast %180 : vector<8xf32> to vector<8x1xf32>
    %cst_44 = arith.constant 0.000000e+00 : f32
    %182 = vector.broadcast %cst_44 : f32 to vector<8x128xf32>
    %183 = arith.select %177, %1, %182 : vector<8x128xi1>, vector<8x128xf32>
    %cst_45 = arith.constant dense<0.000000e+00> : vector<8xf32>
    %184 = vector.multi_reduction <add>, %183, %cst_45 [1] : vector<8x128xf32> to vector<8xf32>
    %185 = vector.shape_cast %184 : vector<8xf32> to vector<8x1xf32>
    %cst_46 = arith.constant 0.000000e+00 : f32
    %186 = vector.broadcast %cst_46 : f32 to vector<8x128xf32>
    %187 = arith.select %177, %2, %186 : vector<8x128xi1>, vector<8x128xf32>
    %cst_47 = arith.constant dense<0.000000e+00> : vector<8xf32>
    %188 = vector.multi_reduction <add>, %187, %cst_47 [1] : vector<8x128xf32> to vector<8xf32>
    %189 = vector.shape_cast %188 : vector<8xf32> to vector<8x1xf32>
    %c3_i32 = arith.constant 3 : i32
    %190 = vector.broadcast %c3_i32 : i32 to vector<1x8xi32>
    %191 = arith.cmpi eq, %5, %190 : vector<1x8xi32>
    %192 = vector.shape_cast %191 : vector<1x8xi1> to vector<1x8xi1>
    %193 = vector.broadcast %192 : vector<1x8xi1> to vector<8x8xi1>
    %194 = vector.shape_cast %181 : vector<8x1xf32> to vector<8x1xf32>
    %195 = vector.broadcast %194 : vector<8x1xf32> to vector<8x8xf32>
    %196 = arith.select %193, %195, %141 : vector<8x8xi1>, vector<8x8xf32>
    %197 = vector.shape_cast %191 : vector<1x8xi1> to vector<1x8xi1>
    %198 = vector.broadcast %197 : vector<1x8xi1> to vector<8x8xi1>
    %199 = vector.shape_cast %185 : vector<8x1xf32> to vector<8x1xf32>
    %200 = vector.broadcast %199 : vector<8x1xf32> to vector<8x8xf32>
    %201 = arith.select %198, %200, %146 : vector<8x8xi1>, vector<8x8xf32>
    %202 = vector.shape_cast %191 : vector<1x8xi1> to vector<1x8xi1>
    %203 = vector.broadcast %202 : vector<1x8xi1> to vector<8x8xi1>
    %204 = vector.shape_cast %189 : vector<8x1xf32> to vector<8x1xf32>
    %205 = vector.broadcast %204 : vector<8x1xf32> to vector<8x8xf32>
    %206 = arith.select %203, %205, %151 : vector<8x8xi1>, vector<8x8xf32>
    %207 = vector.broadcast %181 : vector<8x1xf32> to vector<8x128xf32>
    %208 = arith.subf %0, %207 : vector<8x128xf32>
    %209 = vector.broadcast %185 : vector<8x1xf32> to vector<8x128xf32>
    %210 = arith.subf %1, %209 : vector<8x128xf32>
    %211 = vector.broadcast %189 : vector<8x1xf32> to vector<8x128xf32>
    %212 = arith.subf %2, %211 : vector<8x128xf32>
    %213 = arith.mulf %208, %208 : vector<8x128xf32>
    %214 = arith.mulf %210, %210 : vector<8x128xf32>
    %215 = arith.addf %213, %214 : vector<8x128xf32>
    %216 = arith.mulf %212, %212 : vector<8x128xf32>
    %217 = arith.addf %215, %216 : vector<8x128xf32>
    %218 = arith.minimumf %163, %217 : vector<8x128xf32>
    %219 = tpu.bitcast %218 : vector<8x128xf32> -> vector<8x128xi32>
    %220 = vector.broadcast %c-128_i32 : i32 to vector<8x128xi32>
    %221 = arith.andi %219, %220 : vector<8x128xi32>
    %c127_i32_48 = arith.constant 127 : i32
    %222 = vector.broadcast %c127_i32_48 : i32 to vector<8x128xi32>
    %223 = arith.subi %222, %4 : vector<8x128xi32>
    %224 = arith.ori %221, %223 : vector<8x128xi32>
    %cst_49 = arith.constant dense<-2147483648> : vector<8xi32>
    %225 = vector.multi_reduction <maxsi>, %224, %cst_49 [1] : vector<8x128xi32> to vector<8xi32>
    %226 = vector.shape_cast %225 : vector<8xi32> to vector<8x1xi32>
    %c127_i32_50 = arith.constant 127 : i32
    %227 = vector.broadcast %c127_i32_50 : i32 to vector<8x1xi32>
    %228 = arith.andi %226, %227 : vector<8x1xi32>
    %c127_i32_51 = arith.constant 127 : i32
    %229 = vector.broadcast %c127_i32_51 : i32 to vector<8x1xi32>
    %230 = arith.subi %229, %228 : vector<8x1xi32>
    %231 = vector.broadcast %230 : vector<8x1xi32> to vector<8x128xi32>
    %232 = arith.cmpi eq, %4, %231 : vector<8x128xi32>
    %cst_52 = arith.constant 0.000000e+00 : f32
    %233 = vector.broadcast %cst_52 : f32 to vector<8x128xf32>
    %234 = arith.select %232, %0, %233 : vector<8x128xi1>, vector<8x128xf32>
    %cst_53 = arith.constant dense<0.000000e+00> : vector<8xf32>
    %235 = vector.multi_reduction <add>, %234, %cst_53 [1] : vector<8x128xf32> to vector<8xf32>
    %236 = vector.shape_cast %235 : vector<8xf32> to vector<8x1xf32>
    %cst_54 = arith.constant 0.000000e+00 : f32
    %237 = vector.broadcast %cst_54 : f32 to vector<8x128xf32>
    %238 = arith.select %232, %1, %237 : vector<8x128xi1>, vector<8x128xf32>
    %cst_55 = arith.constant dense<0.000000e+00> : vector<8xf32>
    %239 = vector.multi_reduction <add>, %238, %cst_55 [1] : vector<8x128xf32> to vector<8xf32>
    %240 = vector.shape_cast %239 : vector<8xf32> to vector<8x1xf32>
    %cst_56 = arith.constant 0.000000e+00 : f32
    %241 = vector.broadcast %cst_56 : f32 to vector<8x128xf32>
    %242 = arith.select %232, %2, %241 : vector<8x128xi1>, vector<8x128xf32>
    %cst_57 = arith.constant dense<0.000000e+00> : vector<8xf32>
    %243 = vector.multi_reduction <add>, %242, %cst_57 [1] : vector<8x128xf32> to vector<8xf32>
    %244 = vector.shape_cast %243 : vector<8xf32> to vector<8x1xf32>
    %c4_i32 = arith.constant 4 : i32
    %245 = vector.broadcast %c4_i32 : i32 to vector<1x8xi32>
    %246 = arith.cmpi eq, %5, %245 : vector<1x8xi32>
    %247 = vector.shape_cast %246 : vector<1x8xi1> to vector<1x8xi1>
    %248 = vector.broadcast %247 : vector<1x8xi1> to vector<8x8xi1>
    %249 = vector.shape_cast %236 : vector<8x1xf32> to vector<8x1xf32>
    %250 = vector.broadcast %249 : vector<8x1xf32> to vector<8x8xf32>
    %251 = arith.select %248, %250, %196 : vector<8x8xi1>, vector<8x8xf32>
    %252 = vector.shape_cast %246 : vector<1x8xi1> to vector<1x8xi1>
    %253 = vector.broadcast %252 : vector<1x8xi1> to vector<8x8xi1>
    %254 = vector.shape_cast %240 : vector<8x1xf32> to vector<8x1xf32>
    %255 = vector.broadcast %254 : vector<8x1xf32> to vector<8x8xf32>
    %256 = arith.select %253, %255, %201 : vector<8x8xi1>, vector<8x8xf32>
    %257 = vector.shape_cast %246 : vector<1x8xi1> to vector<1x8xi1>
    %258 = vector.broadcast %257 : vector<1x8xi1> to vector<8x8xi1>
    %259 = vector.shape_cast %244 : vector<8x1xf32> to vector<8x1xf32>
    %260 = vector.broadcast %259 : vector<8x1xf32> to vector<8x8xf32>
    %261 = arith.select %258, %260, %206 : vector<8x8xi1>, vector<8x8xf32>
    %262 = vector.broadcast %236 : vector<8x1xf32> to vector<8x128xf32>
    %263 = arith.subf %0, %262 : vector<8x128xf32>
    %264 = vector.broadcast %240 : vector<8x1xf32> to vector<8x128xf32>
    %265 = arith.subf %1, %264 : vector<8x128xf32>
    %266 = vector.broadcast %244 : vector<8x1xf32> to vector<8x128xf32>
    %267 = arith.subf %2, %266 : vector<8x128xf32>
    %268 = arith.mulf %263, %263 : vector<8x128xf32>
    %269 = arith.mulf %265, %265 : vector<8x128xf32>
    %270 = arith.addf %268, %269 : vector<8x128xf32>
    %271 = arith.mulf %267, %267 : vector<8x128xf32>
    %272 = arith.addf %270, %271 : vector<8x128xf32>
    %273 = arith.minimumf %218, %272 : vector<8x128xf32>
    %274 = tpu.bitcast %273 : vector<8x128xf32> -> vector<8x128xi32>
    %275 = vector.broadcast %c-128_i32 : i32 to vector<8x128xi32>
    %276 = arith.andi %274, %275 : vector<8x128xi32>
    %c127_i32_58 = arith.constant 127 : i32
    %277 = vector.broadcast %c127_i32_58 : i32 to vector<8x128xi32>
    %278 = arith.subi %277, %4 : vector<8x128xi32>
    %279 = arith.ori %276, %278 : vector<8x128xi32>
    %cst_59 = arith.constant dense<-2147483648> : vector<8xi32>
    %280 = vector.multi_reduction <maxsi>, %279, %cst_59 [1] : vector<8x128xi32> to vector<8xi32>
    %281 = vector.shape_cast %280 : vector<8xi32> to vector<8x1xi32>
    %c127_i32_60 = arith.constant 127 : i32
    %282 = vector.broadcast %c127_i32_60 : i32 to vector<8x1xi32>
    %283 = arith.andi %281, %282 : vector<8x1xi32>
    %c127_i32_61 = arith.constant 127 : i32
    %284 = vector.broadcast %c127_i32_61 : i32 to vector<8x1xi32>
    %285 = arith.subi %284, %283 : vector<8x1xi32>
    %286 = vector.broadcast %285 : vector<8x1xi32> to vector<8x128xi32>
    %287 = arith.cmpi eq, %4, %286 : vector<8x128xi32>
    %cst_62 = arith.constant 0.000000e+00 : f32
    %288 = vector.broadcast %cst_62 : f32 to vector<8x128xf32>
    %289 = arith.select %287, %0, %288 : vector<8x128xi1>, vector<8x128xf32>
    %cst_63 = arith.constant dense<0.000000e+00> : vector<8xf32>
    %290 = vector.multi_reduction <add>, %289, %cst_63 [1] : vector<8x128xf32> to vector<8xf32>
    %291 = vector.shape_cast %290 : vector<8xf32> to vector<8x1xf32>
    %cst_64 = arith.constant 0.000000e+00 : f32
    %292 = vector.broadcast %cst_64 : f32 to vector<8x128xf32>
    %293 = arith.select %287, %1, %292 : vector<8x128xi1>, vector<8x128xf32>
    %cst_65 = arith.constant dense<0.000000e+00> : vector<8xf32>
    %294 = vector.multi_reduction <add>, %293, %cst_65 [1] : vector<8x128xf32> to vector<8xf32>
    %295 = vector.shape_cast %294 : vector<8xf32> to vector<8x1xf32>
    %cst_66 = arith.constant 0.000000e+00 : f32
    %296 = vector.broadcast %cst_66 : f32 to vector<8x128xf32>
    %297 = arith.select %287, %2, %296 : vector<8x128xi1>, vector<8x128xf32>
    %cst_67 = arith.constant dense<0.000000e+00> : vector<8xf32>
    %298 = vector.multi_reduction <add>, %297, %cst_67 [1] : vector<8x128xf32> to vector<8xf32>
    %299 = vector.shape_cast %298 : vector<8xf32> to vector<8x1xf32>
    %c5_i32 = arith.constant 5 : i32
    %300 = vector.broadcast %c5_i32 : i32 to vector<1x8xi32>
    %301 = arith.cmpi eq, %5, %300 : vector<1x8xi32>
    %302 = vector.shape_cast %301 : vector<1x8xi1> to vector<1x8xi1>
    %303 = vector.broadcast %302 : vector<1x8xi1> to vector<8x8xi1>
    %304 = vector.shape_cast %291 : vector<8x1xf32> to vector<8x1xf32>
    %305 = vector.broadcast %304 : vector<8x1xf32> to vector<8x8xf32>
    %306 = arith.select %303, %305, %251 : vector<8x8xi1>, vector<8x8xf32>
    %307 = vector.shape_cast %301 : vector<1x8xi1> to vector<1x8xi1>
    %308 = vector.broadcast %307 : vector<1x8xi1> to vector<8x8xi1>
    %309 = vector.shape_cast %295 : vector<8x1xf32> to vector<8x1xf32>
    %310 = vector.broadcast %309 : vector<8x1xf32> to vector<8x8xf32>
    %311 = arith.select %308, %310, %256 : vector<8x8xi1>, vector<8x8xf32>
    %312 = vector.shape_cast %301 : vector<1x8xi1> to vector<1x8xi1>
    %313 = vector.broadcast %312 : vector<1x8xi1> to vector<8x8xi1>
    %314 = vector.shape_cast %299 : vector<8x1xf32> to vector<8x1xf32>
    %315 = vector.broadcast %314 : vector<8x1xf32> to vector<8x8xf32>
    %316 = arith.select %313, %315, %261 : vector<8x8xi1>, vector<8x8xf32>
    %317 = vector.broadcast %291 : vector<8x1xf32> to vector<8x128xf32>
    %318 = arith.subf %0, %317 : vector<8x128xf32>
    %319 = vector.broadcast %295 : vector<8x1xf32> to vector<8x128xf32>
    %320 = arith.subf %1, %319 : vector<8x128xf32>
    %321 = vector.broadcast %299 : vector<8x1xf32> to vector<8x128xf32>
    %322 = arith.subf %2, %321 : vector<8x128xf32>
    %323 = arith.mulf %318, %318 : vector<8x128xf32>
    %324 = arith.mulf %320, %320 : vector<8x128xf32>
    %325 = arith.addf %323, %324 : vector<8x128xf32>
    %326 = arith.mulf %322, %322 : vector<8x128xf32>
    %327 = arith.addf %325, %326 : vector<8x128xf32>
    %328 = arith.minimumf %273, %327 : vector<8x128xf32>
    %329 = tpu.bitcast %328 : vector<8x128xf32> -> vector<8x128xi32>
    %330 = vector.broadcast %c-128_i32 : i32 to vector<8x128xi32>
    %331 = arith.andi %329, %330 : vector<8x128xi32>
    %c127_i32_68 = arith.constant 127 : i32
    %332 = vector.broadcast %c127_i32_68 : i32 to vector<8x128xi32>
    %333 = arith.subi %332, %4 : vector<8x128xi32>
    %334 = arith.ori %331, %333 : vector<8x128xi32>
    %cst_69 = arith.constant dense<-2147483648> : vector<8xi32>
    %335 = vector.multi_reduction <maxsi>, %334, %cst_69 [1] : vector<8x128xi32> to vector<8xi32>
    %336 = vector.shape_cast %335 : vector<8xi32> to vector<8x1xi32>
    %c127_i32_70 = arith.constant 127 : i32
    %337 = vector.broadcast %c127_i32_70 : i32 to vector<8x1xi32>
    %338 = arith.andi %336, %337 : vector<8x1xi32>
    %c127_i32_71 = arith.constant 127 : i32
    %339 = vector.broadcast %c127_i32_71 : i32 to vector<8x1xi32>
    %340 = arith.subi %339, %338 : vector<8x1xi32>
    %341 = vector.broadcast %340 : vector<8x1xi32> to vector<8x128xi32>
    %342 = arith.cmpi eq, %4, %341 : vector<8x128xi32>
    %cst_72 = arith.constant 0.000000e+00 : f32
    %343 = vector.broadcast %cst_72 : f32 to vector<8x128xf32>
    %344 = arith.select %342, %0, %343 : vector<8x128xi1>, vector<8x128xf32>
    %cst_73 = arith.constant dense<0.000000e+00> : vector<8xf32>
    %345 = vector.multi_reduction <add>, %344, %cst_73 [1] : vector<8x128xf32> to vector<8xf32>
    %346 = vector.shape_cast %345 : vector<8xf32> to vector<8x1xf32>
    %cst_74 = arith.constant 0.000000e+00 : f32
    %347 = vector.broadcast %cst_74 : f32 to vector<8x128xf32>
    %348 = arith.select %342, %1, %347 : vector<8x128xi1>, vector<8x128xf32>
    %cst_75 = arith.constant dense<0.000000e+00> : vector<8xf32>
    %349 = vector.multi_reduction <add>, %348, %cst_75 [1] : vector<8x128xf32> to vector<8xf32>
    %350 = vector.shape_cast %349 : vector<8xf32> to vector<8x1xf32>
    %cst_76 = arith.constant 0.000000e+00 : f32
    %351 = vector.broadcast %cst_76 : f32 to vector<8x128xf32>
    %352 = arith.select %342, %2, %351 : vector<8x128xi1>, vector<8x128xf32>
    %cst_77 = arith.constant dense<0.000000e+00> : vector<8xf32>
    %353 = vector.multi_reduction <add>, %352, %cst_77 [1] : vector<8x128xf32> to vector<8xf32>
    %354 = vector.shape_cast %353 : vector<8xf32> to vector<8x1xf32>
    %c6_i32 = arith.constant 6 : i32
    %355 = vector.broadcast %c6_i32 : i32 to vector<1x8xi32>
    %356 = arith.cmpi eq, %5, %355 : vector<1x8xi32>
    %357 = vector.shape_cast %356 : vector<1x8xi1> to vector<1x8xi1>
    %358 = vector.broadcast %357 : vector<1x8xi1> to vector<8x8xi1>
    %359 = vector.shape_cast %346 : vector<8x1xf32> to vector<8x1xf32>
    %360 = vector.broadcast %359 : vector<8x1xf32> to vector<8x8xf32>
    %361 = arith.select %358, %360, %306 : vector<8x8xi1>, vector<8x8xf32>
    %362 = vector.shape_cast %356 : vector<1x8xi1> to vector<1x8xi1>
    %363 = vector.broadcast %362 : vector<1x8xi1> to vector<8x8xi1>
    %364 = vector.shape_cast %350 : vector<8x1xf32> to vector<8x1xf32>
    %365 = vector.broadcast %364 : vector<8x1xf32> to vector<8x8xf32>
    %366 = arith.select %363, %365, %311 : vector<8x8xi1>, vector<8x8xf32>
    %367 = vector.shape_cast %356 : vector<1x8xi1> to vector<1x8xi1>
    %368 = vector.broadcast %367 : vector<1x8xi1> to vector<8x8xi1>
    %369 = vector.shape_cast %354 : vector<8x1xf32> to vector<8x1xf32>
    %370 = vector.broadcast %369 : vector<8x1xf32> to vector<8x8xf32>
    %371 = arith.select %368, %370, %316 : vector<8x8xi1>, vector<8x8xf32>
    %372 = vector.broadcast %346 : vector<8x1xf32> to vector<8x128xf32>
    %373 = arith.subf %0, %372 : vector<8x128xf32>
    %374 = vector.broadcast %350 : vector<8x1xf32> to vector<8x128xf32>
    %375 = arith.subf %1, %374 : vector<8x128xf32>
    %376 = vector.broadcast %354 : vector<8x1xf32> to vector<8x128xf32>
    %377 = arith.subf %2, %376 : vector<8x128xf32>
    %378 = arith.mulf %373, %373 : vector<8x128xf32>
    %379 = arith.mulf %375, %375 : vector<8x128xf32>
    %380 = arith.addf %378, %379 : vector<8x128xf32>
    %381 = arith.mulf %377, %377 : vector<8x128xf32>
    %382 = arith.addf %380, %381 : vector<8x128xf32>
    %383 = arith.minimumf %328, %382 : vector<8x128xf32>
    %384 = tpu.bitcast %383 : vector<8x128xf32> -> vector<8x128xi32>
    %385 = vector.broadcast %c-128_i32 : i32 to vector<8x128xi32>
    %386 = arith.andi %384, %385 : vector<8x128xi32>
    %c127_i32_78 = arith.constant 127 : i32
    %387 = vector.broadcast %c127_i32_78 : i32 to vector<8x128xi32>
    %388 = arith.subi %387, %4 : vector<8x128xi32>
    %389 = arith.ori %386, %388 : vector<8x128xi32>
    %cst_79 = arith.constant dense<-2147483648> : vector<8xi32>
    %390 = vector.multi_reduction <maxsi>, %389, %cst_79 [1] : vector<8x128xi32> to vector<8xi32>
    %391 = vector.shape_cast %390 : vector<8xi32> to vector<8x1xi32>
    %c127_i32_80 = arith.constant 127 : i32
    %392 = vector.broadcast %c127_i32_80 : i32 to vector<8x1xi32>
    %393 = arith.andi %391, %392 : vector<8x1xi32>
    %c127_i32_81 = arith.constant 127 : i32
    %394 = vector.broadcast %c127_i32_81 : i32 to vector<8x1xi32>
    %395 = arith.subi %394, %393 : vector<8x1xi32>
    %396 = vector.broadcast %395 : vector<8x1xi32> to vector<8x128xi32>
    %397 = arith.cmpi eq, %4, %396 : vector<8x128xi32>
    %cst_82 = arith.constant 0.000000e+00 : f32
    %398 = vector.broadcast %cst_82 : f32 to vector<8x128xf32>
    %399 = arith.select %397, %0, %398 : vector<8x128xi1>, vector<8x128xf32>
    %cst_83 = arith.constant dense<0.000000e+00> : vector<8xf32>
    %400 = vector.multi_reduction <add>, %399, %cst_83 [1] : vector<8x128xf32> to vector<8xf32>
    %401 = vector.shape_cast %400 : vector<8xf32> to vector<8x1xf32>
    %cst_84 = arith.constant 0.000000e+00 : f32
    %402 = vector.broadcast %cst_84 : f32 to vector<8x128xf32>
    %403 = arith.select %397, %1, %402 : vector<8x128xi1>, vector<8x128xf32>
    %cst_85 = arith.constant dense<0.000000e+00> : vector<8xf32>
    %404 = vector.multi_reduction <add>, %403, %cst_85 [1] : vector<8x128xf32> to vector<8xf32>
    %405 = vector.shape_cast %404 : vector<8xf32> to vector<8x1xf32>
    %cst_86 = arith.constant 0.000000e+00 : f32
    %406 = vector.broadcast %cst_86 : f32 to vector<8x128xf32>
    %407 = arith.select %397, %2, %406 : vector<8x128xi1>, vector<8x128xf32>
    %cst_87 = arith.constant dense<0.000000e+00> : vector<8xf32>
    %408 = vector.multi_reduction <add>, %407, %cst_87 [1] : vector<8x128xf32> to vector<8xf32>
    %409 = vector.shape_cast %408 : vector<8xf32> to vector<8x1xf32>
    %c7_i32 = arith.constant 7 : i32
    %410 = vector.broadcast %c7_i32 : i32 to vector<1x8xi32>
    %411 = arith.cmpi eq, %5, %410 : vector<1x8xi32>
    %412 = vector.shape_cast %411 : vector<1x8xi1> to vector<1x8xi1>
    %413 = vector.broadcast %412 : vector<1x8xi1> to vector<8x8xi1>
    %414 = vector.shape_cast %401 : vector<8x1xf32> to vector<8x1xf32>
    %415 = vector.broadcast %414 : vector<8x1xf32> to vector<8x8xf32>
    %416 = arith.select %413, %415, %361 : vector<8x8xi1>, vector<8x8xf32>
    %417 = vector.shape_cast %411 : vector<1x8xi1> to vector<1x8xi1>
    %418 = vector.broadcast %417 : vector<1x8xi1> to vector<8x8xi1>
    %419 = vector.shape_cast %405 : vector<8x1xf32> to vector<8x1xf32>
    %420 = vector.broadcast %419 : vector<8x1xf32> to vector<8x8xf32>
    %421 = arith.select %418, %420, %366 : vector<8x8xi1>, vector<8x8xf32>
    %422 = vector.shape_cast %411 : vector<1x8xi1> to vector<1x8xi1>
    %423 = vector.broadcast %422 : vector<1x8xi1> to vector<8x8xi1>
    %424 = vector.shape_cast %409 : vector<8x1xf32> to vector<8x1xf32>
    %425 = vector.broadcast %424 : vector<8x1xf32> to vector<8x8xf32>
    %426 = arith.select %423, %425, %371 : vector<8x8xi1>, vector<8x8xf32>
    %427 = vector.broadcast %401 : vector<8x1xf32> to vector<8x128xf32>
    %428 = arith.subf %0, %427 : vector<8x128xf32>
    %429 = vector.broadcast %405 : vector<8x1xf32> to vector<8x128xf32>
    %430 = arith.subf %1, %429 : vector<8x128xf32>
    %431 = vector.broadcast %409 : vector<8x1xf32> to vector<8x128xf32>
    %432 = arith.subf %2, %431 : vector<8x128xf32>
    %433 = arith.mulf %428, %428 : vector<8x128xf32>
    %434 = arith.mulf %430, %430 : vector<8x128xf32>
    %435 = arith.addf %433, %434 : vector<8x128xf32>
    %436 = arith.mulf %432, %432 : vector<8x128xf32>
    %437 = arith.addf %435, %436 : vector<8x128xf32>
    %438 = arith.minimumf %383, %437 : vector<8x128xf32>
    %439 = tpu.bitcast %438 : vector<8x128xf32> -> vector<8x128xi32>
    %440 = vector.broadcast %c-128_i32 : i32 to vector<8x128xi32>
    %441 = arith.andi %439, %440 : vector<8x128xi32>
    %c127_i32_88 = arith.constant 127 : i32
    %442 = vector.broadcast %c127_i32_88 : i32 to vector<8x128xi32>
    %443 = arith.subi %442, %4 : vector<8x128xi32>
    %444 = arith.ori %441, %443 : vector<8x128xi32>
    %cst_89 = arith.constant dense<-2147483648> : vector<8xi32>
    %445 = vector.multi_reduction <maxsi>, %444, %cst_89 [1] : vector<8x128xi32> to vector<8xi32>
    %446 = vector.shape_cast %445 : vector<8xi32> to vector<8x1xi32>
    %c127_i32_90 = arith.constant 127 : i32
    %447 = vector.broadcast %c127_i32_90 : i32 to vector<8x1xi32>
    %448 = arith.andi %446, %447 : vector<8x1xi32>
    %c127_i32_91 = arith.constant 127 : i32
    %449 = vector.broadcast %c127_i32_91 : i32 to vector<8x1xi32>
    %450 = arith.subi %449, %448 : vector<8x1xi32>
    %451 = vector.broadcast %450 : vector<8x1xi32> to vector<8x128xi32>
    %452 = arith.cmpi eq, %4, %451 : vector<8x128xi32>
    %cst_92 = arith.constant 0.000000e+00 : f32
    %453 = vector.broadcast %cst_92 : f32 to vector<8x128xf32>
    %454 = arith.select %452, %0, %453 : vector<8x128xi1>, vector<8x128xf32>
    %cst_93 = arith.constant dense<0.000000e+00> : vector<8xf32>
    %455 = vector.multi_reduction <add>, %454, %cst_93 [1] : vector<8x128xf32> to vector<8xf32>
    %456 = vector.shape_cast %455 : vector<8xf32> to vector<8x1xf32>
    %cst_94 = arith.constant 0.000000e+00 : f32
    %457 = vector.broadcast %cst_94 : f32 to vector<8x128xf32>
    %458 = arith.select %452, %1, %457 : vector<8x128xi1>, vector<8x128xf32>
    %cst_95 = arith.constant dense<0.000000e+00> : vector<8xf32>
    %459 = vector.multi_reduction <add>, %458, %cst_95 [1] : vector<8x128xf32> to vector<8xf32>
    %460 = vector.shape_cast %459 : vector<8xf32> to vector<8x1xf32>
    %cst_96 = arith.constant 0.000000e+00 : f32
    %461 = vector.broadcast %cst_96 : f32 to vector<8x128xf32>
    %462 = arith.select %452, %2, %461 : vector<8x128xi1>, vector<8x128xf32>
    %cst_97 = arith.constant dense<0.000000e+00> : vector<8xf32>
    %463 = vector.multi_reduction <add>, %462, %cst_97 [1] : vector<8x128xf32> to vector<8xf32>
    %464 = vector.shape_cast %463 : vector<8xf32> to vector<8x1xf32>
    %c8_i32 = arith.constant 8 : i32
    %465 = vector.shape_cast %416 : vector<8x8xf32> to vector<8x1x8xf32>
    %466 = vector.shape_cast %421 : vector<8x8xf32> to vector<8x1x8xf32>
    %467 = vector.shape_cast %426 : vector<8x8xf32> to vector<8x1x8xf32>
    %468 = tpu.concatenate %465, %466, %467 in 1 : vector<8x1x8xf32>, vector<8x1x8xf32>, vector<8x1x8xf32> -> vector<8x3x8xf32>
    %c0_98 = arith.constant 0 : index
    %c0_99 = arith.constant 0 : index
    %c0_100 = arith.constant 0 : index
    %469 = vector.load %arg7[%c0_98, %c0_99, %c0_100] : memref<8x3x8xf32, #tpu.memory_space<vmem>>, vector<8x3x8xf32>
    tpu.vector_store %arg7[%c0_98, %c0_99, %c0_100], %468 {strides = array<i32>} : memref<8x3x8xf32, #tpu.memory_space<vmem>>, vector<8x3x8xf32>,
    %470 = vector.shape_cast %0 : vector<8x128xf32> to vector<8x1x128xf32>
    %471 = vector.shape_cast %416 : vector<8x8xf32> to vector<8x8x1xf32>
    %472 = vector.broadcast %470 : vector<8x1x128xf32> to vector<8x8x128xf32>
    %473 = vector.broadcast %471 : vector<8x8x1xf32> to vector<8x8x128xf32>
    %474 = arith.subf %472, %473 : vector<8x8x128xf32>
    %475 = vector.shape_cast %1 : vector<8x128xf32> to vector<8x1x128xf32>
    %476 = vector.shape_cast %421 : vector<8x8xf32> to vector<8x8x1xf32>
    %477 = vector.broadcast %475 : vector<8x1x128xf32> to vector<8x8x128xf32>
    %478 = vector.broadcast %476 : vector<8x8x1xf32> to vector<8x8x128xf32>
    %479 = arith.subf %477, %478 : vector<8x8x128xf32>
    %480 = vector.shape_cast %2 : vector<8x128xf32> to vector<8x1x128xf32>
    %481 = vector.shape_cast %426 : vector<8x8xf32> to vector<8x8x1xf32>
    %482 = vector.broadcast %480 : vector<8x1x128xf32> to vector<8x8x128xf32>
    %483 = vector.broadcast %481 : vector<8x8x1xf32> to vector<8x8x128xf32>
    %484 = arith.subf %482, %483 : vector<8x8x128xf32>
    %485 = arith.mulf %474, %474 : vector<8x8x128xf32>
    %486 = arith.mulf %479, %479 : vector<8x8x128xf32>
    %487 = arith.addf %485, %486 : vector<8x8x128xf32>
    %488 = arith.mulf %484, %484 : vector<8x8x128xf32>
    %489 = arith.addf %487, %488 : vector<8x8x128xf32>
    %490 = tpu.iota {dimensions = array<i32: 2>} : vector<8x8x128xi32>
    %491 = tpu.bitcast %489 : vector<8x8x128xf32> -> vector<8x8x128xi32>
    %c-128_i32_101 = arith.constant -128 : i32
    %492 = vector.broadcast %c-128_i32_101 : i32 to vector<8x8x128xi32>
    %493 = arith.andi %491, %492 : vector<8x8x128xi32>
    %494 = arith.ori %493, %490 : vector<8x8x128xi32>
    %495 = tpu.iota {dimensions = array<i32: 2>} : vector<1x1x8xi32>
    %c0_i32_102 = arith.constant 0 : i32
    %496 = vector.broadcast %c0_i32_102 : i32 to vector<8x8x8xi32>
    %c2147483647_i32 = arith.constant 2147483647 : i32
    %c0_i32_103 = arith.constant 0 : i32
    %cst_104 = arith.constant dense<2147483647> : vector<8x8xi32>
    %497 = vector.multi_reduction <minsi>, %494, %cst_104 [2] : vector<8x8x128xi32> to vector<8x8xi32>
    %498 = vector.shape_cast %497 : vector<8x8xi32> to vector<8x8x1xi32>
    %c127_i32_105 = arith.constant 127 : i32
    %499 = vector.broadcast %c127_i32_105 : i32 to vector<8x8x1xi32>
    %500 = arith.andi %498, %499 : vector<8x8x1xi32>
    %501 = vector.broadcast %500 : vector<8x8x1xi32> to vector<8x8x128xi32>
    %502 = arith.cmpi eq, %490, %501 : vector<8x8x128xi32>
    %503 = vector.broadcast %c2147483647_i32 : i32 to vector<8x8x128xi32>
    %504 = arith.select %502, %503, %494 : vector<8x8x128xi1>, vector<8x8x128xi32>
    %505 = vector.broadcast %c0_i32_103 : i32 to vector<1x1x8xi32>
    %506 = arith.cmpi eq, %495, %505 : vector<1x1x8xi32>
    %507 = vector.shape_cast %506 : vector<1x1x8xi1> to vector<1x1x8xi1>
    %508 = vector.broadcast %507 : vector<1x1x8xi1> to vector<8x8x8xi1>
    %509 = vector.shape_cast %500 : vector<8x8x1xi32> to vector<8x8x1xi32>
    %510 = vector.broadcast %509 : vector<8x8x1xi32> to vector<8x8x8xi32>
    %511 = arith.select %508, %510, %496 : vector<8x8x8xi1>, vector<8x8x8xi32>
    %c1_i32_106 = arith.constant 1 : i32
    %cst_107 = arith.constant dense<2147483647> : vector<8x8xi32>
    %512 = vector.multi_reduction <minsi>, %504, %cst_107 [2] : vector<8x8x128xi32> to vector<8x8xi32>
    %513 = vector.shape_cast %512 : vector<8x8xi32> to vector<8x8x1xi32>
    %c127_i32_108 = arith.constant 127 : i32
    %514 = vector.broadcast %c127_i32_108 : i32 to vector<8x8x1xi32>
    %515 = arith.andi %513, %514 : vector<8x8x1xi32>
    %516 = vector.broadcast %515 : vector<8x8x1xi32> to vector<8x8x128xi32>
    %517 = arith.cmpi eq, %490, %516 : vector<8x8x128xi32>
    %518 = vector.broadcast %c2147483647_i32 : i32 to vector<8x8x128xi32>
    %519 = arith.select %517, %518, %504 : vector<8x8x128xi1>, vector<8x8x128xi32>
    %520 = vector.broadcast %c1_i32_106 : i32 to vector<1x1x8xi32>
    %521 = arith.cmpi eq, %495, %520 : vector<1x1x8xi32>
    %522 = vector.shape_cast %521 : vector<1x1x8xi1> to vector<1x1x8xi1>
    %523 = vector.broadcast %522 : vector<1x1x8xi1> to vector<8x8x8xi1>
    %524 = vector.shape_cast %515 : vector<8x8x1xi32> to vector<8x8x1xi32>
    %525 = vector.broadcast %524 : vector<8x8x1xi32> to vector<8x8x8xi32>
    %526 = arith.select %523, %525, %511 : vector<8x8x8xi1>, vector<8x8x8xi32>
    %c2_i32_109 = arith.constant 2 : i32
    %cst_110 = arith.constant dense<2147483647> : vector<8x8xi32>
    %527 = vector.multi_reduction <minsi>, %519, %cst_110 [2] : vector<8x8x128xi32> to vector<8x8xi32>
    %528 = vector.shape_cast %527 : vector<8x8xi32> to vector<8x8x1xi32>
    %c127_i32_111 = arith.constant 127 : i32
    %529 = vector.broadcast %c127_i32_111 : i32 to vector<8x8x1xi32>
    %530 = arith.andi %528, %529 : vector<8x8x1xi32>
    %531 = vector.broadcast %530 : vector<8x8x1xi32> to vector<8x8x128xi32>
    %532 = arith.cmpi eq, %490, %531 : vector<8x8x128xi32>
    %533 = vector.broadcast %c2147483647_i32 : i32 to vector<8x8x128xi32>
    %534 = arith.select %532, %533, %519 : vector<8x8x128xi1>, vector<8x8x128xi32>
    %535 = vector.broadcast %c2_i32_109 : i32 to vector<1x1x8xi32>
    %536 = arith.cmpi eq, %495, %535 : vector<1x1x8xi32>
    %537 = vector.shape_cast %536 : vector<1x1x8xi1> to vector<1x1x8xi1>
    %538 = vector.broadcast %537 : vector<1x1x8xi1> to vector<8x8x8xi1>
    %539 = vector.shape_cast %530 : vector<8x8x1xi32> to vector<8x8x1xi32>
    %540 = vector.broadcast %539 : vector<8x8x1xi32> to vector<8x8x8xi32>
    %541 = arith.select %538, %540, %526 : vector<8x8x8xi1>, vector<8x8x8xi32>
    %c3_i32_112 = arith.constant 3 : i32
    %cst_113 = arith.constant dense<2147483647> : vector<8x8xi32>
    %542 = vector.multi_reduction <minsi>, %534, %cst_113 [2] : vector<8x8x128xi32> to vector<8x8xi32>
    %543 = vector.shape_cast %542 : vector<8x8xi32> to vector<8x8x1xi32>
    %c127_i32_114 = arith.constant 127 : i32
    %544 = vector.broadcast %c127_i32_114 : i32 to vector<8x8x1xi32>
    %545 = arith.andi %543, %544 : vector<8x8x1xi32>
    %546 = vector.broadcast %545 : vector<8x8x1xi32> to vector<8x8x128xi32>
    %547 = arith.cmpi eq, %490, %546 : vector<8x8x128xi32>
    %548 = vector.broadcast %c2147483647_i32 : i32 to vector<8x8x128xi32>
    %549 = arith.select %547, %548, %534 : vector<8x8x128xi1>, vector<8x8x128xi32>
    %550 = vector.broadcast %c3_i32_112 : i32 to vector<1x1x8xi32>
    %551 = arith.cmpi eq, %495, %550 : vector<1x1x8xi32>
    %552 = vector.shape_cast %551 : vector<1x1x8xi1> to vector<1x1x8xi1>
    %553 = vector.broadcast %552 : vector<1x1x8xi1> to vector<8x8x8xi1>
    %554 = vector.shape_cast %545 : vector<8x8x1xi32> to vector<8x8x1xi32>
    %555 = vector.broadcast %554 : vector<8x8x1xi32> to vector<8x8x8xi32>
    %556 = arith.select %553, %555, %541 : vector<8x8x8xi1>, vector<8x8x8xi32>
    %c4_i32_115 = arith.constant 4 : i32
    %cst_116 = arith.constant dense<2147483647> : vector<8x8xi32>
    %557 = vector.multi_reduction <minsi>, %549, %cst_116 [2] : vector<8x8x128xi32> to vector<8x8xi32>
    %558 = vector.shape_cast %557 : vector<8x8xi32> to vector<8x8x1xi32>
    %c127_i32_117 = arith.constant 127 : i32
    %559 = vector.broadcast %c127_i32_117 : i32 to vector<8x8x1xi32>
    %560 = arith.andi %558, %559 : vector<8x8x1xi32>
    %561 = vector.broadcast %560 : vector<8x8x1xi32> to vector<8x8x128xi32>
    %562 = arith.cmpi eq, %490, %561 : vector<8x8x128xi32>
    %563 = vector.broadcast %c2147483647_i32 : i32 to vector<8x8x128xi32>
    %564 = arith.select %562, %563, %549 : vector<8x8x128xi1>, vector<8x8x128xi32>
    %565 = vector.broadcast %c4_i32_115 : i32 to vector<1x1x8xi32>
    %566 = arith.cmpi eq, %495, %565 : vector<1x1x8xi32>
    %567 = vector.shape_cast %566 : vector<1x1x8xi1> to vector<1x1x8xi1>
    %568 = vector.broadcast %567 : vector<1x1x8xi1> to vector<8x8x8xi1>
    %569 = vector.shape_cast %560 : vector<8x8x1xi32> to vector<8x8x1xi32>
    %570 = vector.broadcast %569 : vector<8x8x1xi32> to vector<8x8x8xi32>
    %571 = arith.select %568, %570, %556 : vector<8x8x8xi1>, vector<8x8x8xi32>
    %c5_i32_118 = arith.constant 5 : i32
    %cst_119 = arith.constant dense<2147483647> : vector<8x8xi32>
    %572 = vector.multi_reduction <minsi>, %564, %cst_119 [2] : vector<8x8x128xi32> to vector<8x8xi32>
    %573 = vector.shape_cast %572 : vector<8x8xi32> to vector<8x8x1xi32>
    %c127_i32_120 = arith.constant 127 : i32
    %574 = vector.broadcast %c127_i32_120 : i32 to vector<8x8x1xi32>
    %575 = arith.andi %573, %574 : vector<8x8x1xi32>
    %576 = vector.broadcast %575 : vector<8x8x1xi32> to vector<8x8x128xi32>
    %577 = arith.cmpi eq, %490, %576 : vector<8x8x128xi32>
    %578 = vector.broadcast %c2147483647_i32 : i32 to vector<8x8x128xi32>
    %579 = arith.select %577, %578, %564 : vector<8x8x128xi1>, vector<8x8x128xi32>
    %580 = vector.broadcast %c5_i32_118 : i32 to vector<1x1x8xi32>
    %581 = arith.cmpi eq, %495, %580 : vector<1x1x8xi32>
    %582 = vector.shape_cast %581 : vector<1x1x8xi1> to vector<1x1x8xi1>
    %583 = vector.broadcast %582 : vector<1x1x8xi1> to vector<8x8x8xi1>
    %584 = vector.shape_cast %575 : vector<8x8x1xi32> to vector<8x8x1xi32>
    %585 = vector.broadcast %584 : vector<8x8x1xi32> to vector<8x8x8xi32>
    %586 = arith.select %583, %585, %571 : vector<8x8x8xi1>, vector<8x8x8xi32>
    %c6_i32_121 = arith.constant 6 : i32
    %cst_122 = arith.constant dense<2147483647> : vector<8x8xi32>
    %587 = vector.multi_reduction <minsi>, %579, %cst_122 [2] : vector<8x8x128xi32> to vector<8x8xi32>
    %588 = vector.shape_cast %587 : vector<8x8xi32> to vector<8x8x1xi32>
    %c127_i32_123 = arith.constant 127 : i32
    %589 = vector.broadcast %c127_i32_123 : i32 to vector<8x8x1xi32>
    %590 = arith.andi %588, %589 : vector<8x8x1xi32>
    %591 = vector.broadcast %590 : vector<8x8x1xi32> to vector<8x8x128xi32>
    %592 = arith.cmpi eq, %490, %591 : vector<8x8x128xi32>
    %593 = vector.broadcast %c2147483647_i32 : i32 to vector<8x8x128xi32>
    %594 = arith.select %592, %593, %579 : vector<8x8x128xi1>, vector<8x8x128xi32>
    %595 = vector.broadcast %c6_i32_121 : i32 to vector<1x1x8xi32>
    %596 = arith.cmpi eq, %495, %595 : vector<1x1x8xi32>
    %597 = vector.shape_cast %596 : vector<1x1x8xi1> to vector<1x1x8xi1>
    %598 = vector.broadcast %597 : vector<1x1x8xi1> to vector<8x8x8xi1>
    %599 = vector.shape_cast %590 : vector<8x8x1xi32> to vector<8x8x1xi32>
    %600 = vector.broadcast %599 : vector<8x8x1xi32> to vector<8x8x8xi32>
    %601 = arith.select %598, %600, %586 : vector<8x8x8xi1>, vector<8x8x8xi32>
    %c7_i32_124 = arith.constant 7 : i32
    %cst_125 = arith.constant dense<2147483647> : vector<8x8xi32>
    %602 = vector.multi_reduction <minsi>, %594, %cst_125 [2] : vector<8x8x128xi32> to vector<8x8xi32>
    %603 = vector.shape_cast %602 : vector<8x8xi32> to vector<8x8x1xi32>
    %c127_i32_126 = arith.constant 127 : i32
    %604 = vector.broadcast %c127_i32_126 : i32 to vector<8x8x1xi32>
    %605 = arith.andi %603, %604 : vector<8x8x1xi32>
    %606 = vector.broadcast %605 : vector<8x8x1xi32> to vector<8x8x128xi32>
    %607 = arith.cmpi eq, %490, %606 : vector<8x8x128xi32>
    %608 = vector.broadcast %c2147483647_i32 : i32 to vector<8x8x128xi32>
    %609 = arith.select %607, %608, %594 : vector<8x8x128xi1>, vector<8x8x128xi32>
    %610 = vector.broadcast %c7_i32_124 : i32 to vector<1x1x8xi32>
    %611 = arith.cmpi eq, %495, %610 : vector<1x1x8xi32>
    %612 = vector.shape_cast %611 : vector<1x1x8xi1> to vector<1x1x8xi1>
    %613 = vector.broadcast %612 : vector<1x1x8xi1> to vector<8x8x8xi1>
    %614 = vector.shape_cast %605 : vector<8x8x1xi32> to vector<8x8x1xi32>
    %615 = vector.broadcast %614 : vector<8x8x1xi32> to vector<8x8x8xi32>
    %616 = arith.select %613, %615, %601 : vector<8x8x8xi1>, vector<8x8x8xi32>
    %c8_i32_127 = arith.constant 8 : i32
    %617 = tpu.iota {dimensions = array<i32: 3>} : vector<1x1x1x128xi32>
    %618 = vector.shape_cast %616 : vector<8x8x8xi32> to vector<8x8x8x1xi32>
    %619 = vector.broadcast %617 : vector<1x1x1x128xi32> to vector<8x8x8x128xi32>
    %620 = vector.broadcast %618 : vector<8x8x8x1xi32> to vector<8x8x8x128xi32>
    %621 = arith.cmpi eq, %619, %620 : vector<8x8x8x128xi32>
    %622 = arith.extui %621 : vector<8x8x8x128xi1> to vector<8x8x8x128xi32>
    %623 = arith.sitofp %622 : vector<8x8x8x128xi32> to vector<8x8x8x128xf32>
    %624 = vector.shape_cast %623 : vector<8x8x8x128xf32> to vector<8x64x128xf32>
    "tpu.trace_start"() <{level = 10 : i32, message = "bmn,bnc->bmc"}> : () -> ()
    %cst_128 = arith.constant dense<0.000000e+00> : vector<8x64x6xf32>
    %625 = tpu.matmul %624, %3, %cst_128 {dimension_numbers = #tpu.dot_dimension_numbers<[2], [1], [1], [2], [0, 0, 0, 1, 1, 2], [0], [0]>} : vector<8x64x128xf32>, vector<8x128x6xf32>, vector<8x64x6xf32> -> vector<8x64x6xf32>
    "tpu.trace_stop"() : () -> ()
    %626 = vector.shape_cast %625 : vector<8x64x6xf32> to vector<8x8x8x6xf32>
    %627 = tpu.iota {dimensions = array<i32: 3>} : vector<1x1x1x6xi32>
    %c0_i32_129 = arith.constant 0 : i32
    %628 = vector.broadcast %c0_i32_129 : i32 to vector<1x1x1x6xi32>
    %629 = arith.cmpi eq, %627, %628 : vector<1x1x1x6xi32>
    %630 = vector.shape_cast %416 : vector<8x8xf32> to vector<8x8x1x1xf32>
    %cst_130 = arith.constant 0.000000e+00 : f32
    %631 = vector.shape_cast %629 : vector<1x1x1x6xi1> to vector<1x1x1x6xi1>
    %632 = vector.broadcast %631 : vector<1x1x1x6xi1> to vector<8x8x1x6xi1>
    %633 = vector.shape_cast %630 : vector<8x8x1x1xf32> to vector<8x8x1x1xf32>
    %634 = vector.broadcast %633 : vector<8x8x1x1xf32> to vector<8x8x1x6xf32>
    %635 = vector.broadcast %cst_130 : f32 to vector<8x8x1x6xf32>
    %636 = arith.select %632, %634, %635 : vector<8x8x1x6xi1>, vector<8x8x1x6xf32>
    %c1_i32_131 = arith.constant 1 : i32
    %637 = vector.broadcast %c1_i32_131 : i32 to vector<1x1x1x6xi32>
    %638 = arith.cmpi eq, %627, %637 : vector<1x1x1x6xi32>
    %639 = vector.shape_cast %421 : vector<8x8xf32> to vector<8x8x1x1xf32>
    %cst_132 = arith.constant 0.000000e+00 : f32
    %640 = vector.shape_cast %638 : vector<1x1x1x6xi1> to vector<1x1x1x6xi1>
    %641 = vector.broadcast %640 : vector<1x1x1x6xi1> to vector<8x8x1x6xi1>
    %642 = vector.shape_cast %639 : vector<8x8x1x1xf32> to vector<8x8x1x1xf32>
    %643 = vector.broadcast %642 : vector<8x8x1x1xf32> to vector<8x8x1x6xf32>
    %644 = vector.broadcast %cst_132 : f32 to vector<8x8x1x6xf32>
    %645 = arith.select %641, %643, %644 : vector<8x8x1x6xi1>, vector<8x8x1x6xf32>
    %646 = arith.addf %636, %645 : vector<8x8x1x6xf32>
    %c2_i32_133 = arith.constant 2 : i32
    %647 = vector.broadcast %c2_i32_133 : i32 to vector<1x1x1x6xi32>
    %648 = arith.cmpi eq, %627, %647 : vector<1x1x1x6xi32>
    %649 = vector.shape_cast %426 : vector<8x8xf32> to vector<8x8x1x1xf32>
    %cst_134 = arith.constant 0.000000e+00 : f32
    %650 = vector.shape_cast %648 : vector<1x1x1x6xi1> to vector<1x1x1x6xi1>
    %651 = vector.broadcast %650 : vector<1x1x1x6xi1> to vector<8x8x1x6xi1>
    %652 = vector.shape_cast %649 : vector<8x8x1x1xf32> to vector<8x8x1x1xf32>
    %653 = vector.broadcast %652 : vector<8x8x1x1xf32> to vector<8x8x1x6xf32>
    %654 = vector.broadcast %cst_134 : f32 to vector<8x8x1x6xf32>
    %655 = arith.select %651, %653, %654 : vector<8x8x1x6xi1>, vector<8x8x1x6xf32>
    %656 = arith.addf %646, %655 : vector<8x8x1x6xf32>
    %657 = vector.broadcast %656 : vector<8x8x1x6xf32> to vector<8x8x8x6xf32>
    %658 = arith.subf %626, %657 : vector<8x8x8x6xf32>
    %c0_135 = arith.constant 0 : index
    %c0_136 = arith.constant 0 : index
    %c0_137 = arith.constant 0 : index
    %c0_138 = arith.constant 0 : index
    %659 = vector.load %arg6[%c0_135, %c0_136, %c0_137, %c0_138] : memref<8x8x8x6xf32, #tpu.memory_space<vmem>>, vector<8x8x8x6xf32>
    tpu.vector_store %arg6[%c0_135, %c0_136, %c0_137, %c0_138], %658 {strides = array<i32>} : memref<8x8x8x6xf32, #tpu.memory_space<vmem>>, vector<8x8x8x6xf32>,
    return
  }
  func.func @transform_0(%arg0: i32) -> (i32, i32) {
    %c0_i32 = arith.constant 0 : i32
    %c0_i32_0 = arith.constant 0 : i32
    return %arg0, %c0_i32 : i32, i32
  }
  func.func @transform_1(%arg0: i32) -> (i32, i32) {
    %c0_i32 = arith.constant 0 : i32
    %c0_i32_0 = arith.constant 0 : i32
    return %arg0, %c0_i32 : i32, i32
  }
  func.func @transform_2(%arg0: i32) -> (i32, i32) {
    %c0_i32 = arith.constant 0 : i32
    %c0_i32_0 = arith.constant 0 : i32
    return %arg0, %c0_i32 : i32, i32
  }
  func.func @transform_3(%arg0: i32) -> (i32, i32) {
    %c0_i32 = arith.constant 0 : i32
    %c0_i32_0 = arith.constant 0 : i32
    return %arg0, %c0_i32 : i32, i32
  }
  func.func @transform_4(%arg0: i32) -> (i32, i32, i32) {
    %c0_i32 = arith.constant 0 : i32
    %c0_i32_0 = arith.constant 0 : i32
    %c0_i32_1 = arith.constant 0 : i32
    return %arg0, %c0_i32, %c0_i32_0 : i32, i32, i32
  }
  func.func @transform_5(%arg0: i32) -> (i32, i32, i32, i32) {
    %c0_i32 = arith.constant 0 : i32
    %c0_i32_0 = arith.constant 0 : i32
    %c0_i32_1 = arith.constant 0 : i32
    %c0_i32_2 = arith.constant 0 : i32
    return %arg0, %c0_i32, %c0_i32_0, %c0_i32_1 : i32, i32, i32, i32
  }
  func.func @transform_6(%arg0: i32) -> (i32, i32, i32) {
    %c0_i32 = arith.constant 0 : i32
    %c0_i32_0 = arith.constant 0 : i32
    %c0_i32_1 = arith.constant 0 : i32
    return %arg0, %c0_i32, %c0_i32_0 : i32, i32, i32
  }
}

</mosaic_0001>

<llo_original>
// kernel: tpu_custom_call.1
$region0: #{tpu_custom_call.1}
  #allocation0 [shape = 'u32[]', space=smem, size = 0x4, offset = 0x4, fixed_abs, tag = 'smem constant byte address 0x4 - core index']
  #allocation1 [shape = 'u32[144,128]{1,0:T(1,128)}', space=vmem, size = 0x12000, scoped, tag = 'internal scratch']
  %s0 = inlined_call_operand.vmem [shape: s32[16,1], index: 0, kind: input, shape index: {}]
  %s1 = inlined_call_operand.vmem [shape: f32[16,128], index: 1, kind: input, shape index: {}]
  %s2 = inlined_call_operand.vmem [shape: f32[16,128], index: 2, kind: input, shape index: {}]
  %s3 = inlined_call_operand.vmem [shape: f32[16,128], index: 3, kind: input, shape index: {}]
  %s4 = inlined_call_operand.vmem [shape: f32[16,128,6], index: 4, kind: input, shape index: {}]
  %s5 = inlined_call_operand.vmem [shape: f32[16,8,8,6], index: 5, kind: output, shape index: {0}]
  %s6 = inlined_call_operand.vmem [shape: f32[16,3,8], index: 6, kind: output, shape index: {1}]
  %7 = xla_tuple %s5, %s6
  %s8 = sld [smem:[#allocation0]]
  $region61: #{tpu_custom_call.1} parent=0
    _
  %s10 = ssub.s32 1, %s8
  %s11 = scalar_select 0, %s10, %s8
  loop: start=0, step=1, limit=4
  $region2: #{tpu_custom_call.1} parent=0 // loop_pre_header
    _
  $region3: #{tpu_custom_call.1} parent=0 // loop_header
    %s13 = sphi 0, %s17
    %p14 = scmp.ge.s32.totalorder %s13, 4
    %s23 = sphi 0, %s25
    %s26 = sphi 0, %s23
    %s27 = sphi 0, %s26
    %s43 = sphi 0, %s27
    %s49 = sphi 0, %s51
    %s52 = sphi 0, %s49
    %s53 = sphi 0, %s52
    %s69 = sphi 0, %s53
    %s75 = sphi 0, %s77
    %s78 = sphi 0, %s75
    %s79 = sphi 0, %s78
    %s95 = sphi 0, %s79
    %s101 = sphi 0, %s103
    %s104 = sphi 0, %s101
    %s105 = sphi 0, %s104
    %s121 = sphi 0, %s105
    %s127 = sphi 0, %s129
    %s130 = sphi 0, %s127
    %s131 = sphi 0, %s130
    %s147 = sphi 0, %s131
    %s153 = sphi 0, %s155
    %s156 = sphi 0, %s153
    %s157 = sphi 0, %s156
    %s173 = sphi 0, %s157
    %s179 = sphi 0, %s181
    %s182 = sphi 0, %s179
    %s183 = sphi 0, %s182
    %s199 = sphi 0, %s183
  $region4: #{tpu_custom_call.1} parent=0 // loop_header_branch
    %16 = sbr.rel (%p14) target = $region8
  $region5: #{tpu_custom_call.1} parent=0 // loop_body
    %s18 = ssub.s32 %s13, 1
    %s19 = ssub.s32 %s13, 2
    %s20 = sadd.s32 %s13, 1
    %s21 = ssub.s32 %s13, %s20
    %p22 = scmp.eq.s32.totalorder %s21, 0
    %s24 = sadd.s32 %s23, 1
    %s25 = scalar_select %p22, %s23, %s24
    %p28 = pneg %p22
    %p29 = scmp.eq.s32.totalorder %s13, 1
    %p30 = por %p28, %p29
    %p31 = scmp.ne.s32.totalorder %s23, %s26
    %p32 = scmp.eq.s32.totalorder %s13, 0
    %p33 = por %p31, %p32
    %p34 = scmp.ne.s32.totalorder %s23, %s26
    %p35 = scmp.eq.s32.totalorder %s18, 1
    %p36 = por %p34, %p35
    %p37 = scmp.ne.s32.totalorder %s26, %s27
    %p38 = scmp.eq.s32.totalorder %s18, 0
    %p39 = por %p37, %p38
    %p40 = scmp.ne.s32.totalorder %s26, %s27
    %p41 = scmp.eq.s32.totalorder %s19, 1
    %p42 = por %p40, %p41
    %p44 = scmp.ne.s32.totalorder %s27, %s43
    %p45 = scmp.eq.s32.totalorder %s19, 0
    %p46 = por %p44, %p45
    %s47 = ssub.s32 %s13, %s20
    %p48 = scmp.eq.s32.totalorder %s47, 0
    %s50 = sadd.s32 %s49, 1
    %s51 = scalar_select %p48, %s49, %s50
    %p54 = pneg %p48
    %p55 = scmp.eq.s32.totalorder %s13, 1
    %p56 = por %p54, %p55
    %p57 = scmp.ne.s32.totalorder %s49, %s52
    %p58 = scmp.eq.s32.totalorder %s13, 0
    %p59 = por %p57, %p58
    %p60 = scmp.ne.s32.totalorder %s49, %s52
    %p61 = scmp.eq.s32.totalorder %s18, 1
    %p62 = por %p60, %p61
    %p63 = scmp.ne.s32.totalorder %s52, %s53
    %p64 = scmp.eq.s32.totalorder %s18, 0
    %p65 = por %p63, %p64
    %p66 = scmp.ne.s32.totalorder %s52, %s53
    %p67 = scmp.eq.s32.totalorder %s19, 1
    %p68 = por %p66, %p67
    %p70 = scmp.ne.s32.totalorder %s53, %s69
    %p71 = scmp.eq.s32.totalorder %s19, 0
    %p72 = por %p70, %p71
    %s73 = ssub.s32 %s13, %s20
    %p74 = scmp.eq.s32.totalorder %s73, 0
    %s76 = sadd.s32 %s75, 1
    %s77 = scalar_select %p74, %s75, %s76
    %p80 = pneg %p74
    %p81 = scmp.eq.s32.totalorder %s13, 1
    %p82 = por %p80, %p81
    %p83 = scmp.ne.s32.totalorder %s75, %s78
    %p84 = scmp.eq.s32.totalorder %s13, 0
    %p85 = por %p83, %p84
    %p86 = scmp.ne.s32.totalorder %s75, %s78
    %p87 = scmp.eq.s32.totalorder %s18, 1
    %p88 = por %p86, %p87
    %p89 = scmp.ne.s32.totalorder %s78, %s79
    %p90 = scmp.eq.s32.totalorder %s18, 0
    %p91 = por %p89, %p90
    %p92 = scmp.ne.s32.totalorder %s78, %s79
    %p93 = scmp.eq.s32.totalorder %s19, 1
    %p94 = por %p92, %p93
    %p96 = scmp.ne.s32.totalorder %s79, %s95
    %p97 = scmp.eq.s32.totalorder %s19, 0
    %p98 = por %p96, %p97
    %s99 = ssub.s32 %s13, %s20
    %p100 = scmp.eq.s32.totalorder %s99, 0
    %s102 = sadd.s32 %s101, 1
    %s103 = scalar_select %p100, %s101, %s102
    %p106 = pneg %p100
    %p107 = scmp.eq.s32.totalorder %s13, 1
    %p108 = por %p106, %p107
    %p109 = scmp.ne.s32.totalorder %s101, %s104
    %p110 = scmp.eq.s32.totalorder %s13, 0
    %p111 = por %p109, %p110
    %p112 = scmp.ne.s32.totalorder %s101, %s104
    %p113 = scmp.eq.s32.totalorder %s18, 1
    %p114 = por %p112, %p113
    %p115 = scmp.ne.s32.totalorder %s104, %s105
    %p116 = scmp.eq.s32.totalorder %s18, 0
    %p117 = por %p115, %p116
    %p118 = scmp.ne.s32.totalorder %s104, %s105
    %p119 = scmp.eq.s32.totalorder %s19, 1
    %p120 = por %p118, %p119
    %p122 = scmp.ne.s32.totalorder %s105, %s121
    %p123 = scmp.eq.s32.totalorder %s19, 0
    %p124 = por %p122, %p123
    %s125 = ssub.s32 %s13, %s20
    %p126 = scmp.eq.s32.totalorder %s125, 0
    %s128 = sadd.s32 %s127, 1
    %s129 = scalar_select %p126, %s127, %s128
    %p132 = pneg %p126
    %p133 = scmp.eq.s32.totalorder %s13, 1
    %p134 = por %p132, %p133
    %p135 = scmp.ne.s32.totalorder %s127, %s130
    %p136 = scmp.eq.s32.totalorder %s13, 0
    %p137 = por %p135, %p136
    %p138 = scmp.ne.s32.totalorder %s127, %s130
    %p139 = scmp.eq.s32.totalorder %s18, 1
    %p140 = por %p138, %p139
    %p141 = scmp.ne.s32.totalorder %s130, %s131
    %p142 = scmp.eq.s32.totalorder %s18, 0
    %p143 = por %p141, %p142
    %p144 = scmp.ne.s32.totalorder %s130, %s131
    %p145 = scmp.eq.s32.totalorder %s19, 1
    %p146 = por %p144, %p145
    %p148 = scmp.ne.s32.totalorder %s131, %s147
    %p149 = scmp.eq.s32.totalorder %s19, 0
    %p150 = por %p148, %p149
    %s151 = ssub.s32 %s13, %s20
    %p152 = scmp.eq.s32.totalorder %s151, 0
    %s154 = sadd.s32 %s153, 1
    %s155 = scalar_select %p152, %s153, %s154
    %p158 = pneg %p152
    %p159 = scmp.eq.s32.totalorder %s13, 1
    %p160 = por %p158, %p159
    %p161 = scmp.ne.s32.totalorder %s153, %s156
    %p162 = scmp.eq.s32.totalorder %s13, 0
    %p163 = por %p161, %p162
    %p164 = scmp.ne.s32.totalorder %s153, %s156
    %p165 = scmp.eq.s32.totalorder %s18, 1
    %p166 = por %p164, %p165
    %p167 = scmp.ne.s32.totalorder %s156, %s157
    %p168 = scmp.eq.s32.totalorder %s18, 0
    %p169 = por %p167, %p168
    %p170 = scmp.ne.s32.totalorder %s156, %s157
    %p171 = scmp.eq.s32.totalorder %s19, 1
    %p172 = por %p170, %p171
    %p174 = scmp.ne.s32.totalorder %s157, %s173
    %p175 = scmp.eq.s32.totalorder %s19, 0
    %p176 = por %p174, %p175
    %s177 = ssub.s32 %s13, %s20
    %p178 = scmp.eq.s32.totalorder %s177, 0
    %s180 = sadd.s32 %s179, 1
    %s181 = scalar_select %p178, %s179, %s180
    %p184 = pneg %p178
    %p185 = scmp.eq.s32.totalorder %s13, 1
    %p186 = por %p184, %p185
    %p187 = scmp.ne.s32.totalorder %s179, %s182
    %p188 = scmp.eq.s32.totalorder %s13, 0
    %p189 = por %p187, %p188
    %p190 = scmp.ne.s32.totalorder %s179, %s182
    %p191 = scmp.eq.s32.totalorder %s18, 1
    %p192 = por %p190, %p191
    %p193 = scmp.ne.s32.totalorder %s182, %s183
    %p194 = scmp.eq.s32.totalorder %s18, 0
    %p195 = por %p193, %p194
    %p196 = scmp.ne.s32.totalorder %s182, %s183
    %p197 = scmp.eq.s32.totalorder %s19, 1
    %p198 = por %p196, %p197
    %p200 = scmp.ne.s32.totalorder %s183, %s199
    %p201 = scmp.eq.s32.totalorder %s19, 0
    %p202 = por %p200, %p201
    %p203 = scmp.le.s32.totalorder 1, %s13
    %p204 = scmp.lt.s32.totalorder %s13, 3
    %p205 = pnand %p203, %p204
    %p206 = pneg %p205
    // Predicated region
    $region9: #{tpu_custom_call.1} parent=5 // pred_check
      _
    $region10: #{tpu_custom_call.1} parent=5 // pred_check_branch
      %208 = sbr.rel (%p205) target = $region12
    $region11: #{tpu_custom_call.1} parent=5 // pred_region
      %s209 = ssub.s32 %s13, 1
    $region12: #{tpu_custom_call.1} parent=5 // pred_fallthru
      _
    %p210 = scmp.lt.s32.totalorder %s13, 2
    // Predicated region
    $region13: #{tpu_custom_call.1} parent=5 // pred_check
      %p211 = pneg %p210
    $region14: #{tpu_custom_call.1} parent=5 // pred_check_branch
      %213 = sbr.rel (%p211) target = $region16
    $region15: #{tpu_custom_call.1} parent=5 // pred_region
      // Predicated region
      $region17: #{tpu_custom_call.1} parent=15 // pred_check
        %p214 = pneg %p33
      $region18: #{tpu_custom_call.1} parent=15 // pred_check_branch
        %216 = sbr.rel (%p214) target = $region20
      $region19: #{tpu_custom_call.1} parent=15 // pred_region
        %p217 = scmp.lt.s32.totalorder %s13, 1
        %s218 = scalar_select %p217, %s13, 1
        %s219 = smul.addr %s218, 8
        %s220 = scalar_lea.vmem %s0, %s219
      $region20: #{tpu_custom_call.1} parent=15 // pred_fallthru
        _
      // Predicated region
      $region21: #{tpu_custom_call.1} parent=15 // pred_check
        %p221 = pneg %p59
      $region22: #{tpu_custom_call.1} parent=15 // pred_check_branch
        %223 = sbr.rel (%p221) target = $region24
      $region23: #{tpu_custom_call.1} parent=15 // pred_region
        %p224 = scmp.lt.s32.totalorder %s13, 1
        %s225 = scalar_select %p224, %s13, 1
        %s226 = smul.addr %s225, 8
        %s227 = scalar_lea.vmem %s1, %s226
      $region24: #{tpu_custom_call.1} parent=15 // pred_fallthru
        _
      // Predicated region
      $region25: #{tpu_custom_call.1} parent=15 // pred_check
        %p228 = pneg %p85
      $region26: #{tpu_custom_call.1} parent=15 // pred_check_branch
        %230 = sbr.rel (%p228) target = $region28
      $region27: #{tpu_custom_call.1} parent=15 // pred_region
        %p231 = scmp.lt.s32.totalorder %s13, 1
        %s232 = scalar_select %p231, %s13, 1
        %s233 = smul.addr %s232, 8
        %s234 = scalar_lea.vmem %s2, %s233
      $region28: #{tpu_custom_call.1} parent=15 // pred_fallthru
        _
      // Predicated region
      $region29: #{tpu_custom_call.1} parent=15 // pred_check
        %p235 = pneg %p111
      $region30: #{tpu_custom_call.1} parent=15 // pred_check_branch
        %237 = sbr.rel (%p235) target = $region32
      $region31: #{tpu_custom_call.1} parent=15 // pred_region
        %p238 = scmp.lt.s32.totalorder %s13, 1
        %s239 = scalar_select %p238, %s13, 1
        %s240 = smul.addr %s239, 8
        %s241 = scalar_lea.vmem %s3, %s240
      $region32: #{tpu_custom_call.1} parent=15 // pred_fallthru
        _
      // Predicated region
      $region33: #{tpu_custom_call.1} parent=15 // pred_check
        %p242 = pneg %p137
      $region34: #{tpu_custom_call.1} parent=15 // pred_check_branch
        %244 = sbr.rel (%p242) target = $region36
      $region35: #{tpu_custom_call.1} parent=15 // pred_region
        %s245 = smul.u32 8, %s13
        %p246 = scmp.lt.s32.totalorder %s245, 15
        %s247 = scalar_select %p246, %s245, 15
        %s248 = smul.addr %s247, 16
        %s249 = smul.addr %s248, 8
        %s250 = scalar_lea.vmem %s4, %s249
        %s251 = smul.u32 8, %s13
      $region36: #{tpu_custom_call.1} parent=15 // pred_fallthru
        _
    $region16: #{tpu_custom_call.1} parent=5 // pred_fallthru
      _
    %p252 = scmp.le.s32.totalorder 1, %s13
    %p253 = scmp.lt.s32.totalorder %s13, 3
    %p254 = pnand %p252, %p253
    %p255 = pneg %p254
    // Predicated region
    $region37: #{tpu_custom_call.1} parent=5 // pred_check
      _
    $region38: #{tpu_custom_call.1} parent=5 // pred_check_branch
      %257 = sbr.rel (%p254) target = $region40
    $region39: #{tpu_custom_call.1} parent=5 // pred_region
      %s258 = ssub.s32 %s13, 1
      %p259 = scmp.lt.s32.totalorder %s18, 1
      %s260 = scalar_select %p259, %s18, 1
      %s261 = smul.addr %s260, 8
      %s262 = scalar_lea.vmem %s0, %s261
      %p263 = pneg %p39
      %p264 = pneg %p36
      %p265 = scmp.lt.s32.totalorder %s18, 1
      %s266 = scalar_select %p265, %s18, 1
      %s267 = smul.addr %s266, 8
      %s268 = scalar_lea.vmem %s1, %s267
      %p269 = pneg %p65
      %p270 = pneg %p62
      %p271 = scmp.lt.s32.totalorder %s18, 1
      %s272 = scalar_select %p271, %s18, 1
      %s273 = smul.addr %s272, 8
      %s274 = scalar_lea.vmem %s2, %s273
      %p275 = pneg %p91
      %p276 = pneg %p88
      %p277 = scmp.lt.s32.totalorder %s18, 1
      %s278 = scalar_select %p277, %s18, 1
      %s279 = smul.addr %s278, 8
      %s280 = scalar_lea.vmem %s3, %s279
      %p281 = pneg %p117
      %p282 = pneg %p114
      %s283 = smul.u32 8, %s18
      %p284 = scmp.lt.s32.totalorder %s283, 15
      %s285 = scalar_select %p284, %s283, 15
      %s286 = smul.addr %s285, 16
      %s287 = smul.addr %s286, 8
      %s288 = scalar_lea.vmem %s4, %s287
      %p289 = pneg %p143
      %p290 = pneg %p140
      %p291 = pneg %p169
      %p292 = pneg %p166
      %s293 = smul.u32 8, %s18
      %p294 = scmp.lt.s32.totalorder %s293, 15
      %s295 = scalar_select %p294, %s293, 15
      %s296 = smul.addr %s295, 8
      %s297 = smul.addr %s296, 8
      %s298 = scalar_lea.vmem %s5, %s297
      %p299 = pneg %p195
      %p300 = pneg %p192
      %s301 = smul.u32 8, %s18
      %p302 = scmp.lt.s32.totalorder %s301, 15
      %s303 = scalar_select %p302, %s301, 15
      %s304 = smul.addr %s303, 4
      %s305 = scalar_lea.vmem %s6, %s304
      %p306 = scmp.lt.s32.totalorder %s18, 1
      %s307 = scalar_select %p306, %s18, 1
      %s308 = smul.addr %s307, 8
      %s309 = scalar_lea.vmem %s0, %s308
      %p310 = scmp.lt.s32.totalorder %s18, 1
      %s311 = scalar_select %p310, %s18, 1
      %s312 = smul.addr %s311, 8
      %s313 = scalar_lea.vmem %s1, %s312
      %p314 = scmp.lt.s32.totalorder %s18, 1
      %s315 = scalar_select %p314, %s18, 1
      %s316 = smul.addr %s315, 8
      %s317 = scalar_lea.vmem %s2, %s316
      %p318 = scmp.lt.s32.totalorder %s18, 1
      %s319 = scalar_select %p318, %s18, 1
      %s320 = smul.addr %s319, 8
      %s321 = scalar_lea.vmem %s3, %s320
      %s322 = smul.u32 8, %s18
      %p323 = scmp.lt.s32.totalorder %s322, 15
      %s324 = scalar_select %p323, %s322, 15
      %s325 = smul.addr %s324, 16
      %s326 = smul.addr %s325, 8
      %s327 = scalar_lea.vmem %s4, %s326
      %s328 = smul.u32 8, %s18
      %s329 = smul.u32 8, %s18
      %p330 = scmp.lt.s32.totalorder %s329, 15
      %s331 = scalar_select %p330, %s329, 15
      %s332 = smul.addr %s331, 8
      %s333 = smul.addr %s332, 8
      %s334 = scalar_lea.vmem %s5, %s333
      %s335 = smul.u32 8, %s18
      %s336 = smul.u32 8, %s18
      %p337 = scmp.lt.s32.totalorder %s336, 15
      %s338 = scalar_select %p337, %s336, 15
      %s339 = smul.addr %s338, 4
      %s340 = scalar_lea.vmem %s6, %s339
      %s341 = smul.u32 8, %s18
      %v342 = vld [vmem:[%s313] sm:$0xff]
      %v343 = vld [vmem:[%s317] sm:$0xff]
      %v344 = vld [vmem:[%s321] sm:$0xff]
      %v345 = vld [vmem:[%s327] sm:$0xff]
      %v346 = vld [vmem:[%s327 + $0x8] sm:$0xff]
      %v347 = vld [vmem:[%s327 + $0x10] sm:$0xff]
      %v348 = vld [vmem:[%s327 + $0x18] sm:$0xff]
      %v349 = vld [vmem:[%s327 + $0x20] sm:$0xff]
      %v350 = vld [vmem:[%s327 + $0x28] sm:$0xff]
      %v351 = vld [vmem:[%s327 + $0x30] sm:$0xff]
      %v352 = vld [vmem:[%s327 + $0x38] sm:$0xff]
      %v353 = vld [vmem:[%s327 + $0x40] sm:$0xff]
      %v354 = vld [vmem:[%s327 + $0x48] sm:$0xff]
      %v355 = vld [vmem:[%s327 + $0x50] sm:$0xff]
      %v356 = vld [vmem:[%s327 + $0x58] sm:$0xff]
      %v357 = vld [vmem:[%s327 + $0x60] sm:$0xff]
      %v358 = vld [vmem:[%s327 + $0x68] sm:$0xff]
      %v359 = vld [vmem:[%s327 + $0x70] sm:$0xff]
      %v360 = vld [vmem:[%s327 + $0x78] sm:$0xff]
      %v361 = vld [vmem:[%s327 + $0x80] sm:$0xff]
      %v362 = vld [vmem:[%s327 + $0x88] sm:$0xff]
      %v363 = vld [vmem:[%s327 + $0x90] sm:$0xff]
      %v364 = vld [vmem:[%s327 + $0x98] sm:$0xff]
      %v365 = vld [vmem:[%s327 + $0xa0] sm:$0xff]
      %v366 = vld [vmem:[%s327 + $0xa8] sm:$0xff]
      %v367 = vld [vmem:[%s327 + $0xb0] sm:$0xff]
      %v368 = vld [vmem:[%s327 + $0xb8] sm:$0xff]
      %v369 = vld [vmem:[%s327 + $0xc0] sm:$0xff]
      %v370 = vld [vmem:[%s327 + $0xc8] sm:$0xff]
      %v371 = vld [vmem:[%s327 + $0xd0] sm:$0xff]
      %v372 = vld [vmem:[%s327 + $0xd8] sm:$0xff]
      %v373 = vld [vmem:[%s327 + $0xe0] sm:$0xff]
      %v374 = vld [vmem:[%s327 + $0xe8] sm:$0xff]
      %v375 = vld [vmem:[%s327 + $0xf0] sm:$0xff]
      %v376 = vld [vmem:[%s327 + $0xf8] sm:$0xff]
      %v377 = vld [vmem:[%s327 + $0x100] sm:$0xff]
      %v378 = vld [vmem:[%s327 + $0x108] sm:$0xff]
      %v379 = vld [vmem:[%s327 + $0x110] sm:$0xff]
      %v380 = vld [vmem:[%s327 + $0x118] sm:$0xff]
      %v381 = vld [vmem:[%s327 + $0x120] sm:$0xff]
      %v382 = vld [vmem:[%s327 + $0x128] sm:$0xff]
      %v383 = vld [vmem:[%s327 + $0x130] sm:$0xff]
      %v384 = vld [vmem:[%s327 + $0x138] sm:$0xff]
      %v385 = vld [vmem:[%s327 + $0x140] sm:$0xff]
      %v386 = vld [vmem:[%s327 + $0x148] sm:$0xff]
      %v387 = vld [vmem:[%s327 + $0x150] sm:$0xff]
      %v388 = vld [vmem:[%s327 + $0x158] sm:$0xff]
      %v389 = vld [vmem:[%s327 + $0x160] sm:$0xff]
      %v390 = vld [vmem:[%s327 + $0x168] sm:$0xff]
      %v391 = vld [vmem:[%s327 + $0x170] sm:$0xff]
      %v392 = vld [vmem:[%s327 + $0x178] sm:$0xff]
      %v393 = vld [vmem:[%s327 + $0x180] sm:$0xff]
      %v394 = vld [vmem:[%s327 + $0x188] sm:$0xff]
      %v395 = vld [vmem:[%s327 + $0x190] sm:$0xff]
      %v396 = vld [vmem:[%s327 + $0x198] sm:$0xff]
      %v397 = vld [vmem:[%s327 + $0x1a0] sm:$0xff]
      %v398 = vld [vmem:[%s327 + $0x1a8] sm:$0xff]
      %v399 = vld [vmem:[%s327 + $0x1b0] sm:$0xff]
      %v400 = vld [vmem:[%s327 + $0x1b8] sm:$0xff]
      %v401 = vld [vmem:[%s327 + $0x1c0] sm:$0xff]
      %v402 = vld [vmem:[%s327 + $0x1c8] sm:$0xff]
      %v403 = vld [vmem:[%s327 + $0x1d0] sm:$0xff]
      %v404 = vld [vmem:[%s327 + $0x1d8] sm:$0xff]
      %v405 = vld [vmem:[%s327 + $0x1e0] sm:$0xff]
      %v406 = vld [vmem:[%s327 + $0x1e8] sm:$0xff]
      %v407 = vld [vmem:[%s327 + $0x1f0] sm:$0xff]
      %v408 = vld [vmem:[%s327 + $0x1f8] sm:$0xff]
      %v409 = vld [vmem:[%s327 + $0x200] sm:$0xff]
      %v410 = vld [vmem:[%s327 + $0x208] sm:$0xff]
      %v411 = vld [vmem:[%s327 + $0x210] sm:$0xff]
      %v412 = vld [vmem:[%s327 + $0x218] sm:$0xff]
      %v413 = vld [vmem:[%s327 + $0x220] sm:$0xff]
      %v414 = vld [vmem:[%s327 + $0x228] sm:$0xff]
      %v415 = vld [vmem:[%s327 + $0x230] sm:$0xff]
      %v416 = vld [vmem:[%s327 + $0x238] sm:$0xff]
      %v417 = vld [vmem:[%s327 + $0x240] sm:$0xff]
      %v418 = vld [vmem:[%s327 + $0x248] sm:$0xff]
      %v419 = vld [vmem:[%s327 + $0x250] sm:$0xff]
      %v420 = vld [vmem:[%s327 + $0x258] sm:$0xff]
      %v421 = vld [vmem:[%s327 + $0x260] sm:$0xff]
      %v422 = vld [vmem:[%s327 + $0x268] sm:$0xff]
      %v423 = vld [vmem:[%s327 + $0x270] sm:$0xff]
      %v424 = vld [vmem:[%s327 + $0x278] sm:$0xff]
      %v425 = vld [vmem:[%s327 + $0x280] sm:$0xff]
      %v426 = vld [vmem:[%s327 + $0x288] sm:$0xff]
      %v427 = vld [vmem:[%s327 + $0x290] sm:$0xff]
      %v428 = vld [vmem:[%s327 + $0x298] sm:$0xff]
      %v429 = vld [vmem:[%s327 + $0x2a0] sm:$0xff]
      %v430 = vld [vmem:[%s327 + $0x2a8] sm:$0xff]
      %v431 = vld [vmem:[%s327 + $0x2b0] sm:$0xff]
      %v432 = vld [vmem:[%s327 + $0x2b8] sm:$0xff]
      %v433 = vld [vmem:[%s327 + $0x2c0] sm:$0xff]
      %v434 = vld [vmem:[%s327 + $0x2c8] sm:$0xff]
      %v435 = vld [vmem:[%s327 + $0x2d0] sm:$0xff]
      %v436 = vld [vmem:[%s327 + $0x2d8] sm:$0xff]
      %v437 = vld [vmem:[%s327 + $0x2e0] sm:$0xff]
      %v438 = vld [vmem:[%s327 + $0x2e8] sm:$0xff]
      %v439 = vld [vmem:[%s327 + $0x2f0] sm:$0xff]
      %v440 = vld [vmem:[%s327 + $0x2f8] sm:$0xff]
      %v441 = vld [vmem:[%s327 + $0x300] sm:$0xff]
      %v442 = vld [vmem:[%s327 + $0x308] sm:$0xff]
      %v443 = vld [vmem:[%s327 + $0x310] sm:$0xff]
      %v444 = vld [vmem:[%s327 + $0x318] sm:$0xff]
      %v445 = vld [vmem:[%s327 + $0x320] sm:$0xff]
      %v446 = vld [vmem:[%s327 + $0x328] sm:$0xff]
      %v447 = vld [vmem:[%s327 + $0x330] sm:$0xff]
      %v448 = vld [vmem:[%s327 + $0x338] sm:$0xff]
      %v449 = vld [vmem:[%s327 + $0x340] sm:$0xff]
      %v450 = vld [vmem:[%s327 + $0x348] sm:$0xff]
      %v451 = vld [vmem:[%s327 + $0x350] sm:$0xff]
      %v452 = vld [vmem:[%s327 + $0x358] sm:$0xff]
      %v453 = vld [vmem:[%s327 + $0x360] sm:$0xff]
      %v454 = vld [vmem:[%s327 + $0x368] sm:$0xff]
      %v455 = vld [vmem:[%s327 + $0x370] sm:$0xff]
      %v456 = vld [vmem:[%s327 + $0x378] sm:$0xff]
      %v457 = vld [vmem:[%s327 + $0x380] sm:$0xff]
      %v458 = vld [vmem:[%s327 + $0x388] sm:$0xff]
      %v459 = vld [vmem:[%s327 + $0x390] sm:$0xff]
      %v460 = vld [vmem:[%s327 + $0x398] sm:$0xff]
      %v461 = vld [vmem:[%s327 + $0x3a0] sm:$0xff]
      %v462 = vld [vmem:[%s327 + $0x3a8] sm:$0xff]
      %v463 = vld [vmem:[%s327 + $0x3b0] sm:$0xff]
      %v464 = vld [vmem:[%s327 + $0x3b8] sm:$0xff]
      %v465 = vld [vmem:[%s327 + $0x3c0] sm:$0xff]
      %v466 = vld [vmem:[%s327 + $0x3c8] sm:$0xff]
      %v467 = vld [vmem:[%s327 + $0x3d0] sm:$0xff]
      %v468 = vld [vmem:[%s327 + $0x3d8] sm:$0xff]
      %v469 = vld [vmem:[%s327 + $0x3e0] sm:$0xff]
      %v470 = vld [vmem:[%s327 + $0x3e8] sm:$0xff]
      %v471 = vld [vmem:[%s327 + $0x3f0] sm:$0xff]
      %v472 = vld [vmem:[%s327 + $0x3f8] sm:$0xff]
      %v473 = vlaneseq
      %v474 = vand.u32 %v473, 127
      %v475 = vld [vmem:[%s309] sm:$0xff]
      %476 = vset.pattern.permute.xlu0 0
      %477 = vperm.xlu0 %476, %v475
      %v478 = vpop.permute.xlu0 %477
      %vm479 = vcmp.eq.s32.totalorder %v474, %v478
      %v480 = vsel %vm479, %v342, 0.0
      %481 = vadd.xlane.f32.xlu0 %v480
      %v482 = vpop.xlane.xlu0 %481
      %v483 = vsel %vm479, %v343, 0.0
      %484 = vadd.xlane.f32.xlu0 %v483
      %v485 = vpop.xlane.xlu0 %484
      %v486 = vsel %vm479, %v344, 0.0
      %487 = vadd.xlane.f32.xlu0 %v486
      %v488 = vpop.xlane.xlu0 %487
      %vm489 = vcmp.eq.s32.totalorder %v474, 0
      %v490 = vsel %vm489, 1, 0
      %vm491 = vcmp.eq.s32.totalorder %v490, 1
      %v492 = vsel %vm491, %v482, 0.0
      %v493 = vsel %vm491, %v485, 0.0
      %v494 = vsel %vm491, %v488, 0.0
      %v495 = vsub.f32 %v342, %v482
      %v496 = vsub.f32 %v343, %v485
      %v497 = vsub.f32 %v344, %v488
      %v498 = vmul.f32 %v495, %v495
      %v499 = vmul.f32 %v496, %v496
      %v500 = vadd.f32 %v498, %v499
      %v501 = vmul.f32 %v497, %v497
      %v502 = vadd.f32 %v500, %v501
      %v504 = vand.u32 %v502, 4294967168
      %v505 = vsub.s32 127, %v474
      %v506 = vor.u32 %v504, %v505
      %v507 = vand.u32 %v506, 65535
      %v508 = vshra.s32 %v506, 16
      %v509 = vcvt.s32.f32 %v507
      %v510 = vcvt.s32.f32 %v508
      %511 = vmax.xlane.f32.xlu0 %v510
      %v512 = vpop.xlane.xlu0 %511
      %vm513 = vcmp.eq.f32.partialorder %v510, %v512
      %v514 = vsel %vm513, %v509, -inf
      %515 = vmax.xlane.f32.xlu0 %v514
      %v516 = vpop.xlane.xlu0 %515
      %v517 = vcvt.f32.s32 %v516
      %v518 = vcvt.f32.s32 %v512
      %v519 = vshll.u32 %v518, 16
      %v520 = vadd.s32 %v519, %v517
      %v521 = vand.u32 %v520, 127
      %v522 = vsub.s32 127, %v521
      %vm523 = vcmp.eq.s32.totalorder %v474, %v522
      %v524 = vsel %vm523, %v342, 0.0
      %525 = vadd.xlane.f32.xlu0 %v524
      %v526 = vpop.xlane.xlu0 %525
      %v527 = vsel %vm523, %v343, 0.0
      %528 = vadd.xlane.f32.xlu0 %v527
      %v529 = vpop.xlane.xlu0 %528
      %v530 = vsel %vm523, %v344, 0.0
      %531 = vadd.xlane.f32.xlu0 %v530
      %v532 = vpop.xlane.xlu0 %531
      %vm533 = vcmp.eq.s32.totalorder %v474, 1
      %v534 = vsel %vm533, 1, 0
      %vm535 = vcmp.eq.s32.totalorder %v534, 1
      %v536 = vsel %vm535, %v526, %v492
      %v537 = vsel %vm535, %v529, %v493
      %v538 = vsel %vm535, %v532, %v494
      %v539 = vsub.f32 %v342, %v526
      %v540 = vsub.f32 %v343, %v529
      %v541 = vsub.f32 %v344, %v532
      %v542 = vmul.f32 %v539, %v539
      %v543 = vmul.f32 %v540, %v540
      %v544 = vadd.f32 %v542, %v543
      %v545 = vmul.f32 %v541, %v541
      %v546 = vadd.f32 %v544, %v545
      %v547 = vmin.f32 %v502, %v546
      %v549 = vand.u32 %v547, 4294967168
      %v550 = vor.u32 %v549, %v505
      %v551 = vand.u32 %v550, 65535
      %v552 = vshra.s32 %v550, 16
      %v553 = vcvt.s32.f32 %v551
      %v554 = vcvt.s32.f32 %v552
      %555 = vmax.xlane.f32.xlu0 %v554
      %v556 = vpop.xlane.xlu0 %555
      %vm557 = vcmp.eq.f32.partialorder %v554, %v556
      %v558 = vsel %vm557, %v553, -inf
      %559 = vmax.xlane.f32.xlu0 %v558
      %v560 = vpop.xlane.xlu0 %559
      %v561 = vcvt.f32.s32 %v560
      %v562 = vcvt.f32.s32 %v556
      %v563 = vshll.u32 %v562, 16
      %v564 = vadd.s32 %v563, %v561
      %v565 = vand.u32 %v564, 127
      %v566 = vsub.s32 127, %v565
      %vm567 = vcmp.eq.s32.totalorder %v474, %v566
      %v568 = vsel %vm567, %v342, 0.0
      %569 = vadd.xlane.f32.xlu0 %v568
      %v570 = vpop.xlane.xlu0 %569
      %v571 = vsel %vm567, %v343, 0.0
      %572 = vadd.xlane.f32.xlu0 %v571
      %v573 = vpop.xlane.xlu0 %572
      %v574 = vsel %vm567, %v344, 0.0
      %575 = vadd.xlane.f32.xlu0 %v574
      %v576 = vpop.xlane.xlu0 %575
      %vm577 = vcmp.eq.s32.totalorder %v474, 2
      %v578 = vsel %vm577, 1, 0
      %vm579 = vcmp.eq.s32.totalorder %v578, 1
      %v580 = vsel %vm579, %v570, %v536
      %v581 = vsel %vm579, %v573, %v537
      %v582 = vsel %vm579, %v576, %v538
      %v583 = vsub.f32 %v342, %v570
      %v584 = vsub.f32 %v343, %v573
      %v585 = vsub.f32 %v344, %v576
      %v586 = vmul.f32 %v583, %v583
      %v587 = vmul.f32 %v584, %v584
      %v588 = vadd.f32 %v586, %v587
      %v589 = vmul.f32 %v585, %v585
      %v590 = vadd.f32 %v588, %v589
      %v591 = vmin.f32 %v547, %v590
      %v593 = vand.u32 %v591, 4294967168
      %v594 = vor.u32 %v593, %v505
      %v595 = vand.u32 %v594, 65535
      %v596 = vshra.s32 %v594, 16
      %v597 = vcvt.s32.f32 %v595
      %v598 = vcvt.s32.f32 %v596
      %599 = vmax.xlane.f32.xlu0 %v598
      %v600 = vpop.xlane.xlu0 %599
      %vm601 = vcmp.eq.f32.partialorder %v598, %v600
      %v602 = vsel %vm601, %v597, -inf
      %603 = vmax.xlane.f32.xlu0 %v602
      %v604 = vpop.xlane.xlu0 %603
      %v605 = vcvt.f32.s32 %v604
      %v606 = vcvt.f32.s32 %v600
      %v607 = vshll.u32 %v606, 16
      %v608 = vadd.s32 %v607, %v605
      %v609 = vand.u32 %v608, 127
      %v610 = vsub.s32 127, %v609
      %vm611 = vcmp.eq.s32.totalorder %v474, %v610
      %v612 = vsel %vm611, %v342, 0.0
      %613 = vadd.xlane.f32.xlu0 %v612
      %v614 = vpop.xlane.xlu0 %613
      %v615 = vsel %vm611, %v343, 0.0
      %616 = vadd.xlane.f32.xlu0 %v615
      %v617 = vpop.xlane.xlu0 %616
      %v618 = vsel %vm611, %v344, 0.0
      %619 = vadd.xlane.f32.xlu0 %v618
      %v620 = vpop.xlane.xlu0 %619
      %vm621 = vcmp.eq.s32.totalorder %v474, 3
      %v622 = vsel %vm621, 1, 0
      %vm623 = vcmp.eq.s32.totalorder %v622, 1
      %v624 = vsel %vm623, %v614, %v580
      %v625 = vsel %vm623, %v617, %v581
      %v626 = vsel %vm623, %v620, %v582
      %v627 = vsub.f32 %v342, %v614
      %v628 = vsub.f32 %v343, %v617
      %v629 = vsub.f32 %v344, %v620
      %v630 = vmul.f32 %v627, %v627
      %v631 = vmul.f32 %v628, %v628
      %v632 = vadd.f32 %v630, %v631
      %v633 = vmul.f32 %v629, %v629
      %v634 = vadd.f32 %v632, %v633
      %v635 = vmin.f32 %v591, %v634
      %v637 = vand.u32 %v635, 4294967168
      %v638 = vor.u32 %v637, %v505
      %v639 = vand.u32 %v638, 65535
      %v640 = vshra.s32 %v638, 16
      %v641 = vcvt.s32.f32 %v639
      %v642 = vcvt.s32.f32 %v640
      %643 = vmax.xlane.f32.xlu0 %v642
      %v644 = vpop.xlane.xlu0 %643
      %vm645 = vcmp.eq.f32.partialorder %v642, %v644
      %v646 = vsel %vm645, %v641, -inf
      %647 = vmax.xlane.f32.xlu0 %v646
      %v648 = vpop.xlane.xlu0 %647
      %v649 = vcvt.f32.s32 %v648
      %v650 = vcvt.f32.s32 %v644
      %v651 = vshll.u32 %v650, 16
      %v652 = vadd.s32 %v651, %v649
      %v653 = vand.u32 %v652, 127
      %v654 = vsub.s32 127, %v653
      %vm655 = vcmp.eq.s32.totalorder %v474, %v654
      %v656 = vsel %vm655, %v342, 0.0
      %657 = vadd.xlane.f32.xlu0 %v656
      %v658 = vpop.xlane.xlu0 %657
      %v659 = vsel %vm655, %v343, 0.0
      %660 = vadd.xlane.f32.xlu0 %v659
      %v661 = vpop.xlane.xlu0 %660
      %v662 = vsel %vm655, %v344, 0.0
      %663 = vadd.xlane.f32.xlu0 %v662
      %v664 = vpop.xlane.xlu0 %663
      %vm665 = vcmp.eq.s32.totalorder %v474, 4
      %v666 = vsel %vm665, 1, 0
      %vm667 = vcmp.eq.s32.totalorder %v666, 1
      %v668 = vsel %vm667, %v658, %v624
      %v669 = vsel %vm667, %v661, %v625
      %v670 = vsel %vm667, %v664, %v626
      %v671 = vsub.f32 %v342, %v658
      %v672 = vsub.f32 %v343, %v661
      %v673 = vsub.f32 %v344, %v664
      %v674 = vmul.f32 %v671, %v671
      %v675 = vmul.f32 %v672, %v672
      %v676 = vadd.f32 %v674, %v675
      %v677 = vmul.f32 %v673, %v673
      %v678 = vadd.f32 %v676, %v677
      %v679 = vmin.f32 %v635, %v678
      %v681 = vand.u32 %v679, 4294967168
      %v682 = vor.u32 %v681, %v505
      %v683 = vand.u32 %v682, 65535
      %v684 = vshra.s32 %v682, 16
      %v685 = vcvt.s32.f32 %v683
      %v686 = vcvt.s32.f32 %v684
      %687 = vmax.xlane.f32.xlu0 %v686
      %v688 = vpop.xlane.xlu0 %687
      %vm689 = vcmp.eq.f32.partialorder %v686, %v688
      %v690 = vsel %vm689, %v685, -inf
      %691 = vmax.xlane.f32.xlu0 %v690
      %v692 = vpop.xlane.xlu0 %691
      %v693 = vcvt.f32.s32 %v692
      %v694 = vcvt.f32.s32 %v688
      %v695 = vshll.u32 %v694, 16
      %v696 = vadd.s32 %v695, %v693
      %v697 = vand.u32 %v696, 127
      %v698 = vsub.s32 127, %v697
      %vm699 = vcmp.eq.s32.totalorder %v474, %v698
      %v700 = vsel %vm699, %v342, 0.0
      %701 = vadd.xlane.f32.xlu0 %v700
      %v702 = vpop.xlane.xlu0 %701
      %v703 = vsel %vm699, %v343, 0.0
      %704 = vadd.xlane.f32.xlu0 %v703
      %v705 = vpop.xlane.xlu0 %704
      %v706 = vsel %vm699, %v344, 0.0
      %707 = vadd.xlane.f32.xlu0 %v706
      %v708 = vpop.xlane.xlu0 %707
      %vm709 = vcmp.eq.s32.totalorder %v474, 5
      %v710 = vsel %vm709, 1, 0
      %vm711 = vcmp.eq.s32.totalorder %v710, 1
      %v712 = vsel %vm711, %v702, %v668
      %v713 = vsel %vm711, %v705, %v669
      %v714 = vsel %vm711, %v708, %v670
      %v715 = vsub.f32 %v342, %v702
      %v716 = vsub.f32 %v343, %v705
      %v717 = vsub.f32 %v344, %v708
      %v718 = vmul.f32 %v715, %v715
      %v719 = vmul.f32 %v716, %v716
      %v720 = vadd.f32 %v718, %v719
      %v721 = vmul.f32 %v717, %v717
      %v722 = vadd.f32 %v720, %v721
      %v723 = vmin.f32 %v679, %v722
      %v725 = vand.u32 %v723, 4294967168
      %v726 = vor.u32 %v725, %v505
      %v727 = vand.u32 %v726, 65535
      %v728 = vshra.s32 %v726, 16
      %v729 = vcvt.s32.f32 %v727
      %v730 = vcvt.s32.f32 %v728
      %731 = vmax.xlane.f32.xlu0 %v730
      %v732 = vpop.xlane.xlu0 %731
      %vm733 = vcmp.eq.f32.partialorder %v730, %v732
      %v734 = vsel %vm733, %v729, -inf
      %735 = vmax.xlane.f32.xlu0 %v734
      %v736 = vpop.xlane.xlu0 %735
      %v737 = vcvt.f32.s32 %v736
      %v738 = vcvt.f32.s32 %v732
      %v739 = vshll.u32 %v738, 16
      %v740 = vadd.s32 %v739, %v737
      %v741 = vand.u32 %v740, 127
      %v742 = vsub.s32 127, %v741
      %vm743 = vcmp.eq.s32.totalorder %v474, %v742
      %v744 = vsel %vm743, %v342, 0.0
      %745 = vadd.xlane.f32.xlu0 %v744
      %v746 = vpop.xlane.xlu0 %745
      %v747 = vsel %vm743, %v343, 0.0
      %748 = vadd.xlane.f32.xlu0 %v747
      %v749 = vpop.xlane.xlu0 %748
      %v750 = vsel %vm743, %v344, 0.0
      %751 = vadd.xlane.f32.xlu0 %v750
      %v752 = vpop.xlane.xlu0 %751
      %vm753 = vcmp.eq.s32.totalorder %v474, 6
      %v754 = vsel %vm753, 1, 0
      %vm755 = vcmp.eq.s32.totalorder %v754, 1
      %v756 = vsel %vm755, %v746, %v712
      %v757 = vsel %vm755, %v749, %v713
      %v758 = vsel %vm755, %v752, %v714
      %v759 = vsub.f32 %v342, %v746
      %v760 = vsub.f32 %v343, %v749
      %v761 = vsub.f32 %v344, %v752
      %v762 = vmul.f32 %v759, %v759
      %v763 = vmul.f32 %v760, %v760
      %v764 = vadd.f32 %v762, %v763
      %v765 = vmul.f32 %v761, %v761
      %v766 = vadd.f32 %v764, %v765
      %v767 = vmin.f32 %v723, %v766
      %v769 = vand.u32 %v767, 4294967168
      %v770 = vor.u32 %v769, %v505
      %v771 = vand.u32 %v770, 65535
      %v772 = vshra.s32 %v770, 16
      %v773 = vcvt.s32.f32 %v771
      %v774 = vcvt.s32.f32 %v772
      %775 = vmax.xlane.f32.xlu0 %v774
      %v776 = vpop.xlane.xlu0 %775
      %vm777 = vcmp.eq.f32.partialorder %v774, %v776
      %v778 = vsel %vm777, %v773, -inf
      %779 = vmax.xlane.f32.xlu0 %v778
      %v780 = vpop.xlane.xlu0 %779
      %v781 = vcvt.f32.s32 %v780
      %v782 = vcvt.f32.s32 %v776
      %v783 = vshll.u32 %v782, 16
      %v784 = vadd.s32 %v783, %v781
      %v785 = vand.u32 %v784, 127
      %v786 = vsub.s32 127, %v785
      %vm787 = vcmp.eq.s32.totalorder %v474, %v786
      %v788 = vsel %vm787, %v342, 0.0
      %789 = vadd.xlane.f32.xlu0 %v788
      %v790 = vpop.xlane.xlu0 %789
      %v791 = vsel %vm787, %v343, 0.0
      %792 = vadd.xlane.f32.xlu0 %v791
      %v793 = vpop.xlane.xlu0 %792
      %v794 = vsel %vm787, %v344, 0.0
      %795 = vadd.xlane.f32.xlu0 %v794
      %v796 = vpop.xlane.xlu0 %795
      %vm797 = vcmp.eq.s32.totalorder %v474, 7
      %v798 = vsel %vm797, 1, 0
      %vm799 = vcmp.eq.s32.totalorder %v798, 1
      %v800 = vsel %vm799, %v790, %v756
      %v801 = vsel %vm799, %v793, %v757
      %v802 = vsel %vm799, %v796, %v758
      %v804 = vcombine.high %v800, %v800
      %v806 = vunpack.c.l.s4 1966171168
      %v807 = vunpack.c.0.s8 %v806
      %v808 = vlaneseq
      %v809 = vshrl.u32 %v808, 7
      %v810 = vsub.s32 %v807, %v809
      %v811 = vrot.slane %v800, %v810
      %v813 = vunpack.c.l.s4 1966171168
      %v814 = vunpack.c.0.s8 %v813
      %v815 = vlaneseq
      %v816 = vshrl.u32 %v815, 7
      %v817 = vsub.s32 %v814, %v816
      %v818 = vrot.slane %v804, %v817
      %v819 = vcombine.high %v811, %v811
      %v820 = vcombine.high %v818, %v818
      %v822 = vunpack.c.l.s4 1966171168
      %v823 = vunpack.c.0.s8 %v822
      %v824 = vlaneseq
      %v825 = vshrl.u32 %v824, 7
      %v826 = vsub.s32 %v823, %v825
      %v827 = vrot.slane %v811, %v826
      %v829 = vunpack.c.l.s4 1966171168
      %v830 = vunpack.c.0.s8 %v829
      %v831 = vlaneseq
      %v832 = vshrl.u32 %v831, 7
      %v833 = vsub.s32 %v830, %v832
      %v834 = vrot.slane %v818, %v833
      %v836 = vunpack.c.l.s4 1966171168
      %v837 = vunpack.c.0.s8 %v836
      %v838 = vlaneseq
      %v839 = vshrl.u32 %v838, 7
      %v840 = vsub.s32 %v837, %v839
      %v841 = vrot.slane %v819, %v840
      %v843 = vunpack.c.l.s4 1966171168
      %v844 = vunpack.c.0.s8 %v843
      %v845 = vlaneseq
      %v846 = vshrl.u32 %v845, 7
      %v847 = vsub.s32 %v844, %v846
      %v848 = vrot.slane %v820, %v847
      %v849 = vcombine.high %v827, %v827
      %v850 = vcombine.high %v834, %v834
      %v851 = vcombine.high %v841, %v841
      %v852 = vcombine.high %v848, %v848
      %v862 = vcombine.high %v801, %v801
      %v864 = vunpack.c.l.s4 1966171168
      %v865 = vunpack.c.0.s8 %v864
      %v866 = vlaneseq
      %v867 = vshrl.u32 %v866, 7
      %v868 = vsub.s32 %v865, %v867
      %v869 = vrot.slane %v801, %v868
      %v871 = vunpack.c.l.s4 1966171168
      %v872 = vunpack.c.0.s8 %v871
      %v873 = vlaneseq
      %v874 = vshrl.u32 %v873, 7
      %v875 = vsub.s32 %v872, %v874
      %v876 = vrot.slane %v862, %v875
      %v877 = vcombine.high %v869, %v869
      %v878 = vcombine.high %v876, %v876
      %v880 = vunpack.c.l.s4 1966171168
      %v881 = vunpack.c.0.s8 %v880
      %v882 = vlaneseq
      %v883 = vshrl.u32 %v882, 7
      %v884 = vsub.s32 %v881, %v883
      %v885 = vrot.slane %v869, %v884
      %v887 = vunpack.c.l.s4 1966171168
      %v888 = vunpack.c.0.s8 %v887
      %v889 = vlaneseq
      %v890 = vshrl.u32 %v889, 7
      %v891 = vsub.s32 %v888, %v890
      %v892 = vrot.slane %v876, %v891
      %v894 = vunpack.c.l.s4 1966171168
      %v895 = vunpack.c.0.s8 %v894
      %v896 = vlaneseq
      %v897 = vshrl.u32 %v896, 7
      %v898 = vsub.s32 %v895, %v897
      %v899 = vrot.slane %v877, %v898
      %v901 = vunpack.c.l.s4 1966171168
      %v902 = vunpack.c.0.s8 %v901
      %v903 = vlaneseq
      %v904 = vshrl.u32 %v903, 7
      %v905 = vsub.s32 %v902, %v904
      %v906 = vrot.slane %v878, %v905
      %v907 = vcombine.high %v885, %v885
      %v908 = vcombine.high %v892, %v892
      %v909 = vcombine.high %v899, %v899
      %v910 = vcombine.high %v906, %v906
      %v912 = vcombine.high %v802, %v802
      %v914 = vunpack.c.l.s4 1966171168
      %v915 = vunpack.c.0.s8 %v914
      %v916 = vlaneseq
      %v917 = vshrl.u32 %v916, 7
      %v918 = vsub.s32 %v915, %v917
      %v919 = vrot.slane %v802, %v918
      %v921 = vunpack.c.l.s4 1966171168
      %v922 = vunpack.c.0.s8 %v921
      %v923 = vlaneseq
      %v924 = vshrl.u32 %v923, 7
      %v925 = vsub.s32 %v922, %v924
      %v926 = vrot.slane %v912, %v925
      %v927 = vcombine.high %v919, %v919
      %v928 = vcombine.high %v926, %v926
      %v930 = vunpack.c.l.s4 1966171168
      %v931 = vunpack.c.0.s8 %v930
      %v932 = vlaneseq
      %v933 = vshrl.u32 %v932, 7
      %v934 = vsub.s32 %v931, %v933
      %v935 = vrot.slane %v919, %v934
      %v937 = vunpack.c.l.s4 1966171168
      %v938 = vunpack.c.0.s8 %v937
      %v939 = vlaneseq
      %v940 = vshrl.u32 %v939, 7
      %v941 = vsub.s32 %v938, %v940
      %v942 = vrot.slane %v926, %v941
      %v944 = vunpack.c.l.s4 1966171168
      %v945 = vunpack.c.0.s8 %v944
      %v946 = vlaneseq
      %v947 = vshrl.u32 %v946, 7
      %v948 = vsub.s32 %v945, %v947
      %v949 = vrot.slane %v927, %v948
      %v951 = vunpack.c.l.s4 1966171168
      %v952 = vunpack.c.0.s8 %v951
      %v953 = vlaneseq
      %v954 = vshrl.u32 %v953, 7
      %v955 = vsub.s32 %v952, %v954
      %v956 = vrot.slane %v928, %v955
      %v957 = vcombine.high %v935, %v935
      %v958 = vcombine.high %v942, %v942
      %v959 = vcombine.high %v949, %v949
      %v960 = vcombine.high %v956, %v956
      %v961 = vlaneseq
      %v962 = vshrl.u32 %v961, 7
      %v963 = vsub.s32 0, %v962
      %v964 = vrot.slane %v885, %v963
      %v965 = vlaneseq
      %v966 = vshrl.u32 %v965, 7
      %v967 = vsub.s32 0, %v966
      %v968 = vrot.slane %v899, %v967
      %v969 = vlaneseq
      %v970 = vshrl.u32 %v969, 7
      %v971 = vsub.s32 0, %v970
      %v972 = vrot.slane %v907, %v971
      %v973 = vlaneseq
      %v974 = vshrl.u32 %v973, 7
      %v975 = vsub.s32 0, %v974
      %v976 = vrot.slane %v909, %v975
      %v977 = vlaneseq
      %v978 = vshrl.u32 %v977, 7
      %v979 = vsub.s32 0, %v978
      %v980 = vrot.slane %v892, %v979
      %v981 = vlaneseq
      %v982 = vshrl.u32 %v981, 7
      %v983 = vsub.s32 0, %v982
      %v984 = vrot.slane %v906, %v983
      %v985 = vlaneseq
      %v986 = vshrl.u32 %v985, 7
      %v987 = vsub.s32 0, %v986
      %v988 = vrot.slane %v908, %v987
      %v989 = vlaneseq
      %v990 = vshrl.u32 %v989, 7
      %v991 = vsub.s32 0, %v990
      %v992 = vrot.slane %v910, %v991
      %v1001 = vlaneseq
      %v1002 = vshrl.u32 %v1001, 7
      %v1003 = vsub.s32 0, %v1002
      %v1004 = vrot.slane %v935, %v1003
      %v1005 = vlaneseq
      %v1006 = vshrl.u32 %v1005, 7
      %v1007 = vsub.s32 0, %v1006
      %v1008 = vrot.slane %v949, %v1007
      %v1009 = vlaneseq
      %v1010 = vshrl.u32 %v1009, 7
      %v1011 = vsub.s32 0, %v1010
      %v1012 = vrot.slane %v957, %v1011
      %v1013 = vlaneseq
      %v1014 = vshrl.u32 %v1013, 7
      %v1015 = vsub.s32 0, %v1014
      %v1016 = vrot.slane %v959, %v1015
      %v1017 = vlaneseq
      %v1018 = vshrl.u32 %v1017, 7
      %v1019 = vsub.s32 0, %v1018
      %v1020 = vrot.slane %v942, %v1019
      %v1021 = vlaneseq
      %v1022 = vshrl.u32 %v1021, 7
      %v1023 = vsub.s32 0, %v1022
      %v1024 = vrot.slane %v956, %v1023
      %v1025 = vlaneseq
      %v1026 = vshrl.u32 %v1025, 7
      %v1027 = vsub.s32 0, %v1026
      %v1028 = vrot.slane %v958, %v1027
      %v1029 = vlaneseq
      %v1030 = vshrl.u32 %v1029, 7
      %v1031 = vsub.s32 0, %v1030
      %v1032 = vrot.slane %v960, %v1031
      %vm1041 = vcmask 1040384
      %v1042 = vsel %vm1041, %v827, %v964
      %v1043 = vsel %vm1041, %v841, %v968
      %v1044 = vsel %vm1041, %v849, %v972
      %v1045 = vsel %vm1041, %v851, %v976
      %v1046 = vsel %vm1041, %v834, %v980
      %v1047 = vsel %vm1041, %v848, %v984
      %v1048 = vsel %vm1041, %v850, %v988
      %v1049 = vsel %vm1041, %v852, %v992
      %vm1050 = vcmask 1041408
      %v1051 = vsel %vm1050, %v1042, %v1004
      %v1052 = vsel %vm1050, %v1043, %v1008
      %v1053 = vsel %vm1050, %v1044, %v1012
      %v1054 = vsel %vm1050, %v1045, %v1016
      %v1055 = vsel %vm1050, %v1046, %v1020
      %v1056 = vsel %vm1050, %v1047, %v1024
      %v1057 = vsel %vm1050, %v1048, %v1028
      %v1058 = vsel %vm1050, %v1049, %v1032
      %vm1059 = vcmask 59392
      %1060 = vst.msk [vmem:[%s340] sm:$0x7] %vm1059, %v1051
      %1061 = vst.msk [vmem:[%s340 + $0x4] sm:$0x7] %vm1059, %v1052
      %1062 = vst.msk [vmem:[%s340 + $0x8] sm:$0x7] %vm1059, %v1053
      %1063 = vst.msk [vmem:[%s340 + $0xc] sm:$0x7] %vm1059, %v1054
      %1064 = vst.msk [vmem:[%s340 + $0x10] sm:$0x7] %vm1059, %v1055
      %1065 = vst.msk [vmem:[%s340 + $0x14] sm:$0x7] %vm1059, %v1056
      %1066 = vst.msk [vmem:[%s340 + $0x18] sm:$0x7] %vm1059, %v1057
      %1067 = vst.msk [vmem:[%s340 + $0x1c] sm:$0x7] %vm1059, %v1058
      %v1069 = vcombine.high %v342, %v342
      %v1071 = vunpack.c.l.s4 1966171168
      %v1072 = vunpack.c.0.s8 %v1071
      %v1073 = vlaneseq
      %v1074 = vshrl.u32 %v1073, 7
      %v1075 = vsub.s32 %v1072, %v1074
      %v1076 = vrot.slane %v342, %v1075
      %v1078 = vunpack.c.l.s4 1966171168
      %v1079 = vunpack.c.0.s8 %v1078
      %v1080 = vlaneseq
      %v1081 = vshrl.u32 %v1080, 7
      %v1082 = vsub.s32 %v1079, %v1081
      %v1083 = vrot.slane %v1069, %v1082
      %v1084 = vcombine.high %v1076, %v1076
      %v1085 = vcombine.high %v1083, %v1083
      %v1087 = vunpack.c.l.s4 1966171168
      %v1088 = vunpack.c.0.s8 %v1087
      %v1089 = vlaneseq
      %v1090 = vshrl.u32 %v1089, 7
      %v1091 = vsub.s32 %v1088, %v1090
      %v1092 = vrot.slane %v1076, %v1091
      %v1094 = vunpack.c.l.s4 1966171168
      %v1095 = vunpack.c.0.s8 %v1094
      %v1096 = vlaneseq
      %v1097 = vshrl.u32 %v1096, 7
      %v1098 = vsub.s32 %v1095, %v1097
      %v1099 = vrot.slane %v1083, %v1098
      %v1101 = vunpack.c.l.s4 1966171168
      %v1102 = vunpack.c.0.s8 %v1101
      %v1103 = vlaneseq
      %v1104 = vshrl.u32 %v1103, 7
      %v1105 = vsub.s32 %v1102, %v1104
      %v1106 = vrot.slane %v1084, %v1105
      %v1108 = vunpack.c.l.s4 1966171168
      %v1109 = vunpack.c.0.s8 %v1108
      %v1110 = vlaneseq
      %v1111 = vshrl.u32 %v1110, 7
      %v1112 = vsub.s32 %v1109, %v1111
      %v1113 = vrot.slane %v1085, %v1112
      %v1114 = vcombine.high %v1092, %v1092
      %v1115 = vcombine.high %v1099, %v1099
      %v1116 = vcombine.high %v1106, %v1106
      %v1117 = vcombine.high %v1113, %v1113
      %v1118 = vlaneseq
      %v1119 = vshrl.u32 %v1118, 7
      %v1120 = vsub.s32 0, %v1119
      %v1121 = vrot.slane %v800, %v1120
      %1123 = vbcast.lane.b32.xlu0 %v1121, 256
      %v1124 = vpop.permute.xlu0 %1123
      %v1125 = vlaneseq
      %v1126 = vshrl.u32 %v1125, 7
      %v1127 = vsub.s32 1, %v1126
      %v1128 = vrot.slane %v800, %v1127
      %1130 = vbcast.lane.b32.xlu0 %v1128, 256
      %v1131 = vpop.permute.xlu0 %1130
      %v1132 = vlaneseq
      %v1133 = vshrl.u32 %v1132, 7
      %v1134 = vsub.s32 2, %v1133
      %v1135 = vrot.slane %v800, %v1134
      %1137 = vbcast.lane.b32.xlu0 %v1135, 256
      %v1138 = vpop.permute.xlu0 %1137
      %v1139 = vlaneseq
      %v1140 = vshrl.u32 %v1139, 7
      %v1141 = vsub.s32 3, %v1140
      %v1142 = vrot.slane %v800, %v1141
      %1144 = vbcast.lane.b32.xlu0 %v1142, 256
      %v1145 = vpop.permute.xlu0 %1144
      %v1146 = vlaneseq
      %v1147 = vshrl.u32 %v1146, 7
      %v1148 = vsub.s32 4, %v1147
      %v1149 = vrot.slane %v800, %v1148
      %1151 = vbcast.lane.b32.xlu0 %v1149, 256
      %v1152 = vpop.permute.xlu0 %1151
      %v1153 = vlaneseq
      %v1154 = vshrl.u32 %v1153, 7
      %v1155 = vsub.s32 5, %v1154
      %v1156 = vrot.slane %v800, %v1155
      %1158 = vbcast.lane.b32.xlu0 %v1156, 256
      %v1159 = vpop.permute.xlu0 %1158
      %v1160 = vlaneseq
      %v1161 = vshrl.u32 %v1160, 7
      %v1162 = vsub.s32 6, %v1161
      %v1163 = vrot.slane %v800, %v1162
      %1165 = vbcast.lane.b32.xlu0 %v1163, 256
      %v1166 = vpop.permute.xlu0 %1165
      %v1167 = vlaneseq
      %v1168 = vshrl.u32 %v1167, 7
      %v1169 = vsub.s32 7, %v1168
      %v1170 = vrot.slane %v800, %v1169
      %1172 = vbcast.lane.b32.xlu0 %v1170, 256
      %v1173 = vpop.permute.xlu0 %1172
      %v1174 = vlaneseq
      %v1175 = vshrl.u32 %v1174, 7
      %v1176 = vsub.s32 0, %v1175
      %v1177 = vrot.slane %v1092, %v1176
      %v1178 = vlaneseq
      %v1179 = vshrl.u32 %v1178, 7
      %v1180 = vsub.s32 0, %v1179
      %v1181 = vrot.slane %v1106, %v1180
      %v1182 = vlaneseq
      %v1183 = vshrl.u32 %v1182, 7
      %v1184 = vsub.s32 0, %v1183
      %v1185 = vrot.slane %v1114, %v1184
      %v1186 = vlaneseq
      %v1187 = vshrl.u32 %v1186, 7
      %v1188 = vsub.s32 0, %v1187
      %v1189 = vrot.slane %v1116, %v1188
      %v1190 = vlaneseq
      %v1191 = vshrl.u32 %v1190, 7
      %v1192 = vsub.s32 0, %v1191
      %v1193 = vrot.slane %v1099, %v1192
      %v1194 = vlaneseq
      %v1195 = vshrl.u32 %v1194, 7
      %v1196 = vsub.s32 0, %v1195
      %v1197 = vrot.slane %v1113, %v1196
      %v1198 = vlaneseq
      %v1199 = vshrl.u32 %v1198, 7
      %v1200 = vsub.s32 0, %v1199
      %v1201 = vrot.slane %v1115, %v1200
      %v1202 = vlaneseq
      %v1203 = vshrl.u32 %v1202, 7
      %v1204 = vsub.s32 0, %v1203
      %v1205 = vrot.slane %v1117, %v1204
      %v1214 = vsub.f32 %v1177, %v1124
      %v1215 = vsub.f32 %v1181, %v1131
      %v1216 = vsub.f32 %v1185, %v1138
      %v1217 = vsub.f32 %v1189, %v1145
      %v1218 = vsub.f32 %v1193, %v1152
      %v1219 = vsub.f32 %v1197, %v1159
      %v1220 = vsub.f32 %v1201, %v1166
      %v1221 = vsub.f32 %v1205, %v1173
      %v1223 = vcombine.high %v343, %v343
      %v1225 = vunpack.c.l.s4 1966171168
      %v1226 = vunpack.c.0.s8 %v1225
      %v1227 = vlaneseq
      %v1228 = vshrl.u32 %v1227, 7
      %v1229 = vsub.s32 %v1226, %v1228
      %v1230 = vrot.slane %v343, %v1229
      %v1232 = vunpack.c.l.s4 1966171168
      %v1233 = vunpack.c.0.s8 %v1232
      %v1234 = vlaneseq
      %v1235 = vshrl.u32 %v1234, 7
      %v1236 = vsub.s32 %v1233, %v1235
      %v1237 = vrot.slane %v1223, %v1236
      %v1238 = vcombine.high %v1230, %v1230
      %v1239 = vcombine.high %v1237, %v1237
      %v1241 = vunpack.c.l.s4 1966171168
      %v1242 = vunpack.c.0.s8 %v1241
      %v1243 = vlaneseq
      %v1244 = vshrl.u32 %v1243, 7
      %v1245 = vsub.s32 %v1242, %v1244
      %v1246 = vrot.slane %v1230, %v1245
      %v1248 = vunpack.c.l.s4 1966171168
      %v1249 = vunpack.c.0.s8 %v1248
      %v1250 = vlaneseq
      %v1251 = vshrl.u32 %v1250, 7
      %v1252 = vsub.s32 %v1249, %v1251
      %v1253 = vrot.slane %v1237, %v1252
      %v1255 = vunpack.c.l.s4 1966171168
      %v1256 = vunpack.c.0.s8 %v1255
      %v1257 = vlaneseq
      %v1258 = vshrl.u32 %v1257, 7
      %v1259 = vsub.s32 %v1256, %v1258
      %v1260 = vrot.slane %v1238, %v1259
      %v1262 = vunpack.c.l.s4 1966171168
      %v1263 = vunpack.c.0.s8 %v1262
      %v1264 = vlaneseq
      %v1265 = vshrl.u32 %v1264, 7
      %v1266 = vsub.s32 %v1263, %v1265
      %v1267 = vrot.slane %v1239, %v1266
      %v1268 = vcombine.high %v1246, %v1246
      %v1269 = vcombine.high %v1253, %v1253
      %v1270 = vcombine.high %v1260, %v1260
      %v1271 = vcombine.high %v1267, %v1267
      %v1272 = vlaneseq
      %v1273 = vshrl.u32 %v1272, 7
      %v1274 = vsub.s32 0, %v1273
      %v1275 = vrot.slane %v801, %v1274
      %1277 = vbcast.lane.b32.xlu0 %v1275, 256
      %v1278 = vpop.permute.xlu0 %1277
      %v1279 = vlaneseq
      %v1280 = vshrl.u32 %v1279, 7
      %v1281 = vsub.s32 1, %v1280
      %v1282 = vrot.slane %v801, %v1281
      %1284 = vbcast.lane.b32.xlu0 %v1282, 256
      %v1285 = vpop.permute.xlu0 %1284
      %v1286 = vlaneseq
      %v1287 = vshrl.u32 %v1286, 7
      %v1288 = vsub.s32 2, %v1287
      %v1289 = vrot.slane %v801, %v1288
      %1291 = vbcast.lane.b32.xlu0 %v1289, 256
      %v1292 = vpop.permute.xlu0 %1291
      %v1293 = vlaneseq
      %v1294 = vshrl.u32 %v1293, 7
      %v1295 = vsub.s32 3, %v1294
      %v1296 = vrot.slane %v801, %v1295
      %1298 = vbcast.lane.b32.xlu0 %v1296, 256
      %v1299 = vpop.permute.xlu0 %1298
      %v1300 = vlaneseq
      %v1301 = vshrl.u32 %v1300, 7
      %v1302 = vsub.s32 4, %v1301
      %v1303 = vrot.slane %v801, %v1302
      %1305 = vbcast.lane.b32.xlu0 %v1303, 256
      %v1306 = vpop.permute.xlu0 %1305
      %v1307 = vlaneseq
      %v1308 = vshrl.u32 %v1307, 7
      %v1309 = vsub.s32 5, %v1308
      %v1310 = vrot.slane %v801, %v1309
      %1312 = vbcast.lane.b32.xlu0 %v1310, 256
      %v1313 = vpop.permute.xlu0 %1312
      %v1314 = vlaneseq
      %v1315 = vshrl.u32 %v1314, 7
      %v1316 = vsub.s32 6, %v1315
      %v1317 = vrot.slane %v801, %v1316
      %1319 = vbcast.lane.b32.xlu0 %v1317, 256
      %v1320 = vpop.permute.xlu0 %1319
      %v1321 = vlaneseq
      %v1322 = vshrl.u32 %v1321, 7
      %v1323 = vsub.s32 7, %v1322
      %v1324 = vrot.slane %v801, %v1323
      %1326 = vbcast.lane.b32.xlu0 %v1324, 256
      %v1327 = vpop.permute.xlu0 %1326
      %v1328 = vlaneseq
      %v1329 = vshrl.u32 %v1328, 7
      %v1330 = vsub.s32 0, %v1329
      %v1331 = vrot.slane %v1246, %v1330
      %v1332 = vlaneseq
      %v1333 = vshrl.u32 %v1332, 7
      %v1334 = vsub.s32 0, %v1333
      %v1335 = vrot.slane %v1260, %v1334
      %v1336 = vlaneseq
      %v1337 = vshrl.u32 %v1336, 7
      %v1338 = vsub.s32 0, %v1337
      %v1339 = vrot.slane %v1268, %v1338
      %v1340 = vlaneseq
      %v1341 = vshrl.u32 %v1340, 7
      %v1342 = vsub.s32 0, %v1341
      %v1343 = vrot.slane %v1270, %v1342
      %v1344 = vlaneseq
      %v1345 = vshrl.u32 %v1344, 7
      %v1346 = vsub.s32 0, %v1345
      %v1347 = vrot.slane %v1253, %v1346
      %v1348 = vlaneseq
      %v1349 = vshrl.u32 %v1348, 7
      %v1350 = vsub.s32 0, %v1349
      %v1351 = vrot.slane %v1267, %v1350
      %v1352 = vlaneseq
      %v1353 = vshrl.u32 %v1352, 7
      %v1354 = vsub.s32 0, %v1353
      %v1355 = vrot.slane %v1269, %v1354
      %v1356 = vlaneseq
      %v1357 = vshrl.u32 %v1356, 7
      %v1358 = vsub.s32 0, %v1357
      %v1359 = vrot.slane %v1271, %v1358
      %v1368 = vsub.f32 %v1331, %v1278
      %v1369 = vsub.f32 %v1335, %v1285
      %v1370 = vsub.f32 %v1339, %v1292
      %v1371 = vsub.f32 %v1343, %v1299
      %v1372 = vsub.f32 %v1347, %v1306
      %v1373 = vsub.f32 %v1351, %v1313
      %v1374 = vsub.f32 %v1355, %v1320
      %v1375 = vsub.f32 %v1359, %v1327
      %v1377 = vcombine.high %v344, %v344
      %v1379 = vunpack.c.l.s4 1966171168
      %v1380 = vunpack.c.0.s8 %v1379
      %v1381 = vlaneseq
      %v1382 = vshrl.u32 %v1381, 7
      %v1383 = vsub.s32 %v1380, %v1382
      %v1384 = vrot.slane %v344, %v1383
      %v1386 = vunpack.c.l.s4 1966171168
      %v1387 = vunpack.c.0.s8 %v1386
      %v1388 = vlaneseq
      %v1389 = vshrl.u32 %v1388, 7
      %v1390 = vsub.s32 %v1387, %v1389
      %v1391 = vrot.slane %v1377, %v1390
      %v1392 = vcombine.high %v1384, %v1384
      %v1393 = vcombine.high %v1391, %v1391
      %v1395 = vunpack.c.l.s4 1966171168
      %v1396 = vunpack.c.0.s8 %v1395
      %v1397 = vlaneseq
      %v1398 = vshrl.u32 %v1397, 7
      %v1399 = vsub.s32 %v1396, %v1398
      %v1400 = vrot.slane %v1384, %v1399
      %v1402 = vunpack.c.l.s4 1966171168
      %v1403 = vunpack.c.0.s8 %v1402
      %v1404 = vlaneseq
      %v1405 = vshrl.u32 %v1404, 7
      %v1406 = vsub.s32 %v1403, %v1405
      %v1407 = vrot.slane %v1391, %v1406
      %v1409 = vunpack.c.l.s4 1966171168
      %v1410 = vunpack.c.0.s8 %v1409
      %v1411 = vlaneseq
      %v1412 = vshrl.u32 %v1411, 7
      %v1413 = vsub.s32 %v1410, %v1412
      %v1414 = vrot.slane %v1392, %v1413
      %v1416 = vunpack.c.l.s4 1966171168
      %v1417 = vunpack.c.0.s8 %v1416
      %v1418 = vlaneseq
      %v1419 = vshrl.u32 %v1418, 7
      %v1420 = vsub.s32 %v1417, %v1419
      %v1421 = vrot.slane %v1393, %v1420
      %v1422 = vcombine.high %v1400, %v1400
      %v1423 = vcombine.high %v1407, %v1407
      %v1424 = vcombine.high %v1414, %v1414
      %v1425 = vcombine.high %v1421, %v1421
      %v1426 = vlaneseq
      %v1427 = vshrl.u32 %v1426, 7
      %v1428 = vsub.s32 0, %v1427
      %v1429 = vrot.slane %v802, %v1428
      %1431 = vbcast.lane.b32.xlu0 %v1429, 256
      %v1432 = vpop.permute.xlu0 %1431
      %v1433 = vlaneseq
      %v1434 = vshrl.u32 %v1433, 7
      %v1435 = vsub.s32 1, %v1434
      %v1436 = vrot.slane %v802, %v1435
      %1438 = vbcast.lane.b32.xlu0 %v1436, 256
      %v1439 = vpop.permute.xlu0 %1438
      %v1440 = vlaneseq
      %v1441 = vshrl.u32 %v1440, 7
      %v1442 = vsub.s32 2, %v1441
      %v1443 = vrot.slane %v802, %v1442
      %1445 = vbcast.lane.b32.xlu0 %v1443, 256
      %v1446 = vpop.permute.xlu0 %1445
      %v1447 = vlaneseq
      %v1448 = vshrl.u32 %v1447, 7
      %v1449 = vsub.s32 3, %v1448
      %v1450 = vrot.slane %v802, %v1449
      %1452 = vbcast.lane.b32.xlu0 %v1450, 256
      %v1453 = vpop.permute.xlu0 %1452
      %v1454 = vlaneseq
      %v1455 = vshrl.u32 %v1454, 7
      %v1456 = vsub.s32 4, %v1455
      %v1457 = vrot.slane %v802, %v1456
      %1459 = vbcast.lane.b32.xlu0 %v1457, 256
      %v1460 = vpop.permute.xlu0 %1459
      %v1461 = vlaneseq
      %v1462 = vshrl.u32 %v1461, 7
      %v1463 = vsub.s32 5, %v1462
      %v1464 = vrot.slane %v802, %v1463
      %1466 = vbcast.lane.b32.xlu0 %v1464, 256
      %v1467 = vpop.permute.xlu0 %1466
      %v1468 = vlaneseq
      %v1469 = vshrl.u32 %v1468, 7
      %v1470 = vsub.s32 6, %v1469
      %v1471 = vrot.slane %v802, %v1470
      %1473 = vbcast.lane.b32.xlu0 %v1471, 256
      %v1474 = vpop.permute.xlu0 %1473
      %v1475 = vlaneseq
      %v1476 = vshrl.u32 %v1475, 7
      %v1477 = vsub.s32 7, %v1476
      %v1478 = vrot.slane %v802, %v1477
      %1480 = vbcast.lane.b32.xlu0 %v1478, 256
      %v1481 = vpop.permute.xlu0 %1480
      %v1482 = vlaneseq
      %v1483 = vshrl.u32 %v1482, 7
      %v1484 = vsub.s32 0, %v1483
      %v1485 = vrot.slane %v1400, %v1484
      %v1486 = vlaneseq
      %v1487 = vshrl.u32 %v1486, 7
      %v1488 = vsub.s32 0, %v1487
      %v1489 = vrot.slane %v1414, %v1488
      %v1490 = vlaneseq
      %v1491 = vshrl.u32 %v1490, 7
      %v1492 = vsub.s32 0, %v1491
      %v1493 = vrot.slane %v1422, %v1492
      %v1494 = vlaneseq
      %v1495 = vshrl.u32 %v1494, 7
      %v1496 = vsub.s32 0, %v1495
      %v1497 = vrot.slane %v1424, %v1496
      %v1498 = vlaneseq
      %v1499 = vshrl.u32 %v1498, 7
      %v1500 = vsub.s32 0, %v1499
      %v1501 = vrot.slane %v1407, %v1500
      %v1502 = vlaneseq
      %v1503 = vshrl.u32 %v1502, 7
      %v1504 = vsub.s32 0, %v1503
      %v1505 = vrot.slane %v1421, %v1504
      %v1506 = vlaneseq
      %v1507 = vshrl.u32 %v1506, 7
      %v1508 = vsub.s32 0, %v1507
      %v1509 = vrot.slane %v1423, %v1508
      %v1510 = vlaneseq
      %v1511 = vshrl.u32 %v1510, 7
      %v1512 = vsub.s32 0, %v1511
      %v1513 = vrot.slane %v1425, %v1512
      %v1522 = vsub.f32 %v1485, %v1432
      %v1523 = vsub.f32 %v1489, %v1439
      %v1524 = vsub.f32 %v1493, %v1446
      %v1525 = vsub.f32 %v1497, %v1453
      %v1526 = vsub.f32 %v1501, %v1460
      %v1527 = vsub.f32 %v1505, %v1467
      %v1528 = vsub.f32 %v1509, %v1474
      %v1529 = vsub.f32 %v1513, %v1481
      %v1530 = vmul.f32 %v1214, %v1214
      %v1531 = vmul.f32 %v1215, %v1215
      %v1532 = vmul.f32 %v1216, %v1216
      %v1533 = vmul.f32 %v1217, %v1217
      %v1534 = vmul.f32 %v1218, %v1218
      %v1535 = vmul.f32 %v1219, %v1219
      %v1536 = vmul.f32 %v1220, %v1220
      %v1537 = vmul.f32 %v1221, %v1221
      %v1538 = vmul.f32 %v1368, %v1368
      %v1539 = vmul.f32 %v1369, %v1369
      %v1540 = vmul.f32 %v1370, %v1370
      %v1541 = vmul.f32 %v1371, %v1371
      %v1542 = vmul.f32 %v1372, %v1372
      %v1543 = vmul.f32 %v1373, %v1373
      %v1544 = vmul.f32 %v1374, %v1374
      %v1545 = vmul.f32 %v1375, %v1375
      %v1546 = vadd.f32 %v1530, %v1538
      %v1547 = vadd.f32 %v1531, %v1539
      %v1548 = vadd.f32 %v1532, %v1540
      %v1549 = vadd.f32 %v1533, %v1541
      %v1550 = vadd.f32 %v1534, %v1542
      %v1551 = vadd.f32 %v1535, %v1543
      %v1552 = vadd.f32 %v1536, %v1544
      %v1553 = vadd.f32 %v1537, %v1545
      %v1554 = vmul.f32 %v1522, %v1522
      %v1555 = vmul.f32 %v1523, %v1523
      %v1556 = vmul.f32 %v1524, %v1524
      %v1557 = vmul.f32 %v1525, %v1525
      %v1558 = vmul.f32 %v1526, %v1526
      %v1559 = vmul.f32 %v1527, %v1527
      %v1560 = vmul.f32 %v1528, %v1528
      %v1561 = vmul.f32 %v1529, %v1529
      %v1562 = vadd.f32 %v1546, %v1554
      %v1563 = vadd.f32 %v1547, %v1555
      %v1564 = vadd.f32 %v1548, %v1556
      %v1565 = vadd.f32 %v1549, %v1557
      %v1566 = vadd.f32 %v1550, %v1558
      %v1567 = vadd.f32 %v1551, %v1559
      %v1568 = vadd.f32 %v1552, %v1560
      %v1569 = vadd.f32 %v1553, %v1561
      %v1578 = vand.u32 %v1562, 4294967168
      %v1579 = vand.u32 %v1563, 4294967168
      %v1580 = vand.u32 %v1564, 4294967168
      %v1581 = vand.u32 %v1565, 4294967168
      %v1582 = vand.u32 %v1566, 4294967168
      %v1583 = vand.u32 %v1567, 4294967168
      %v1584 = vand.u32 %v1568, 4294967168
      %v1585 = vand.u32 %v1569, 4294967168
      %v1586 = vor.u32 %v1578, %v474
      %v1587 = vor.u32 %v1579, %v474
      %v1588 = vor.u32 %v1580, %v474
      %v1589 = vor.u32 %v1581, %v474
      %v1590 = vor.u32 %v1582, %v474
      %v1591 = vor.u32 %v1583, %v474
      %v1592 = vor.u32 %v1584, %v474
      %v1593 = vor.u32 %v1585, %v474
      %v1594 = vand.u32 %v1586, 65535
      %v1595 = vshra.s32 %v1586, 16
      %v1596 = vcvt.s32.f32 %v1594
      %v1597 = vcvt.s32.f32 %v1595
      %1598 = vmin.xlane.f32.xlu0 %v1597
      %v1599 = vpop.xlane.xlu0 %1598
      %vm1600 = vcmp.eq.f32.partialorder %v1597, %v1599
      %v1601 = vsel %vm1600, %v1596, inf
      %1602 = vmin.xlane.f32.xlu0 %v1601
      %v1603 = vpop.xlane.xlu0 %1602
      %v1604 = vcvt.f32.s32 %v1603
      %v1605 = vcvt.f32.s32 %v1599
      %v1606 = vshll.u32 %v1605, 16
      %v1607 = vadd.s32 %v1606, %v1604
      %v1608 = vand.u32 %v1587, 65535
      %v1609 = vshra.s32 %v1587, 16
      %v1610 = vcvt.s32.f32 %v1608
      %v1611 = vcvt.s32.f32 %v1609
      %1612 = vmin.xlane.f32.xlu0 %v1611
      %v1613 = vpop.xlane.xlu0 %1612
      %vm1614 = vcmp.eq.f32.partialorder %v1611, %v1613
      %v1615 = vsel %vm1614, %v1610, inf
      %1616 = vmin.xlane.f32.xlu0 %v1615
      %v1617 = vpop.xlane.xlu0 %1616
      %v1618 = vcvt.f32.s32 %v1617
      %v1619 = vcvt.f32.s32 %v1613
      %v1620 = vshll.u32 %v1619, 16
      %v1621 = vadd.s32 %v1620, %v1618
      %v1622 = vand.u32 %v1588, 65535
      %v1623 = vshra.s32 %v1588, 16
      %v1624 = vcvt.s32.f32 %v1622
      %v1625 = vcvt.s32.f32 %v1623
      %1626 = vmin.xlane.f32.xlu0 %v1625
      %v1627 = vpop.xlane.xlu0 %1626
      %vm1628 = vcmp.eq.f32.partialorder %v1625, %v1627
      %v1629 = vsel %vm1628, %v1624, inf
      %1630 = vmin.xlane.f32.xlu0 %v1629
      %v1631 = vpop.xlane.xlu0 %1630
      %v1632 = vcvt.f32.s32 %v1631
      %v1633 = vcvt.f32.s32 %v1627
      %v1634 = vshll.u32 %v1633, 16
      %v1635 = vadd.s32 %v1634, %v1632
      %v1636 = vand.u32 %v1589, 65535
      %v1637 = vshra.s32 %v1589, 16
      %v1638 = vcvt.s32.f32 %v1636
      %v1639 = vcvt.s32.f32 %v1637
      %1640 = vmin.xlane.f32.xlu0 %v1639
      %v1641 = vpop.xlane.xlu0 %1640
      %vm1642 = vcmp.eq.f32.partialorder %v1639, %v1641
      %v1643 = vsel %vm1642, %v1638, inf
      %1644 = vmin.xlane.f32.xlu0 %v1643
      %v1645 = vpop.xlane.xlu0 %1644
      %v1646 = vcvt.f32.s32 %v1645
      %v1647 = vcvt.f32.s32 %v1641
      %v1648 = vshll.u32 %v1647, 16
      %v1649 = vadd.s32 %v1648, %v1646
      %v1650 = vand.u32 %v1590, 65535
      %v1651 = vshra.s32 %v1590, 16
      %v1652 = vcvt.s32.f32 %v1650
      %v1653 = vcvt.s32.f32 %v1651
      %1654 = vmin.xlane.f32.xlu0 %v1653
      %v1655 = vpop.xlane.xlu0 %1654
      %vm1656 = vcmp.eq.f32.partialorder %v1653, %v1655
      %v1657 = vsel %vm1656, %v1652, inf
      %1658 = vmin.xlane.f32.xlu0 %v1657
      %v1659 = vpop.xlane.xlu0 %1658
      %v1660 = vcvt.f32.s32 %v1659
      %v1661 = vcvt.f32.s32 %v1655
      %v1662 = vshll.u32 %v1661, 16
      %v1663 = vadd.s32 %v1662, %v1660
      %v1664 = vand.u32 %v1591, 65535
      %v1665 = vshra.s32 %v1591, 16
      %v1666 = vcvt.s32.f32 %v1664
      %v1667 = vcvt.s32.f32 %v1665
      %1668 = vmin.xlane.f32.xlu0 %v1667
      %v1669 = vpop.xlane.xlu0 %1668
      %vm1670 = vcmp.eq.f32.partialorder %v1667, %v1669
      %v1671 = vsel %vm1670, %v1666, inf
      %1672 = vmin.xlane.f32.xlu0 %v1671
      %v1673 = vpop.xlane.xlu0 %1672
      %v1674 = vcvt.f32.s32 %v1673
      %v1675 = vcvt.f32.s32 %v1669
      %v1676 = vshll.u32 %v1675, 16
      %v1677 = vadd.s32 %v1676, %v1674
      %v1678 = vand.u32 %v1592, 65535
      %v1679 = vshra.s32 %v1592, 16
      %v1680 = vcvt.s32.f32 %v1678
      %v1681 = vcvt.s32.f32 %v1679
      %1682 = vmin.xlane.f32.xlu0 %v1681
      %v1683 = vpop.xlane.xlu0 %1682
      %vm1684 = vcmp.eq.f32.partialorder %v1681, %v1683
      %v1685 = vsel %vm1684, %v1680, inf
      %1686 = vmin.xlane.f32.xlu0 %v1685
      %v1687 = vpop.xlane.xlu0 %1686
      %v1688 = vcvt.f32.s32 %v1687
      %v1689 = vcvt.f32.s32 %v1683
      %v1690 = vshll.u32 %v1689, 16
      %v1691 = vadd.s32 %v1690, %v1688
      %v1692 = vand.u32 %v1593, 65535
      %v1693 = vshra.s32 %v1593, 16
      %v1694 = vcvt.s32.f32 %v1692
      %v1695 = vcvt.s32.f32 %v1693
      %1696 = vmin.xlane.f32.xlu0 %v1695
      %v1697 = vpop.xlane.xlu0 %1696
      %vm1698 = vcmp.eq.f32.partialorder %v1695, %v1697
      %v1699 = vsel %vm1698, %v1694, inf
      %1700 = vmin.xlane.f32.xlu0 %v1699
      %v1701 = vpop.xlane.xlu0 %1700
      %v1702 = vcvt.f32.s32 %v1701
      %v1703 = vcvt.f32.s32 %v1697
      %v1704 = vshll.u32 %v1703, 16
      %v1705 = vadd.s32 %v1704, %v1702
      %v1706 = vand.u32 %v1607, 127
      %v1707 = vand.u32 %v1621, 127
      %v1708 = vand.u32 %v1635, 127
      %v1709 = vand.u32 %v1649, 127
      %v1710 = vand.u32 %v1663, 127
      %v1711 = vand.u32 %v1677, 127
      %v1712 = vand.u32 %v1691, 127
      %v1713 = vand.u32 %v1705, 127
      %vm1714 = vcmp.eq.s32.totalorder %v474, %v1706
      %vm1715 = vcmp.eq.s32.totalorder %v474, %v1707
      %vm1716 = vcmp.eq.s32.totalorder %v474, %v1708
      %vm1717 = vcmp.eq.s32.totalorder %v474, %v1709
      %vm1718 = vcmp.eq.s32.totalorder %v474, %v1710
      %vm1719 = vcmp.eq.s32.totalorder %v474, %v1711
      %vm1720 = vcmp.eq.s32.totalorder %v474, %v1712
      %vm1721 = vcmp.eq.s32.totalorder %v474, %v1713
      %v1722 = vsel %vm1714, 2147483647, %v1586
      %v1723 = vsel %vm1715, 2147483647, %v1587
      %v1724 = vsel %vm1716, 2147483647, %v1588
      %v1725 = vsel %vm1717, 2147483647, %v1589
      %v1726 = vsel %vm1718, 2147483647, %v1590
      %v1727 = vsel %vm1719, 2147483647, %v1591
      %v1728 = vsel %vm1720, 2147483647, %v1592
      %v1729 = vsel %vm1721, 2147483647, %v1593
      %v1730 = vsel %vm491, %v1706, 0
      %v1731 = vsel %vm491, %v1707, 0
      %v1732 = vsel %vm491, %v1708, 0
      %v1733 = vsel %vm491, %v1709, 0
      %v1734 = vsel %vm491, %v1710, 0
      %v1735 = vsel %vm491, %v1711, 0
      %v1736 = vsel %vm491, %v1712, 0
      %v1737 = vsel %vm491, %v1713, 0
      %v1738 = vand.u32 %v1722, 65535
      %v1739 = vshra.s32 %v1722, 16
      %v1740 = vcvt.s32.f32 %v1738
      %v1741 = vcvt.s32.f32 %v1739
      %1742 = vmin.xlane.f32.xlu0 %v1741
      %v1743 = vpop.xlane.xlu0 %1742
      %vm1744 = vcmp.eq.f32.partialorder %v1741, %v1743
      %v1745 = vsel %vm1744, %v1740, inf
      %1746 = vmin.xlane.f32.xlu0 %v1745
      %v1747 = vpop.xlane.xlu0 %1746
      %v1748 = vcvt.f32.s32 %v1747
      %v1749 = vcvt.f32.s32 %v1743
      %v1750 = vshll.u32 %v1749, 16
      %v1751 = vadd.s32 %v1750, %v1748
      %v1752 = vand.u32 %v1723, 65535
      %v1753 = vshra.s32 %v1723, 16
      %v1754 = vcvt.s32.f32 %v1752
      %v1755 = vcvt.s32.f32 %v1753
      %1756 = vmin.xlane.f32.xlu0 %v1755
      %v1757 = vpop.xlane.xlu0 %1756
      %vm1758 = vcmp.eq.f32.partialorder %v1755, %v1757
      %v1759 = vsel %vm1758, %v1754, inf
      %1760 = vmin.xlane.f32.xlu0 %v1759
      %v1761 = vpop.xlane.xlu0 %1760
      %v1762 = vcvt.f32.s32 %v1761
      %v1763 = vcvt.f32.s32 %v1757
      %v1764 = vshll.u32 %v1763, 16
      %v1765 = vadd.s32 %v1764, %v1762
      %v1766 = vand.u32 %v1724, 65535
      %v1767 = vshra.s32 %v1724, 16
      %v1768 = vcvt.s32.f32 %v1766
      %v1769 = vcvt.s32.f32 %v1767
      %1770 = vmin.xlane.f32.xlu0 %v1769
      %v1771 = vpop.xlane.xlu0 %1770
      %vm1772 = vcmp.eq.f32.partialorder %v1769, %v1771
      %v1773 = vsel %vm1772, %v1768, inf
      %1774 = vmin.xlane.f32.xlu0 %v1773
      %v1775 = vpop.xlane.xlu0 %1774
      %v1776 = vcvt.f32.s32 %v1775
      %v1777 = vcvt.f32.s32 %v1771
      %v1778 = vshll.u32 %v1777, 16
      %v1779 = vadd.s32 %v1778, %v1776
      %v1780 = vand.u32 %v1725, 65535
      %v1781 = vshra.s32 %v1725, 16
      %v1782 = vcvt.s32.f32 %v1780
      %v1783 = vcvt.s32.f32 %v1781
      %1784 = vmin.xlane.f32.xlu0 %v1783
      %v1785 = vpop.xlane.xlu0 %1784
      %vm1786 = vcmp.eq.f32.partialorder %v1783, %v1785
      %v1787 = vsel %vm1786, %v1782, inf
      %1788 = vmin.xlane.f32.xlu0 %v1787
      %v1789 = vpop.xlane.xlu0 %1788
      %v1790 = vcvt.f32.s32 %v1789
      %v1791 = vcvt.f32.s32 %v1785
      %v1792 = vshll.u32 %v1791, 16
      %v1793 = vadd.s32 %v1792, %v1790
      %v1794 = vand.u32 %v1726, 65535
      %v1795 = vshra.s32 %v1726, 16
      %v1796 = vcvt.s32.f32 %v1794
      %v1797 = vcvt.s32.f32 %v1795
      %1798 = vmin.xlane.f32.xlu0 %v1797
      %v1799 = vpop.xlane.xlu0 %1798
      %vm1800 = vcmp.eq.f32.partialorder %v1797, %v1799
      %v1801 = vsel %vm1800, %v1796, inf
      %1802 = vmin.xlane.f32.xlu0 %v1801
      %v1803 = vpop.xlane.xlu0 %1802
      %v1804 = vcvt.f32.s32 %v1803
      %v1805 = vcvt.f32.s32 %v1799
      %v1806 = vshll.u32 %v1805, 16
      %v1807 = vadd.s32 %v1806, %v1804
      %v1808 = vand.u32 %v1727, 65535
      %v1809 = vshra.s32 %v1727, 16
      %v1810 = vcvt.s32.f32 %v1808
      %v1811 = vcvt.s32.f32 %v1809
      %1812 = vmin.xlane.f32.xlu0 %v1811
      %v1813 = vpop.xlane.xlu0 %1812
      %vm1814 = vcmp.eq.f32.partialorder %v1811, %v1813
      %v1815 = vsel %vm1814, %v1810, inf
      %1816 = vmin.xlane.f32.xlu0 %v1815
      %v1817 = vpop.xlane.xlu0 %1816
      %v1818 = vcvt.f32.s32 %v1817
      %v1819 = vcvt.f32.s32 %v1813
      %v1820 = vshll.u32 %v1819, 16
      %v1821 = vadd.s32 %v1820, %v1818
      %v1822 = vand.u32 %v1728, 65535
      %v1823 = vshra.s32 %v1728, 16
      %v1824 = vcvt.s32.f32 %v1822
      %v1825 = vcvt.s32.f32 %v1823
      %1826 = vmin.xlane.f32.xlu0 %v1825
      %v1827 = vpop.xlane.xlu0 %1826
      %vm1828 = vcmp.eq.f32.partialorder %v1825, %v1827
      %v1829 = vsel %vm1828, %v1824, inf
      %1830 = vmin.xlane.f32.xlu0 %v1829
      %v1831 = vpop.xlane.xlu0 %1830
      %v1832 = vcvt.f32.s32 %v1831
      %v1833 = vcvt.f32.s32 %v1827
      %v1834 = vshll.u32 %v1833, 16
      %v1835 = vadd.s32 %v1834, %v1832
      %v1836 = vand.u32 %v1729, 65535
      %v1837 = vshra.s32 %v1729, 16
      %v1838 = vcvt.s32.f32 %v1836
      %v1839 = vcvt.s32.f32 %v1837
      %1840 = vmin.xlane.f32.xlu0 %v1839
      %v1841 = vpop.xlane.xlu0 %1840
      %vm1842 = vcmp.eq.f32.partialorder %v1839, %v1841
      %v1843 = vsel %vm1842, %v1838, inf
      %1844 = vmin.xlane.f32.xlu0 %v1843
      %v1845 = vpop.xlane.xlu0 %1844
      %v1846 = vcvt.f32.s32 %v1845
      %v1847 = vcvt.f32.s32 %v1841
      %v1848 = vshll.u32 %v1847, 16
      %v1849 = vadd.s32 %v1848, %v1846
      %v1850 = vand.u32 %v1751, 127
      %v1851 = vand.u32 %v1765, 127
      %v1852 = vand.u32 %v1779, 127
      %v1853 = vand.u32 %v1793, 127
      %v1854 = vand.u32 %v1807, 127
      %v1855 = vand.u32 %v1821, 127
      %v1856 = vand.u32 %v1835, 127
      %v1857 = vand.u32 %v1849, 127
      %vm1858 = vcmp.eq.s32.totalorder %v474, %v1850
      %vm1859 = vcmp.eq.s32.totalorder %v474, %v1851
      %vm1860 = vcmp.eq.s32.totalorder %v474, %v1852
      %vm1861 = vcmp.eq.s32.totalorder %v474, %v1853
      %vm1862 = vcmp.eq.s32.totalorder %v474, %v1854
      %vm1863 = vcmp.eq.s32.totalorder %v474, %v1855
      %vm1864 = vcmp.eq.s32.totalorder %v474, %v1856
      %vm1865 = vcmp.eq.s32.totalorder %v474, %v1857
      %v1866 = vsel %vm1858, 2147483647, %v1722
      %v1867 = vsel %vm1859, 2147483647, %v1723
      %v1868 = vsel %vm1860, 2147483647, %v1724
      %v1869 = vsel %vm1861, 2147483647, %v1725
      %v1870 = vsel %vm1862, 2147483647, %v1726
      %v1871 = vsel %vm1863, 2147483647, %v1727
      %v1872 = vsel %vm1864, 2147483647, %v1728
      %v1873 = vsel %vm1865, 2147483647, %v1729
      %v1874 = vsel %vm535, %v1850, %v1730
      %v1875 = vsel %vm535, %v1851, %v1731
      %v1876 = vsel %vm535, %v1852, %v1732
      %v1877 = vsel %vm535, %v1853, %v1733
      %v1878 = vsel %vm535, %v1854, %v1734
      %v1879 = vsel %vm535, %v1855, %v1735
      %v1880 = vsel %vm535, %v1856, %v1736
      %v1881 = vsel %vm535, %v1857, %v1737
      %v1882 = vand.u32 %v1866, 65535
      %v1883 = vshra.s32 %v1866, 16
      %v1884 = vcvt.s32.f32 %v1882
      %v1885 = vcvt.s32.f32 %v1883
      %1886 = vmin.xlane.f32.xlu0 %v1885
      %v1887 = vpop.xlane.xlu0 %1886
      %vm1888 = vcmp.eq.f32.partialorder %v1885, %v1887
      %v1889 = vsel %vm1888, %v1884, inf
      %1890 = vmin.xlane.f32.xlu0 %v1889
      %v1891 = vpop.xlane.xlu0 %1890
      %v1892 = vcvt.f32.s32 %v1891
      %v1893 = vcvt.f32.s32 %v1887
      %v1894 = vshll.u32 %v1893, 16
      %v1895 = vadd.s32 %v1894, %v1892
      %v1896 = vand.u32 %v1867, 65535
      %v1897 = vshra.s32 %v1867, 16
      %v1898 = vcvt.s32.f32 %v1896
      %v1899 = vcvt.s32.f32 %v1897
      %1900 = vmin.xlane.f32.xlu0 %v1899
      %v1901 = vpop.xlane.xlu0 %1900
      %vm1902 = vcmp.eq.f32.partialorder %v1899, %v1901
      %v1903 = vsel %vm1902, %v1898, inf
      %1904 = vmin.xlane.f32.xlu0 %v1903
      %v1905 = vpop.xlane.xlu0 %1904
      %v1906 = vcvt.f32.s32 %v1905
      %v1907 = vcvt.f32.s32 %v1901
      %v1908 = vshll.u32 %v1907, 16
      %v1909 = vadd.s32 %v1908, %v1906
      %v1910 = vand.u32 %v1868, 65535
      %v1911 = vshra.s32 %v1868, 16
      %v1912 = vcvt.s32.f32 %v1910
      %v1913 = vcvt.s32.f32 %v1911
      %1914 = vmin.xlane.f32.xlu0 %v1913
      %v1915 = vpop.xlane.xlu0 %1914
      %vm1916 = vcmp.eq.f32.partialorder %v1913, %v1915
      %v1917 = vsel %vm1916, %v1912, inf
      %1918 = vmin.xlane.f32.xlu0 %v1917
      %v1919 = vpop.xlane.xlu0 %1918
      %v1920 = vcvt.f32.s32 %v1919
      %v1921 = vcvt.f32.s32 %v1915
      %v1922 = vshll.u32 %v1921, 16
      %v1923 = vadd.s32 %v1922, %v1920
      %v1924 = vand.u32 %v1869, 65535
      %v1925 = vshra.s32 %v1869, 16
      %v1926 = vcvt.s32.f32 %v1924
      %v1927 = vcvt.s32.f32 %v1925
      %1928 = vmin.xlane.f32.xlu0 %v1927
      %v1929 = vpop.xlane.xlu0 %1928
      %vm1930 = vcmp.eq.f32.partialorder %v1927, %v1929
      %v1931 = vsel %vm1930, %v1926, inf
      %1932 = vmin.xlane.f32.xlu0 %v1931
      %v1933 = vpop.xlane.xlu0 %1932
      %v1934 = vcvt.f32.s32 %v1933
      %v1935 = vcvt.f32.s32 %v1929
      %v1936 = vshll.u32 %v1935, 16
      %v1937 = vadd.s32 %v1936, %v1934
      %v1938 = vand.u32 %v1870, 65535
      %v1939 = vshra.s32 %v1870, 16
      %v1940 = vcvt.s32.f32 %v1938
      %v1941 = vcvt.s32.f32 %v1939
      %1942 = vmin.xlane.f32.xlu0 %v1941
      %v1943 = vpop.xlane.xlu0 %1942
      %vm1944 = vcmp.eq.f32.partialorder %v1941, %v1943
      %v1945 = vsel %vm1944, %v1940, inf
      %1946 = vmin.xlane.f32.xlu0 %v1945
      %v1947 = vpop.xlane.xlu0 %1946
      %v1948 = vcvt.f32.s32 %v1947
      %v1949 = vcvt.f32.s32 %v1943
      %v1950 = vshll.u32 %v1949, 16
      %v1951 = vadd.s32 %v1950, %v1948
      %v1952 = vand.u32 %v1871, 65535
      %v1953 = vshra.s32 %v1871, 16
      %v1954 = vcvt.s32.f32 %v1952
      %v1955 = vcvt.s32.f32 %v1953
      %1956 = vmin.xlane.f32.xlu0 %v1955
      %v1957 = vpop.xlane.xlu0 %1956
      %vm1958 = vcmp.eq.f32.partialorder %v1955, %v1957
      %v1959 = vsel %vm1958, %v1954, inf
      %1960 = vmin.xlane.f32.xlu0 %v1959
      %v1961 = vpop.xlane.xlu0 %1960
      %v1962 = vcvt.f32.s32 %v1961
      %v1963 = vcvt.f32.s32 %v1957
      %v1964 = vshll.u32 %v1963, 16
      %v1965 = vadd.s32 %v1964, %v1962
      %v1966 = vand.u32 %v1872, 65535
      %v1967 = vshra.s32 %v1872, 16
      %v1968 = vcvt.s32.f32 %v1966
      %v1969 = vcvt.s32.f32 %v1967
      %1970 = vmin.xlane.f32.xlu0 %v1969
      %v1971 = vpop.xlane.xlu0 %1970
      %vm1972 = vcmp.eq.f32.partialorder %v1969, %v1971
      %v1973 = vsel %vm1972, %v1968, inf
      %1974 = vmin.xlane.f32.xlu0 %v1973
      %v1975 = vpop.xlane.xlu0 %1974
      %v1976 = vcvt.f32.s32 %v1975
      %v1977 = vcvt.f32.s32 %v1971
      %v1978 = vshll.u32 %v1977, 16
      %v1979 = vadd.s32 %v1978, %v1976
      %v1980 = vand.u32 %v1873, 65535
      %v1981 = vshra.s32 %v1873, 16
      %v1982 = vcvt.s32.f32 %v1980
      %v1983 = vcvt.s32.f32 %v1981
      %1984 = vmin.xlane.f32.xlu0 %v1983
      %v1985 = vpop.xlane.xlu0 %1984
      %vm1986 = vcmp.eq.f32.partialorder %v1983, %v1985
      %v1987 = vsel %vm1986, %v1982, inf
      %1988 = vmin.xlane.f32.xlu0 %v1987
      %v1989 = vpop.xlane.xlu0 %1988
      %v1990 = vcvt.f32.s32 %v1989
      %v1991 = vcvt.f32.s32 %v1985
      %v1992 = vshll.u32 %v1991, 16
      %v1993 = vadd.s32 %v1992, %v1990
      %v1994 = vand.u32 %v1895, 127
      %v1995 = vand.u32 %v1909, 127
      %v1996 = vand.u32 %v1923, 127
      %v1997 = vand.u32 %v1937, 127
      %v1998 = vand.u32 %v1951, 127
      %v1999 = vand.u32 %v1965, 127
      %v2000 = vand.u32 %v1979, 127
      %v2001 = vand.u32 %v1993, 127
      %vm2002 = vcmp.eq.s32.totalorder %v474, %v1994
      %vm2003 = vcmp.eq.s32.totalorder %v474, %v1995
      %vm2004 = vcmp.eq.s32.totalorder %v474, %v1996
      %vm2005 = vcmp.eq.s32.totalorder %v474, %v1997
      %vm2006 = vcmp.eq.s32.totalorder %v474, %v1998
      %vm2007 = vcmp.eq.s32.totalorder %v474, %v1999
      %vm2008 = vcmp.eq.s32.totalorder %v474, %v2000
      %vm2009 = vcmp.eq.s32.totalorder %v474, %v2001
      %v2010 = vsel %vm2002, 2147483647, %v1866
      %v2011 = vsel %vm2003, 2147483647, %v1867
      %v2012 = vsel %vm2004, 2147483647, %v1868
      %v2013 = vsel %vm2005, 2147483647, %v1869
      %v2014 = vsel %vm2006, 2147483647, %v1870
      %v2015 = vsel %vm2007, 2147483647, %v1871
      %v2016 = vsel %vm2008, 2147483647, %v1872
      %v2017 = vsel %vm2009, 2147483647, %v1873
      %v2018 = vsel %vm579, %v1994, %v1874
      %v2019 = vsel %vm579, %v1995, %v1875
      %v2020 = vsel %vm579, %v1996, %v1876
      %v2021 = vsel %vm579, %v1997, %v1877
      %v2022 = vsel %vm579, %v1998, %v1878
      %v2023 = vsel %vm579, %v1999, %v1879
      %v2024 = vsel %vm579, %v2000, %v1880
      %v2025 = vsel %vm579, %v2001, %v1881
      %v2026 = vand.u32 %v2010, 65535
      %v2027 = vshra.s32 %v2010, 16
      %v2028 = vcvt.s32.f32 %v2026
      %v2029 = vcvt.s32.f32 %v2027
      %2030 = vmin.xlane.f32.xlu0 %v2029
      %v2031 = vpop.xlane.xlu0 %2030
      %vm2032 = vcmp.eq.f32.partialorder %v2029, %v2031
      %v2033 = vsel %vm2032, %v2028, inf
      %2034 = vmin.xlane.f32.xlu0 %v2033
      %v2035 = vpop.xlane.xlu0 %2034
      %v2036 = vcvt.f32.s32 %v2035
      %v2037 = vcvt.f32.s32 %v2031
      %v2038 = vshll.u32 %v2037, 16
      %v2039 = vadd.s32 %v2038, %v2036
      %v2040 = vand.u32 %v2011, 65535
      %v2041 = vshra.s32 %v2011, 16
      %v2042 = vcvt.s32.f32 %v2040
      %v2043 = vcvt.s32.f32 %v2041
      %2044 = vmin.xlane.f32.xlu0 %v2043
      %v2045 = vpop.xlane.xlu0 %2044
      %vm2046 = vcmp.eq.f32.partialorder %v2043, %v2045
      %v2047 = vsel %vm2046, %v2042, inf
      %2048 = vmin.xlane.f32.xlu0 %v2047
      %v2049 = vpop.xlane.xlu0 %2048
      %v2050 = vcvt.f32.s32 %v2049
      %v2051 = vcvt.f32.s32 %v2045
      %v2052 = vshll.u32 %v2051, 16
      %v2053 = vadd.s32 %v2052, %v2050
      %v2054 = vand.u32 %v2012, 65535
      %v2055 = vshra.s32 %v2012, 16
      %v2056 = vcvt.s32.f32 %v2054
      %v2057 = vcvt.s32.f32 %v2055
      %2058 = vmin.xlane.f32.xlu0 %v2057
      %v2059 = vpop.xlane.xlu0 %2058
      %vm2060 = vcmp.eq.f32.partialorder %v2057, %v2059
      %v2061 = vsel %vm2060, %v2056, inf
      %2062 = vmin.xlane.f32.xlu0 %v2061
      %v2063 = vpop.xlane.xlu0 %2062
      %v2064 = vcvt.f32.s32 %v2063
      %v2065 = vcvt.f32.s32 %v2059
      %v2066 = vshll.u32 %v2065, 16
      %v2067 = vadd.s32 %v2066, %v2064
      %v2068 = vand.u32 %v2013, 65535
      %v2069 = vshra.s32 %v2013, 16
      %v2070 = vcvt.s32.f32 %v2068
      %v2071 = vcvt.s32.f32 %v2069
      %2072 = vmin.xlane.f32.xlu0 %v2071
      %v2073 = vpop.xlane.xlu0 %2072
      %vm2074 = vcmp.eq.f32.partialorder %v2071, %v2073
      %v2075 = vsel %vm2074, %v2070, inf
      %2076 = vmin.xlane.f32.xlu0 %v2075
      %v2077 = vpop.xlane.xlu0 %2076
      %v2078 = vcvt.f32.s32 %v2077
      %v2079 = vcvt.f32.s32 %v2073
      %v2080 = vshll.u32 %v2079, 16
      %v2081 = vadd.s32 %v2080, %v2078
      %v2082 = vand.u32 %v2014, 65535
      %v2083 = vshra.s32 %v2014, 16
      %v2084 = vcvt.s32.f32 %v2082
      %v2085 = vcvt.s32.f32 %v2083
      %2086 = vmin.xlane.f32.xlu0 %v2085
      %v2087 = vpop.xlane.xlu0 %2086
      %vm2088 = vcmp.eq.f32.partialorder %v2085, %v2087
      %v2089 = vsel %vm2088, %v2084, inf
      %2090 = vmin.xlane.f32.xlu0 %v2089
      %v2091 = vpop.xlane.xlu0 %2090
      %v2092 = vcvt.f32.s32 %v2091
      %v2093 = vcvt.f32.s32 %v2087
      %v2094 = vshll.u32 %v2093, 16
      %v2095 = vadd.s32 %v2094, %v2092
      %v2096 = vand.u32 %v2015, 65535
      %v2097 = vshra.s32 %v2015, 16
      %v2098 = vcvt.s32.f32 %v2096
      %v2099 = vcvt.s32.f32 %v2097
      %2100 = vmin.xlane.f32.xlu0 %v2099
      %v2101 = vpop.xlane.xlu0 %2100
      %vm2102 = vcmp.eq.f32.partialorder %v2099, %v2101
      %v2103 = vsel %vm2102, %v2098, inf
      %2104 = vmin.xlane.f32.xlu0 %v2103
      %v2105 = vpop.xlane.xlu0 %2104
      %v2106 = vcvt.f32.s32 %v2105
      %v2107 = vcvt.f32.s32 %v2101
      %v2108 = vshll.u32 %v2107, 16
      %v2109 = vadd.s32 %v2108, %v2106
      %v2110 = vand.u32 %v2016, 65535
      %v2111 = vshra.s32 %v2016, 16
      %v2112 = vcvt.s32.f32 %v2110
      %v2113 = vcvt.s32.f32 %v2111
      %2114 = vmin.xlane.f32.xlu0 %v2113
      %v2115 = vpop.xlane.xlu0 %2114
      %vm2116 = vcmp.eq.f32.partialorder %v2113, %v2115
      %v2117 = vsel %vm2116, %v2112, inf
      %2118 = vmin.xlane.f32.xlu0 %v2117
      %v2119 = vpop.xlane.xlu0 %2118
      %v2120 = vcvt.f32.s32 %v2119
      %v2121 = vcvt.f32.s32 %v2115
      %v2122 = vshll.u32 %v2121, 16
      %v2123 = vadd.s32 %v2122, %v2120
      %v2124 = vand.u32 %v2017, 65535
      %v2125 = vshra.s32 %v2017, 16
      %v2126 = vcvt.s32.f32 %v2124
      %v2127 = vcvt.s32.f32 %v2125
      %2128 = vmin.xlane.f32.xlu0 %v2127
      %v2129 = vpop.xlane.xlu0 %2128
      %vm2130 = vcmp.eq.f32.partialorder %v2127, %v2129
      %v2131 = vsel %vm2130, %v2126, inf
      %2132 = vmin.xlane.f32.xlu0 %v2131
      %v2133 = vpop.xlane.xlu0 %2132
      %v2134 = vcvt.f32.s32 %v2133
      %v2135 = vcvt.f32.s32 %v2129
      %v2136 = vshll.u32 %v2135, 16
      %v2137 = vadd.s32 %v2136, %v2134
      %v2138 = vand.u32 %v2039, 127
      %v2139 = vand.u32 %v2053, 127
      %v2140 = vand.u32 %v2067, 127
      %v2141 = vand.u32 %v2081, 127
      %v2142 = vand.u32 %v2095, 127
      %v2143 = vand.u32 %v2109, 127
      %v2144 = vand.u32 %v2123, 127
      %v2145 = vand.u32 %v2137, 127
      %vm2146 = vcmp.eq.s32.totalorder %v474, %v2138
      %vm2147 = vcmp.eq.s32.totalorder %v474, %v2139
      %vm2148 = vcmp.eq.s32.totalorder %v474, %v2140
      %vm2149 = vcmp.eq.s32.totalorder %v474, %v2141
      %vm2150 = vcmp.eq.s32.totalorder %v474, %v2142
      %vm2151 = vcmp.eq.s32.totalorder %v474, %v2143
      %vm2152 = vcmp.eq.s32.totalorder %v474, %v2144
      %vm2153 = vcmp.eq.s32.totalorder %v474, %v2145
      %v2154 = vsel %vm2146, 2147483647, %v2010
      %v2155 = vsel %vm2147, 2147483647, %v2011
      %v2156 = vsel %vm2148, 2147483647, %v2012
      %v2157 = vsel %vm2149, 2147483647, %v2013
      %v2158 = vsel %vm2150, 2147483647, %v2014
      %v2159 = vsel %vm2151, 2147483647, %v2015
      %v2160 = vsel %vm2152, 2147483647, %v2016
      %v2161 = vsel %vm2153, 2147483647, %v2017
      %v2162 = vsel %vm623, %v2138, %v2018
      %v2163 = vsel %vm623, %v2139, %v2019
      %v2164 = vsel %vm623, %v2140, %v2020
      %v2165 = vsel %vm623, %v2141, %v2021
      %v2166 = vsel %vm623, %v2142, %v2022
      %v2167 = vsel %vm623, %v2143, %v2023
      %v2168 = vsel %vm623, %v2144, %v2024
      %v2169 = vsel %vm623, %v2145, %v2025
      %v2170 = vand.u32 %v2154, 65535
      %v2171 = vshra.s32 %v2154, 16
      %v2172 = vcvt.s32.f32 %v2170
      %v2173 = vcvt.s32.f32 %v2171
      %2174 = vmin.xlane.f32.xlu0 %v2173
      %v2175 = vpop.xlane.xlu0 %2174
      %vm2176 = vcmp.eq.f32.partialorder %v2173, %v2175
      %v2177 = vsel %vm2176, %v2172, inf
      %2178 = vmin.xlane.f32.xlu0 %v2177
      %v2179 = vpop.xlane.xlu0 %2178
      %v2180 = vcvt.f32.s32 %v2179
      %v2181 = vcvt.f32.s32 %v2175
      %v2182 = vshll.u32 %v2181, 16
      %v2183 = vadd.s32 %v2182, %v2180
      %v2184 = vand.u32 %v2155, 65535
      %v2185 = vshra.s32 %v2155, 16
      %v2186 = vcvt.s32.f32 %v2184
      %v2187 = vcvt.s32.f32 %v2185
      %2188 = vmin.xlane.f32.xlu0 %v2187
      %v2189 = vpop.xlane.xlu0 %2188
      %vm2190 = vcmp.eq.f32.partialorder %v2187, %v2189
      %v2191 = vsel %vm2190, %v2186, inf
      %2192 = vmin.xlane.f32.xlu0 %v2191
      %v2193 = vpop.xlane.xlu0 %2192
      %v2194 = vcvt.f32.s32 %v2193
      %v2195 = vcvt.f32.s32 %v2189
      %v2196 = vshll.u32 %v2195, 16
      %v2197 = vadd.s32 %v2196, %v2194
      %v2198 = vand.u32 %v2156, 65535
      %v2199 = vshra.s32 %v2156, 16
      %v2200 = vcvt.s32.f32 %v2198
      %v2201 = vcvt.s32.f32 %v2199
      %2202 = vmin.xlane.f32.xlu0 %v2201
      %v2203 = vpop.xlane.xlu0 %2202
      %vm2204 = vcmp.eq.f32.partialorder %v2201, %v2203
      %v2205 = vsel %vm2204, %v2200, inf
      %2206 = vmin.xlane.f32.xlu0 %v2205
      %v2207 = vpop.xlane.xlu0 %2206
      %v2208 = vcvt.f32.s32 %v2207
      %v2209 = vcvt.f32.s32 %v2203
      %v2210 = vshll.u32 %v2209, 16
      %v2211 = vadd.s32 %v2210, %v2208
      %v2212 = vand.u32 %v2157, 65535
      %v2213 = vshra.s32 %v2157, 16
      %v2214 = vcvt.s32.f32 %v2212
      %v2215 = vcvt.s32.f32 %v2213
      %2216 = vmin.xlane.f32.xlu0 %v2215
      %v2217 = vpop.xlane.xlu0 %2216
      %vm2218 = vcmp.eq.f32.partialorder %v2215, %v2217
      %v2219 = vsel %vm2218, %v2214, inf
      %2220 = vmin.xlane.f32.xlu0 %v2219
      %v2221 = vpop.xlane.xlu0 %2220
      %v2222 = vcvt.f32.s32 %v2221
      %v2223 = vcvt.f32.s32 %v2217
      %v2224 = vshll.u32 %v2223, 16
      %v2225 = vadd.s32 %v2224, %v2222
      %v2226 = vand.u32 %v2158, 65535
      %v2227 = vshra.s32 %v2158, 16
      %v2228 = vcvt.s32.f32 %v2226
      %v2229 = vcvt.s32.f32 %v2227
      %2230 = vmin.xlane.f32.xlu0 %v2229
      %v2231 = vpop.xlane.xlu0 %2230
      %vm2232 = vcmp.eq.f32.partialorder %v2229, %v2231
      %v2233 = vsel %vm2232, %v2228, inf
      %2234 = vmin.xlane.f32.xlu0 %v2233
      %v2235 = vpop.xlane.xlu0 %2234
      %v2236 = vcvt.f32.s32 %v2235
      %v2237 = vcvt.f32.s32 %v2231
      %v2238 = vshll.u32 %v2237, 16
      %v2239 = vadd.s32 %v2238, %v2236
      %v2240 = vand.u32 %v2159, 65535
      %v2241 = vshra.s32 %v2159, 16
      %v2242 = vcvt.s32.f32 %v2240
      %v2243 = vcvt.s32.f32 %v2241
      %2244 = vmin.xlane.f32.xlu0 %v2243
      %v2245 = vpop.xlane.xlu0 %2244
      %vm2246 = vcmp.eq.f32.partialorder %v2243, %v2245
      %v2247 = vsel %vm2246, %v2242, inf
      %2248 = vmin.xlane.f32.xlu0 %v2247
      %v2249 = vpop.xlane.xlu0 %2248
      %v2250 = vcvt.f32.s32 %v2249
      %v2251 = vcvt.f32.s32 %v2245
      %v2252 = vshll.u32 %v2251, 16
      %v2253 = vadd.s32 %v2252, %v2250
      %v2254 = vand.u32 %v2160, 65535
      %v2255 = vshra.s32 %v2160, 16
      %v2256 = vcvt.s32.f32 %v2254
      %v2257 = vcvt.s32.f32 %v2255
      %2258 = vmin.xlane.f32.xlu0 %v2257
      %v2259 = vpop.xlane.xlu0 %2258
      %vm2260 = vcmp.eq.f32.partialorder %v2257, %v2259
      %v2261 = vsel %vm2260, %v2256, inf
      %2262 = vmin.xlane.f32.xlu0 %v2261
      %v2263 = vpop.xlane.xlu0 %2262
      %v2264 = vcvt.f32.s32 %v2263
      %v2265 = vcvt.f32.s32 %v2259
      %v2266 = vshll.u32 %v2265, 16
      %v2267 = vadd.s32 %v2266, %v2264
      %v2268 = vand.u32 %v2161, 65535
      %v2269 = vshra.s32 %v2161, 16
      %v2270 = vcvt.s32.f32 %v2268
      %v2271 = vcvt.s32.f32 %v2269
      %2272 = vmin.xlane.f32.xlu0 %v2271
      %v2273 = vpop.xlane.xlu0 %2272
      %vm2274 = vcmp.eq.f32.partialorder %v2271, %v2273
      %v2275 = vsel %vm2274, %v2270, inf
      %2276 = vmin.xlane.f32.xlu0 %v2275
      %v2277 = vpop.xlane.xlu0 %2276
      %v2278 = vcvt.f32.s32 %v2277
      %v2279 = vcvt.f32.s32 %v2273
      %v2280 = vshll.u32 %v2279, 16
      %v2281 = vadd.s32 %v2280, %v2278
      %v2282 = vand.u32 %v2183, 127
      %v2283 = vand.u32 %v2197, 127
      %v2284 = vand.u32 %v2211, 127
      %v2285 = vand.u32 %v2225, 127
      %v2286 = vand.u32 %v2239, 127
      %v2287 = vand.u32 %v2253, 127
      %v2288 = vand.u32 %v2267, 127
      %v2289 = vand.u32 %v2281, 127
      %vm2290 = vcmp.eq.s32.totalorder %v474, %v2282
      %vm2291 = vcmp.eq.s32.totalorder %v474, %v2283
      %vm2292 = vcmp.eq.s32.totalorder %v474, %v2284
      %vm2293 = vcmp.eq.s32.totalorder %v474, %v2285
      %vm2294 = vcmp.eq.s32.totalorder %v474, %v2286
      %vm2295 = vcmp.eq.s32.totalorder %v474, %v2287
      %vm2296 = vcmp.eq.s32.totalorder %v474, %v2288
      %vm2297 = vcmp.eq.s32.totalorder %v474, %v2289
      %v2298 = vsel %vm2290, 2147483647, %v2154
      %v2299 = vsel %vm2291, 2147483647, %v2155
      %v2300 = vsel %vm2292, 2147483647, %v2156
      %v2301 = vsel %vm2293, 2147483647, %v2157
      %v2302 = vsel %vm2294, 2147483647, %v2158
      %v2303 = vsel %vm2295, 2147483647, %v2159
      %v2304 = vsel %vm2296, 2147483647, %v2160
      %v2305 = vsel %vm2297, 2147483647, %v2161
      %v2306 = vsel %vm667, %v2282, %v2162
      %v2307 = vsel %vm667, %v2283, %v2163
      %v2308 = vsel %vm667, %v2284, %v2164
      %v2309 = vsel %vm667, %v2285, %v2165
      %v2310 = vsel %vm667, %v2286, %v2166
      %v2311 = vsel %vm667, %v2287, %v2167
      %v2312 = vsel %vm667, %v2288, %v2168
      %v2313 = vsel %vm667, %v2289, %v2169
      %v2314 = vand.u32 %v2298, 65535
      %v2315 = vshra.s32 %v2298, 16
      %v2316 = vcvt.s32.f32 %v2314
      %v2317 = vcvt.s32.f32 %v2315
      %2318 = vmin.xlane.f32.xlu0 %v2317
      %v2319 = vpop.xlane.xlu0 %2318
      %vm2320 = vcmp.eq.f32.partialorder %v2317, %v2319
      %v2321 = vsel %vm2320, %v2316, inf
      %2322 = vmin.xlane.f32.xlu0 %v2321
      %v2323 = vpop.xlane.xlu0 %2322
      %v2324 = vcvt.f32.s32 %v2323
      %v2325 = vcvt.f32.s32 %v2319
      %v2326 = vshll.u32 %v2325, 16
      %v2327 = vadd.s32 %v2326, %v2324
      %v2328 = vand.u32 %v2299, 65535
      %v2329 = vshra.s32 %v2299, 16
      %v2330 = vcvt.s32.f32 %v2328
      %v2331 = vcvt.s32.f32 %v2329
      %2332 = vmin.xlane.f32.xlu0 %v2331
      %v2333 = vpop.xlane.xlu0 %2332
      %vm2334 = vcmp.eq.f32.partialorder %v2331, %v2333
      %v2335 = vsel %vm2334, %v2330, inf
      %2336 = vmin.xlane.f32.xlu0 %v2335
      %v2337 = vpop.xlane.xlu0 %2336
      %v2338 = vcvt.f32.s32 %v2337
      %v2339 = vcvt.f32.s32 %v2333
      %v2340 = vshll.u32 %v2339, 16
      %v2341 = vadd.s32 %v2340, %v2338
      %v2342 = vand.u32 %v2300, 65535
      %v2343 = vshra.s32 %v2300, 16
      %v2344 = vcvt.s32.f32 %v2342
      %v2345 = vcvt.s32.f32 %v2343
      %2346 = vmin.xlane.f32.xlu0 %v2345
      %v2347 = vpop.xlane.xlu0 %2346
      %vm2348 = vcmp.eq.f32.partialorder %v2345, %v2347
      %v2349 = vsel %vm2348, %v2344, inf
      %2350 = vmin.xlane.f32.xlu0 %v2349
      %v2351 = vpop.xlane.xlu0 %2350
      %v2352 = vcvt.f32.s32 %v2351
      %v2353 = vcvt.f32.s32 %v2347
      %v2354 = vshll.u32 %v2353, 16
      %v2355 = vadd.s32 %v2354, %v2352
      %v2356 = vand.u32 %v2301, 65535
      %v2357 = vshra.s32 %v2301, 16
      %v2358 = vcvt.s32.f32 %v2356
      %v2359 = vcvt.s32.f32 %v2357
      %2360 = vmin.xlane.f32.xlu0 %v2359
      %v2361 = vpop.xlane.xlu0 %2360
      %vm2362 = vcmp.eq.f32.partialorder %v2359, %v2361
      %v2363 = vsel %vm2362, %v2358, inf
      %2364 = vmin.xlane.f32.xlu0 %v2363
      %v2365 = vpop.xlane.xlu0 %2364
      %v2366 = vcvt.f32.s32 %v2365
      %v2367 = vcvt.f32.s32 %v2361
      %v2368 = vshll.u32 %v2367, 16
      %v2369 = vadd.s32 %v2368, %v2366
      %v2370 = vand.u32 %v2302, 65535
      %v2371 = vshra.s32 %v2302, 16
      %v2372 = vcvt.s32.f32 %v2370
      %v2373 = vcvt.s32.f32 %v2371
      %2374 = vmin.xlane.f32.xlu0 %v2373
      %v2375 = vpop.xlane.xlu0 %2374
      %vm2376 = vcmp.eq.f32.partialorder %v2373, %v2375
      %v2377 = vsel %vm2376, %v2372, inf
      %2378 = vmin.xlane.f32.xlu0 %v2377
      %v2379 = vpop.xlane.xlu0 %2378
      %v2380 = vcvt.f32.s32 %v2379
      %v2381 = vcvt.f32.s32 %v2375
      %v2382 = vshll.u32 %v2381, 16
      %v2383 = vadd.s32 %v2382, %v2380
      %v2384 = vand.u32 %v2303, 65535
      %v2385 = vshra.s32 %v2303, 16
      %v2386 = vcvt.s32.f32 %v2384
      %v2387 = vcvt.s32.f32 %v2385
      %2388 = vmin.xlane.f32.xlu0 %v2387
      %v2389 = vpop.xlane.xlu0 %2388
      %vm2390 = vcmp.eq.f32.partialorder %v2387, %v2389
      %v2391 = vsel %vm2390, %v2386, inf
      %2392 = vmin.xlane.f32.xlu0 %v2391
      %v2393 = vpop.xlane.xlu0 %2392
      %v2394 = vcvt.f32.s32 %v2393
      %v2395 = vcvt.f32.s32 %v2389
      %v2396 = vshll.u32 %v2395, 16
      %v2397 = vadd.s32 %v2396, %v2394
      %v2398 = vand.u32 %v2304, 65535
      %v2399 = vshra.s32 %v2304, 16
      %v2400 = vcvt.s32.f32 %v2398
      %v2401 = vcvt.s32.f32 %v2399
      %2402 = vmin.xlane.f32.xlu0 %v2401
      %v2403 = vpop.xlane.xlu0 %2402
      %vm2404 = vcmp.eq.f32.partialorder %v2401, %v2403
      %v2405 = vsel %vm2404, %v2400, inf
      %2406 = vmin.xlane.f32.xlu0 %v2405
      %v2407 = vpop.xlane.xlu0 %2406
      %v2408 = vcvt.f32.s32 %v2407
      %v2409 = vcvt.f32.s32 %v2403
      %v2410 = vshll.u32 %v2409, 16
      %v2411 = vadd.s32 %v2410, %v2408
      %v2412 = vand.u32 %v2305, 65535
      %v2413 = vshra.s32 %v2305, 16
      %v2414 = vcvt.s32.f32 %v2412
      %v2415 = vcvt.s32.f32 %v2413
      %2416 = vmin.xlane.f32.xlu0 %v2415
      %v2417 = vpop.xlane.xlu0 %2416
      %vm2418 = vcmp.eq.f32.partialorder %v2415, %v2417
      %v2419 = vsel %vm2418, %v2414, inf
      %2420 = vmin.xlane.f32.xlu0 %v2419
      %v2421 = vpop.xlane.xlu0 %2420
      %v2422 = vcvt.f32.s32 %v2421
      %v2423 = vcvt.f32.s32 %v2417
      %v2424 = vshll.u32 %v2423, 16
      %v2425 = vadd.s32 %v2424, %v2422
      %v2426 = vand.u32 %v2327, 127
      %v2427 = vand.u32 %v2341, 127
      %v2428 = vand.u32 %v2355, 127
      %v2429 = vand.u32 %v2369, 127
      %v2430 = vand.u32 %v2383, 127
      %v2431 = vand.u32 %v2397, 127
      %v2432 = vand.u32 %v2411, 127
      %v2433 = vand.u32 %v2425, 127
      %vm2434 = vcmp.eq.s32.totalorder %v474, %v2426
      %vm2435 = vcmp.eq.s32.totalorder %v474, %v2427
      %vm2436 = vcmp.eq.s32.totalorder %v474, %v2428
      %vm2437 = vcmp.eq.s32.totalorder %v474, %v2429
      %vm2438 = vcmp.eq.s32.totalorder %v474, %v2430
      %vm2439 = vcmp.eq.s32.totalorder %v474, %v2431
      %vm2440 = vcmp.eq.s32.totalorder %v474, %v2432
      %vm2441 = vcmp.eq.s32.totalorder %v474, %v2433
      %v2442 = vsel %vm2434, 2147483647, %v2298
      %v2443 = vsel %vm2435, 2147483647, %v2299
      %v2444 = vsel %vm2436, 2147483647, %v2300
      %v2445 = vsel %vm2437, 2147483647, %v2301
      %v2446 = vsel %vm2438, 2147483647, %v2302
      %v2447 = vsel %vm2439, 2147483647, %v2303
      %v2448 = vsel %vm2440, 2147483647, %v2304
      %v2449 = vsel %vm2441, 2147483647, %v2305
      %v2450 = vsel %vm711, %v2426, %v2306
      %v2451 = vsel %vm711, %v2427, %v2307
      %v2452 = vsel %vm711, %v2428, %v2308
      %v2453 = vsel %vm711, %v2429, %v2309
      %v2454 = vsel %vm711, %v2430, %v2310
      %v2455 = vsel %vm711, %v2431, %v2311
      %v2456 = vsel %vm711, %v2432, %v2312
      %v2457 = vsel %vm711, %v2433, %v2313
      %v2458 = vand.u32 %v2442, 65535
      %v2459 = vshra.s32 %v2442, 16
      %v2460 = vcvt.s32.f32 %v2458
      %v2461 = vcvt.s32.f32 %v2459
      %2462 = vmin.xlane.f32.xlu0 %v2461
      %v2463 = vpop.xlane.xlu0 %2462
      %vm2464 = vcmp.eq.f32.partialorder %v2461, %v2463
      %v2465 = vsel %vm2464, %v2460, inf
      %2466 = vmin.xlane.f32.xlu0 %v2465
      %v2467 = vpop.xlane.xlu0 %2466
      %v2468 = vcvt.f32.s32 %v2467
      %v2469 = vcvt.f32.s32 %v2463
      %v2470 = vshll.u32 %v2469, 16
      %v2471 = vadd.s32 %v2470, %v2468
      %v2472 = vand.u32 %v2443, 65535
      %v2473 = vshra.s32 %v2443, 16
      %v2474 = vcvt.s32.f32 %v2472
      %v2475 = vcvt.s32.f32 %v2473
      %2476 = vmin.xlane.f32.xlu0 %v2475
      %v2477 = vpop.xlane.xlu0 %2476
      %vm2478 = vcmp.eq.f32.partialorder %v2475, %v2477
      %v2479 = vsel %vm2478, %v2474, inf
      %2480 = vmin.xlane.f32.xlu0 %v2479
      %v2481 = vpop.xlane.xlu0 %2480
      %v2482 = vcvt.f32.s32 %v2481
      %v2483 = vcvt.f32.s32 %v2477
      %v2484 = vshll.u32 %v2483, 16
      %v2485 = vadd.s32 %v2484, %v2482
      %v2486 = vand.u32 %v2444, 65535
      %v2487 = vshra.s32 %v2444, 16
      %v2488 = vcvt.s32.f32 %v2486
      %v2489 = vcvt.s32.f32 %v2487
      %2490 = vmin.xlane.f32.xlu0 %v2489
      %v2491 = vpop.xlane.xlu0 %2490
      %vm2492 = vcmp.eq.f32.partialorder %v2489, %v2491
      %v2493 = vsel %vm2492, %v2488, inf
      %2494 = vmin.xlane.f32.xlu0 %v2493
      %v2495 = vpop.xlane.xlu0 %2494
      %v2496 = vcvt.f32.s32 %v2495
      %v2497 = vcvt.f32.s32 %v2491
      %v2498 = vshll.u32 %v2497, 16
      %v2499 = vadd.s32 %v2498, %v2496
      %v2500 = vand.u32 %v2445, 65535
      %v2501 = vshra.s32 %v2445, 16
      %v2502 = vcvt.s32.f32 %v2500
      %v2503 = vcvt.s32.f32 %v2501
      %2504 = vmin.xlane.f32.xlu0 %v2503
      %v2505 = vpop.xlane.xlu0 %2504
      %vm2506 = vcmp.eq.f32.partialorder %v2503, %v2505
      %v2507 = vsel %vm2506, %v2502, inf
      %2508 = vmin.xlane.f32.xlu0 %v2507
      %v2509 = vpop.xlane.xlu0 %2508
      %v2510 = vcvt.f32.s32 %v2509
      %v2511 = vcvt.f32.s32 %v2505
      %v2512 = vshll.u32 %v2511, 16
      %v2513 = vadd.s32 %v2512, %v2510
      %v2514 = vand.u32 %v2446, 65535
      %v2515 = vshra.s32 %v2446, 16
      %v2516 = vcvt.s32.f32 %v2514
      %v2517 = vcvt.s32.f32 %v2515
      %2518 = vmin.xlane.f32.xlu0 %v2517
      %v2519 = vpop.xlane.xlu0 %2518
      %vm2520 = vcmp.eq.f32.partialorder %v2517, %v2519
      %v2521 = vsel %vm2520, %v2516, inf
      %2522 = vmin.xlane.f32.xlu0 %v2521
      %v2523 = vpop.xlane.xlu0 %2522
      %v2524 = vcvt.f32.s32 %v2523
      %v2525 = vcvt.f32.s32 %v2519
      %v2526 = vshll.u32 %v2525, 16
      %v2527 = vadd.s32 %v2526, %v2524
      %v2528 = vand.u32 %v2447, 65535
      %v2529 = vshra.s32 %v2447, 16
      %v2530 = vcvt.s32.f32 %v2528
      %v2531 = vcvt.s32.f32 %v2529
      %2532 = vmin.xlane.f32.xlu0 %v2531
      %v2533 = vpop.xlane.xlu0 %2532
      %vm2534 = vcmp.eq.f32.partialorder %v2531, %v2533
      %v2535 = vsel %vm2534, %v2530, inf
      %2536 = vmin.xlane.f32.xlu0 %v2535
      %v2537 = vpop.xlane.xlu0 %2536
      %v2538 = vcvt.f32.s32 %v2537
      %v2539 = vcvt.f32.s32 %v2533
      %v2540 = vshll.u32 %v2539, 16
      %v2541 = vadd.s32 %v2540, %v2538
      %v2542 = vand.u32 %v2448, 65535
      %v2543 = vshra.s32 %v2448, 16
      %v2544 = vcvt.s32.f32 %v2542
      %v2545 = vcvt.s32.f32 %v2543
      %2546 = vmin.xlane.f32.xlu0 %v2545
      %v2547 = vpop.xlane.xlu0 %2546
      %vm2548 = vcmp.eq.f32.partialorder %v2545, %v2547
      %v2549 = vsel %vm2548, %v2544, inf
      %2550 = vmin.xlane.f32.xlu0 %v2549
      %v2551 = vpop.xlane.xlu0 %2550
      %v2552 = vcvt.f32.s32 %v2551
      %v2553 = vcvt.f32.s32 %v2547
      %v2554 = vshll.u32 %v2553, 16
      %v2555 = vadd.s32 %v2554, %v2552
      %v2556 = vand.u32 %v2449, 65535
      %v2557 = vshra.s32 %v2449, 16
      %v2558 = vcvt.s32.f32 %v2556
      %v2559 = vcvt.s32.f32 %v2557
      %2560 = vmin.xlane.f32.xlu0 %v2559
      %v2561 = vpop.xlane.xlu0 %2560
      %vm2562 = vcmp.eq.f32.partialorder %v2559, %v2561
      %v2563 = vsel %vm2562, %v2558, inf
      %2564 = vmin.xlane.f32.xlu0 %v2563
      %v2565 = vpop.xlane.xlu0 %2564
      %v2566 = vcvt.f32.s32 %v2565
      %v2567 = vcvt.f32.s32 %v2561
      %v2568 = vshll.u32 %v2567, 16
      %v2569 = vadd.s32 %v2568, %v2566
      %v2570 = vand.u32 %v2471, 127
      %v2571 = vand.u32 %v2485, 127
      %v2572 = vand.u32 %v2499, 127
      %v2573 = vand.u32 %v2513, 127
      %v2574 = vand.u32 %v2527, 127
      %v2575 = vand.u32 %v2541, 127
      %v2576 = vand.u32 %v2555, 127
      %v2577 = vand.u32 %v2569, 127
      %vm2578 = vcmp.eq.s32.totalorder %v474, %v2570
      %vm2579 = vcmp.eq.s32.totalorder %v474, %v2571
      %vm2580 = vcmp.eq.s32.totalorder %v474, %v2572
      %vm2581 = vcmp.eq.s32.totalorder %v474, %v2573
      %vm2582 = vcmp.eq.s32.totalorder %v474, %v2574
      %vm2583 = vcmp.eq.s32.totalorder %v474, %v2575
      %vm2584 = vcmp.eq.s32.totalorder %v474, %v2576
      %vm2585 = vcmp.eq.s32.totalorder %v474, %v2577
      %v2586 = vsel %vm2578, 2147483647, %v2442
      %v2587 = vsel %vm2579, 2147483647, %v2443
      %v2588 = vsel %vm2580, 2147483647, %v2444
      %v2589 = vsel %vm2581, 2147483647, %v2445
      %v2590 = vsel %vm2582, 2147483647, %v2446
      %v2591 = vsel %vm2583, 2147483647, %v2447
      %v2592 = vsel %vm2584, 2147483647, %v2448
      %v2593 = vsel %vm2585, 2147483647, %v2449
      %v2594 = vsel %vm755, %v2570, %v2450
      %v2595 = vsel %vm755, %v2571, %v2451
      %v2596 = vsel %vm755, %v2572, %v2452
      %v2597 = vsel %vm755, %v2573, %v2453
      %v2598 = vsel %vm755, %v2574, %v2454
      %v2599 = vsel %vm755, %v2575, %v2455
      %v2600 = vsel %vm755, %v2576, %v2456
      %v2601 = vsel %vm755, %v2577, %v2457
      %v2602 = vand.u32 %v2586, 65535
      %v2603 = vshra.s32 %v2586, 16
      %v2604 = vcvt.s32.f32 %v2602
      %v2605 = vcvt.s32.f32 %v2603
      %2606 = vmin.xlane.f32.xlu0 %v2605
      %v2607 = vpop.xlane.xlu0 %2606
      %vm2608 = vcmp.eq.f32.partialorder %v2605, %v2607
      %v2609 = vsel %vm2608, %v2604, inf
      %2610 = vmin.xlane.f32.xlu0 %v2609
      %v2611 = vpop.xlane.xlu0 %2610
      %v2612 = vcvt.f32.s32 %v2611
      %v2613 = vcvt.f32.s32 %v2607
      %v2614 = vshll.u32 %v2613, 16
      %v2615 = vadd.s32 %v2614, %v2612
      %v2616 = vand.u32 %v2587, 65535
      %v2617 = vshra.s32 %v2587, 16
      %v2618 = vcvt.s32.f32 %v2616
      %v2619 = vcvt.s32.f32 %v2617
      %2620 = vmin.xlane.f32.xlu0 %v2619
      %v2621 = vpop.xlane.xlu0 %2620
      %vm2622 = vcmp.eq.f32.partialorder %v2619, %v2621
      %v2623 = vsel %vm2622, %v2618, inf
      %2624 = vmin.xlane.f32.xlu0 %v2623
      %v2625 = vpop.xlane.xlu0 %2624
      %v2626 = vcvt.f32.s32 %v2625
      %v2627 = vcvt.f32.s32 %v2621
      %v2628 = vshll.u32 %v2627, 16
      %v2629 = vadd.s32 %v2628, %v2626
      %v2630 = vand.u32 %v2588, 65535
      %v2631 = vshra.s32 %v2588, 16
      %v2632 = vcvt.s32.f32 %v2630
      %v2633 = vcvt.s32.f32 %v2631
      %2634 = vmin.xlane.f32.xlu0 %v2633
      %v2635 = vpop.xlane.xlu0 %2634
      %vm2636 = vcmp.eq.f32.partialorder %v2633, %v2635
      %v2637 = vsel %vm2636, %v2632, inf
      %2638 = vmin.xlane.f32.xlu0 %v2637
      %v2639 = vpop.xlane.xlu0 %2638
      %v2640 = vcvt.f32.s32 %v2639
      %v2641 = vcvt.f32.s32 %v2635
      %v2642 = vshll.u32 %v2641, 16
      %v2643 = vadd.s32 %v2642, %v2640
      %v2644 = vand.u32 %v2589, 65535
      %v2645 = vshra.s32 %v2589, 16
      %v2646 = vcvt.s32.f32 %v2644
      %v2647 = vcvt.s32.f32 %v2645
      %2648 = vmin.xlane.f32.xlu0 %v2647
      %v2649 = vpop.xlane.xlu0 %2648
      %vm2650 = vcmp.eq.f32.partialorder %v2647, %v2649
      %v2651 = vsel %vm2650, %v2646, inf
      %2652 = vmin.xlane.f32.xlu0 %v2651
      %v2653 = vpop.xlane.xlu0 %2652
      %v2654 = vcvt.f32.s32 %v2653
      %v2655 = vcvt.f32.s32 %v2649
      %v2656 = vshll.u32 %v2655, 16
      %v2657 = vadd.s32 %v2656, %v2654
      %v2658 = vand.u32 %v2590, 65535
      %v2659 = vshra.s32 %v2590, 16
      %v2660 = vcvt.s32.f32 %v2658
      %v2661 = vcvt.s32.f32 %v2659
      %2662 = vmin.xlane.f32.xlu0 %v2661
      %v2663 = vpop.xlane.xlu0 %2662
      %vm2664 = vcmp.eq.f32.partialorder %v2661, %v2663
      %v2665 = vsel %vm2664, %v2660, inf
      %2666 = vmin.xlane.f32.xlu0 %v2665
      %v2667 = vpop.xlane.xlu0 %2666
      %v2668 = vcvt.f32.s32 %v2667
      %v2669 = vcvt.f32.s32 %v2663
      %v2670 = vshll.u32 %v2669, 16
      %v2671 = vadd.s32 %v2670, %v2668
      %v2672 = vand.u32 %v2591, 65535
      %v2673 = vshra.s32 %v2591, 16
      %v2674 = vcvt.s32.f32 %v2672
      %v2675 = vcvt.s32.f32 %v2673
      %2676 = vmin.xlane.f32.xlu0 %v2675
      %v2677 = vpop.xlane.xlu0 %2676
      %vm2678 = vcmp.eq.f32.partialorder %v2675, %v2677
      %v2679 = vsel %vm2678, %v2674, inf
      %2680 = vmin.xlane.f32.xlu0 %v2679
      %v2681 = vpop.xlane.xlu0 %2680
      %v2682 = vcvt.f32.s32 %v2681
      %v2683 = vcvt.f32.s32 %v2677
      %v2684 = vshll.u32 %v2683, 16
      %v2685 = vadd.s32 %v2684, %v2682
      %v2686 = vand.u32 %v2592, 65535
      %v2687 = vshra.s32 %v2592, 16
      %v2688 = vcvt.s32.f32 %v2686
      %v2689 = vcvt.s32.f32 %v2687
      %2690 = vmin.xlane.f32.xlu0 %v2689
      %v2691 = vpop.xlane.xlu0 %2690
      %vm2692 = vcmp.eq.f32.partialorder %v2689, %v2691
      %v2693 = vsel %vm2692, %v2688, inf
      %2694 = vmin.xlane.f32.xlu0 %v2693
      %v2695 = vpop.xlane.xlu0 %2694
      %v2696 = vcvt.f32.s32 %v2695
      %v2697 = vcvt.f32.s32 %v2691
      %v2698 = vshll.u32 %v2697, 16
      %v2699 = vadd.s32 %v2698, %v2696
      %v2700 = vand.u32 %v2593, 65535
      %v2701 = vshra.s32 %v2593, 16
      %v2702 = vcvt.s32.f32 %v2700
      %v2703 = vcvt.s32.f32 %v2701
      %2704 = vmin.xlane.f32.xlu0 %v2703
      %v2705 = vpop.xlane.xlu0 %2704
      %vm2706 = vcmp.eq.f32.partialorder %v2703, %v2705
      %v2707 = vsel %vm2706, %v2702, inf
      %2708 = vmin.xlane.f32.xlu0 %v2707
      %v2709 = vpop.xlane.xlu0 %2708
      %v2710 = vcvt.f32.s32 %v2709
      %v2711 = vcvt.f32.s32 %v2705
      %v2712 = vshll.u32 %v2711, 16
      %v2713 = vadd.s32 %v2712, %v2710
      %v2714 = vand.u32 %v2615, 127
      %v2715 = vand.u32 %v2629, 127
      %v2716 = vand.u32 %v2643, 127
      %v2717 = vand.u32 %v2657, 127
      %v2718 = vand.u32 %v2671, 127
      %v2719 = vand.u32 %v2685, 127
      %v2720 = vand.u32 %v2699, 127
      %v2721 = vand.u32 %v2713, 127
      %v2722 = vsel %vm799, %v2714, %v2594
      %v2723 = vsel %vm799, %v2715, %v2595
      %v2724 = vsel %vm799, %v2716, %v2596
      %v2725 = vsel %vm799, %v2717, %v2597
      %v2726 = vsel %vm799, %v2718, %v2598
      %v2727 = vsel %vm799, %v2719, %v2599
      %v2728 = vsel %vm799, %v2720, %v2600
      %v2729 = vsel %vm799, %v2721, %v2601
      %v2730 = vlaneseq
      %v2731 = vshrl.u32 %v2730, 7
      %v2732 = vsub.s32 0, %v2731
      %v2733 = vrot.slane %v2722, %v2732
      %2735 = vbcast.lane.b32.xlu0 %v2733, 256
      %v2736 = vpop.permute.xlu0 %2735
      %v2737 = vlaneseq
      %v2738 = vshrl.u32 %v2737, 7
      %v2739 = vsub.s32 1, %v2738
      %v2740 = vrot.slane %v2722, %v2739
      %2742 = vbcast.lane.b32.xlu0 %v2740, 256
      %v2743 = vpop.permute.xlu0 %2742
      %v2744 = vlaneseq
      %v2745 = vshrl.u32 %v2744, 7
      %v2746 = vsub.s32 2, %v2745
      %v2747 = vrot.slane %v2722, %v2746
      %2749 = vbcast.lane.b32.xlu0 %v2747, 256
      %v2750 = vpop.permute.xlu0 %2749
      %v2751 = vlaneseq
      %v2752 = vshrl.u32 %v2751, 7
      %v2753 = vsub.s32 3, %v2752
      %v2754 = vrot.slane %v2722, %v2753
      %2756 = vbcast.lane.b32.xlu0 %v2754, 256
      %v2757 = vpop.permute.xlu0 %2756
      %v2758 = vlaneseq
      %v2759 = vshrl.u32 %v2758, 7
      %v2760 = vsub.s32 4, %v2759
      %v2761 = vrot.slane %v2722, %v2760
      %2763 = vbcast.lane.b32.xlu0 %v2761, 256
      %v2764 = vpop.permute.xlu0 %2763
      %v2765 = vlaneseq
      %v2766 = vshrl.u32 %v2765, 7
      %v2767 = vsub.s32 5, %v2766
      %v2768 = vrot.slane %v2722, %v2767
      %2770 = vbcast.lane.b32.xlu0 %v2768, 256
      %v2771 = vpop.permute.xlu0 %2770
      %v2772 = vlaneseq
      %v2773 = vshrl.u32 %v2772, 7
      %v2774 = vsub.s32 6, %v2773
      %v2775 = vrot.slane %v2722, %v2774
      %2777 = vbcast.lane.b32.xlu0 %v2775, 256
      %v2778 = vpop.permute.xlu0 %2777
      %v2779 = vlaneseq
      %v2780 = vshrl.u32 %v2779, 7
      %v2781 = vsub.s32 7, %v2780
      %v2782 = vrot.slane %v2722, %v2781
      %2784 = vbcast.lane.b32.xlu0 %v2782, 256
      %v2785 = vpop.permute.xlu0 %2784
      %v2786 = vlaneseq
      %v2787 = vshrl.u32 %v2786, 7
      %v2788 = vsub.s32 0, %v2787
      %v2789 = vrot.slane %v2723, %v2788
      %2791 = vbcast.lane.b32.xlu0 %v2789, 256
      %v2792 = vpop.permute.xlu0 %2791
      %v2793 = vlaneseq
      %v2794 = vshrl.u32 %v2793, 7
      %v2795 = vsub.s32 1, %v2794
      %v2796 = vrot.slane %v2723, %v2795
      %2798 = vbcast.lane.b32.xlu0 %v2796, 256
      %v2799 = vpop.permute.xlu0 %2798
      %v2800 = vlaneseq
      %v2801 = vshrl.u32 %v2800, 7
      %v2802 = vsub.s32 2, %v2801
      %v2803 = vrot.slane %v2723, %v2802
      %2805 = vbcast.lane.b32.xlu0 %v2803, 256
      %v2806 = vpop.permute.xlu0 %2805
      %v2807 = vlaneseq
      %v2808 = vshrl.u32 %v2807, 7
      %v2809 = vsub.s32 3, %v2808
      %v2810 = vrot.slane %v2723, %v2809
      %2812 = vbcast.lane.b32.xlu0 %v2810, 256
      %v2813 = vpop.permute.xlu0 %2812
      %v2814 = vlaneseq
      %v2815 = vshrl.u32 %v2814, 7
      %v2816 = vsub.s32 4, %v2815
      %v2817 = vrot.slane %v2723, %v2816
      %2819 = vbcast.lane.b32.xlu0 %v2817, 256
      %v2820 = vpop.permute.xlu0 %2819
      %v2821 = vlaneseq
      %v2822 = vshrl.u32 %v2821, 7
      %v2823 = vsub.s32 5, %v2822
      %v2824 = vrot.slane %v2723, %v2823
      %2826 = vbcast.lane.b32.xlu0 %v2824, 256
      %v2827 = vpop.permute.xlu0 %2826
      %v2828 = vlaneseq
      %v2829 = vshrl.u32 %v2828, 7
      %v2830 = vsub.s32 6, %v2829
      %v2831 = vrot.slane %v2723, %v2830
      %2833 = vbcast.lane.b32.xlu0 %v2831, 256
      %v2834 = vpop.permute.xlu0 %2833
      %v2835 = vlaneseq
      %v2836 = vshrl.u32 %v2835, 7
      %v2837 = vsub.s32 7, %v2836
      %v2838 = vrot.slane %v2723, %v2837
      %2840 = vbcast.lane.b32.xlu0 %v2838, 256
      %v2841 = vpop.permute.xlu0 %2840
      %v2842 = vlaneseq
      %v2843 = vshrl.u32 %v2842, 7
      %v2844 = vsub.s32 0, %v2843
      %v2845 = vrot.slane %v2724, %v2844
      %2847 = vbcast.lane.b32.xlu0 %v2845, 256
      %v2848 = vpop.permute.xlu0 %2847
      %v2849 = vlaneseq
      %v2850 = vshrl.u32 %v2849, 7
      %v2851 = vsub.s32 1, %v2850
      %v2852 = vrot.slane %v2724, %v2851
      %2854 = vbcast.lane.b32.xlu0 %v2852, 256
      %v2855 = vpop.permute.xlu0 %2854
      %v2856 = vlaneseq
      %v2857 = vshrl.u32 %v2856, 7
      %v2858 = vsub.s32 2, %v2857
      %v2859 = vrot.slane %v2724, %v2858
      %2861 = vbcast.lane.b32.xlu0 %v2859, 256
      %v2862 = vpop.permute.xlu0 %2861
      %v2863 = vlaneseq
      %v2864 = vshrl.u32 %v2863, 7
      %v2865 = vsub.s32 3, %v2864
      %v2866 = vrot.slane %v2724, %v2865
      %2868 = vbcast.lane.b32.xlu0 %v2866, 256
      %v2869 = vpop.permute.xlu0 %2868
      %v2870 = vlaneseq
      %v2871 = vshrl.u32 %v2870, 7
      %v2872 = vsub.s32 4, %v2871
      %v2873 = vrot.slane %v2724, %v2872
      %2875 = vbcast.lane.b32.xlu0 %v2873, 256
      %v2876 = vpop.permute.xlu0 %2875
      %v2877 = vlaneseq
      %v2878 = vshrl.u32 %v2877, 7
      %v2879 = vsub.s32 5, %v2878
      %v2880 = vrot.slane %v2724, %v2879
      %2882 = vbcast.lane.b32.xlu0 %v2880, 256
      %v2883 = vpop.permute.xlu0 %2882
      %v2884 = vlaneseq
      %v2885 = vshrl.u32 %v2884, 7
      %v2886 = vsub.s32 6, %v2885
      %v2887 = vrot.slane %v2724, %v2886
      %2889 = vbcast.lane.b32.xlu0 %v2887, 256
      %v2890 = vpop.permute.xlu0 %2889
      %v2891 = vlaneseq
      %v2892 = vshrl.u32 %v2891, 7
      %v2893 = vsub.s32 7, %v2892
      %v2894 = vrot.slane %v2724, %v2893
      %2896 = vbcast.lane.b32.xlu0 %v2894, 256
      %v2897 = vpop.permute.xlu0 %2896
      %v2898 = vlaneseq
      %v2899 = vshrl.u32 %v2898, 7
      %v2900 = vsub.s32 0, %v2899
      %v2901 = vrot.slane %v2725, %v2900
      %2903 = vbcast.lane.b32.xlu0 %v2901, 256
      %v2904 = vpop.permute.xlu0 %2903
      %v2905 = vlaneseq
      %v2906 = vshrl.u32 %v2905, 7
      %v2907 = vsub.s32 1, %v2906
      %v2908 = vrot.slane %v2725, %v2907
      %2910 = vbcast.lane.b32.xlu0 %v2908, 256
      %v2911 = vpop.permute.xlu0 %2910
      %v2912 = vlaneseq
      %v2913 = vshrl.u32 %v2912, 7
      %v2914 = vsub.s32 2, %v2913
      %v2915 = vrot.slane %v2725, %v2914
      %2917 = vbcast.lane.b32.xlu0 %v2915, 256
      %v2918 = vpop.permute.xlu0 %2917
      %v2919 = vlaneseq
      %v2920 = vshrl.u32 %v2919, 7
      %v2921 = vsub.s32 3, %v2920
      %v2922 = vrot.slane %v2725, %v2921
      %2924 = vbcast.lane.b32.xlu0 %v2922, 256
      %v2925 = vpop.permute.xlu0 %2924
      %v2926 = vlaneseq
      %v2927 = vshrl.u32 %v2926, 7
      %v2928 = vsub.s32 4, %v2927
      %v2929 = vrot.slane %v2725, %v2928
      %2931 = vbcast.lane.b32.xlu0 %v2929, 256
      %v2932 = vpop.permute.xlu0 %2931
      %v2933 = vlaneseq
      %v2934 = vshrl.u32 %v2933, 7
      %v2935 = vsub.s32 5, %v2934
      %v2936 = vrot.slane %v2725, %v2935
      %2938 = vbcast.lane.b32.xlu0 %v2936, 256
      %v2939 = vpop.permute.xlu0 %2938
      %v2940 = vlaneseq
      %v2941 = vshrl.u32 %v2940, 7
      %v2942 = vsub.s32 6, %v2941
      %v2943 = vrot.slane %v2725, %v2942
      %2945 = vbcast.lane.b32.xlu0 %v2943, 256
      %v2946 = vpop.permute.xlu0 %2945
      %v2947 = vlaneseq
      %v2948 = vshrl.u32 %v2947, 7
      %v2949 = vsub.s32 7, %v2948
      %v2950 = vrot.slane %v2725, %v2949
      %2952 = vbcast.lane.b32.xlu0 %v2950, 256
      %v2953 = vpop.permute.xlu0 %2952
      %v2954 = vlaneseq
      %v2955 = vshrl.u32 %v2954, 7
      %v2956 = vsub.s32 0, %v2955
      %v2957 = vrot.slane %v2726, %v2956
      %2959 = vbcast.lane.b32.xlu0 %v2957, 256
      %v2960 = vpop.permute.xlu0 %2959
      %v2961 = vlaneseq
      %v2962 = vshrl.u32 %v2961, 7
      %v2963 = vsub.s32 1, %v2962
      %v2964 = vrot.slane %v2726, %v2963
      %2966 = vbcast.lane.b32.xlu0 %v2964, 256
      %v2967 = vpop.permute.xlu0 %2966
      %v2968 = vlaneseq
      %v2969 = vshrl.u32 %v2968, 7
      %v2970 = vsub.s32 2, %v2969
      %v2971 = vrot.slane %v2726, %v2970
      %2973 = vbcast.lane.b32.xlu0 %v2971, 256
      %v2974 = vpop.permute.xlu0 %2973
      %v2975 = vlaneseq
      %v2976 = vshrl.u32 %v2975, 7
      %v2977 = vsub.s32 3, %v2976
      %v2978 = vrot.slane %v2726, %v2977
      %2980 = vbcast.lane.b32.xlu0 %v2978, 256
      %v2981 = vpop.permute.xlu0 %2980
      %v2982 = vlaneseq
      %v2983 = vshrl.u32 %v2982, 7
      %v2984 = vsub.s32 4, %v2983
      %v2985 = vrot.slane %v2726, %v2984
      %2987 = vbcast.lane.b32.xlu0 %v2985, 256
      %v2988 = vpop.permute.xlu0 %2987
      %v2989 = vlaneseq
      %v2990 = vshrl.u32 %v2989, 7
      %v2991 = vsub.s32 5, %v2990
      %v2992 = vrot.slane %v2726, %v2991
      %2994 = vbcast.lane.b32.xlu0 %v2992, 256
      %v2995 = vpop.permute.xlu0 %2994
      %v2996 = vlaneseq
      %v2997 = vshrl.u32 %v2996, 7
      %v2998 = vsub.s32 6, %v2997
      %v2999 = vrot.slane %v2726, %v2998
      %3001 = vbcast.lane.b32.xlu0 %v2999, 256
      %v3002 = vpop.permute.xlu0 %3001
      %v3003 = vlaneseq
      %v3004 = vshrl.u32 %v3003, 7
      %v3005 = vsub.s32 7, %v3004
      %v3006 = vrot.slane %v2726, %v3005
      %3008 = vbcast.lane.b32.xlu0 %v3006, 256
      %v3009 = vpop.permute.xlu0 %3008
      %v3010 = vlaneseq
      %v3011 = vshrl.u32 %v3010, 7
      %v3012 = vsub.s32 0, %v3011
      %v3013 = vrot.slane %v2727, %v3012
      %3015 = vbcast.lane.b32.xlu0 %v3013, 256
      %v3016 = vpop.permute.xlu0 %3015
      %v3017 = vlaneseq
      %v3018 = vshrl.u32 %v3017, 7
      %v3019 = vsub.s32 1, %v3018
      %v3020 = vrot.slane %v2727, %v3019
      %3022 = vbcast.lane.b32.xlu0 %v3020, 256
      %v3023 = vpop.permute.xlu0 %3022
      %v3024 = vlaneseq
      %v3025 = vshrl.u32 %v3024, 7
      %v3026 = vsub.s32 2, %v3025
      %v3027 = vrot.slane %v2727, %v3026
      %3029 = vbcast.lane.b32.xlu0 %v3027, 256
      %v3030 = vpop.permute.xlu0 %3029
      %v3031 = vlaneseq
      %v3032 = vshrl.u32 %v3031, 7
      %v3033 = vsub.s32 3, %v3032
      %v3034 = vrot.slane %v2727, %v3033
      %3036 = vbcast.lane.b32.xlu0 %v3034, 256
      %v3037 = vpop.permute.xlu0 %3036
      %v3038 = vlaneseq
      %v3039 = vshrl.u32 %v3038, 7
      %v3040 = vsub.s32 4, %v3039
      %v3041 = vrot.slane %v2727, %v3040
      %3043 = vbcast.lane.b32.xlu0 %v3041, 256
      %v3044 = vpop.permute.xlu0 %3043
      %v3045 = vlaneseq
      %v3046 = vshrl.u32 %v3045, 7
      %v3047 = vsub.s32 5, %v3046
      %v3048 = vrot.slane %v2727, %v3047
      %3050 = vbcast.lane.b32.xlu0 %v3048, 256
      %v3051 = vpop.permute.xlu0 %3050
      %v3052 = vlaneseq
      %v3053 = vshrl.u32 %v3052, 7
      %v3054 = vsub.s32 6, %v3053
      %v3055 = vrot.slane %v2727, %v3054
      %3057 = vbcast.lane.b32.xlu0 %v3055, 256
      %v3058 = vpop.permute.xlu0 %3057
      %v3059 = vlaneseq
      %v3060 = vshrl.u32 %v3059, 7
      %v3061 = vsub.s32 7, %v3060
      %v3062 = vrot.slane %v2727, %v3061
      %3064 = vbcast.lane.b32.xlu0 %v3062, 256
      %v3065 = vpop.permute.xlu0 %3064
      %v3066 = vlaneseq
      %v3067 = vshrl.u32 %v3066, 7
      %v3068 = vsub.s32 0, %v3067
      %v3069 = vrot.slane %v2728, %v3068
      %3071 = vbcast.lane.b32.xlu0 %v3069, 256
      %v3072 = vpop.permute.xlu0 %3071
      %v3073 = vlaneseq
      %v3074 = vshrl.u32 %v3073, 7
      %v3075 = vsub.s32 1, %v3074
      %v3076 = vrot.slane %v2728, %v3075
      %3078 = vbcast.lane.b32.xlu0 %v3076, 256
      %v3079 = vpop.permute.xlu0 %3078
      %v3080 = vlaneseq
      %v3081 = vshrl.u32 %v3080, 7
      %v3082 = vsub.s32 2, %v3081
      %v3083 = vrot.slane %v2728, %v3082
      %3085 = vbcast.lane.b32.xlu0 %v3083, 256
      %v3086 = vpop.permute.xlu0 %3085
      %v3087 = vlaneseq
      %v3088 = vshrl.u32 %v3087, 7
      %v3089 = vsub.s32 3, %v3088
      %v3090 = vrot.slane %v2728, %v3089
      %3092 = vbcast.lane.b32.xlu0 %v3090, 256
      %v3093 = vpop.permute.xlu0 %3092
      %v3094 = vlaneseq
      %v3095 = vshrl.u32 %v3094, 7
      %v3096 = vsub.s32 4, %v3095
      %v3097 = vrot.slane %v2728, %v3096
      %3099 = vbcast.lane.b32.xlu0 %v3097, 256
      %v3100 = vpop.permute.xlu0 %3099
      %v3101 = vlaneseq
      %v3102 = vshrl.u32 %v3101, 7
      %v3103 = vsub.s32 5, %v3102
      %v3104 = vrot.slane %v2728, %v3103
      %3106 = vbcast.lane.b32.xlu0 %v3104, 256
      %v3107 = vpop.permute.xlu0 %3106
      %v3108 = vlaneseq
      %v3109 = vshrl.u32 %v3108, 7
      %v3110 = vsub.s32 6, %v3109
      %v3111 = vrot.slane %v2728, %v3110
      %3113 = vbcast.lane.b32.xlu0 %v3111, 256
      %v3114 = vpop.permute.xlu0 %3113
      %v3115 = vlaneseq
      %v3116 = vshrl.u32 %v3115, 7
      %v3117 = vsub.s32 7, %v3116
      %v3118 = vrot.slane %v2728, %v3117
      %3120 = vbcast.lane.b32.xlu0 %v3118, 256
      %v3121 = vpop.permute.xlu0 %3120
      %v3122 = vlaneseq
      %v3123 = vshrl.u32 %v3122, 7
      %v3124 = vsub.s32 0, %v3123
      %v3125 = vrot.slane %v2729, %v3124
      %3127 = vbcast.lane.b32.xlu0 %v3125, 256
      %v3128 = vpop.permute.xlu0 %3127
      %v3129 = vlaneseq
      %v3130 = vshrl.u32 %v3129, 7
      %v3131 = vsub.s32 1, %v3130
      %v3132 = vrot.slane %v2729, %v3131
      %3134 = vbcast.lane.b32.xlu0 %v3132, 256
      %v3135 = vpop.permute.xlu0 %3134
      %v3136 = vlaneseq
      %v3137 = vshrl.u32 %v3136, 7
      %v3138 = vsub.s32 2, %v3137
      %v3139 = vrot.slane %v2729, %v3138
      %3141 = vbcast.lane.b32.xlu0 %v3139, 256
      %v3142 = vpop.permute.xlu0 %3141
      %v3143 = vlaneseq
      %v3144 = vshrl.u32 %v3143, 7
      %v3145 = vsub.s32 3, %v3144
      %v3146 = vrot.slane %v2729, %v3145
      %3148 = vbcast.lane.b32.xlu0 %v3146, 256
      %v3149 = vpop.permute.xlu0 %3148
      %v3150 = vlaneseq
      %v3151 = vshrl.u32 %v3150, 7
      %v3152 = vsub.s32 4, %v3151
      %v3153 = vrot.slane %v2729, %v3152
      %3155 = vbcast.lane.b32.xlu0 %v3153, 256
      %v3156 = vpop.permute.xlu0 %3155
      %v3157 = vlaneseq
      %v3158 = vshrl.u32 %v3157, 7
      %v3159 = vsub.s32 5, %v3158
      %v3160 = vrot.slane %v2729, %v3159
      %3162 = vbcast.lane.b32.xlu0 %v3160, 256
      %v3163 = vpop.permute.xlu0 %3162
      %v3164 = vlaneseq
      %v3165 = vshrl.u32 %v3164, 7
      %v3166 = vsub.s32 6, %v3165
      %v3167 = vrot.slane %v2729, %v3166
      %3169 = vbcast.lane.b32.xlu0 %v3167, 256
      %v3170 = vpop.permute.xlu0 %3169
      %v3171 = vlaneseq
      %v3172 = vshrl.u32 %v3171, 7
      %v3173 = vsub.s32 7, %v3172
      %v3174 = vrot.slane %v2729, %v3173
      %3176 = vbcast.lane.b32.xlu0 %v3174, 256
      %v3177 = vpop.permute.xlu0 %3176
      %vm3178 = vcmp.eq.s32.totalorder %v474, %v2736
      %vm3179 = vcmp.eq.s32.totalorder %v474, %v2743
      %vm3180 = vcmp.eq.s32.totalorder %v474, %v2750
      %vm3181 = vcmp.eq.s32.totalorder %v474, %v2757
      %vm3182 = vcmp.eq.s32.totalorder %v474, %v2764
      %vm3183 = vcmp.eq.s32.totalorder %v474, %v2771
      %vm3184 = vcmp.eq.s32.totalorder %v474, %v2778
      %vm3185 = vcmp.eq.s32.totalorder %v474, %v2785
      %vm3186 = vcmp.eq.s32.totalorder %v474, %v2792
      %vm3187 = vcmp.eq.s32.totalorder %v474, %v2799
      %vm3188 = vcmp.eq.s32.totalorder %v474, %v2806
      %vm3189 = vcmp.eq.s32.totalorder %v474, %v2813
      %vm3190 = vcmp.eq.s32.totalorder %v474, %v2820
      %vm3191 = vcmp.eq.s32.totalorder %v474, %v2827
      %vm3192 = vcmp.eq.s32.totalorder %v474, %v2834
      %vm3193 = vcmp.eq.s32.totalorder %v474, %v2841
      %vm3194 = vcmp.eq.s32.totalorder %v474, %v2848
      %vm3195 = vcmp.eq.s32.totalorder %v474, %v2855
      %vm3196 = vcmp.eq.s32.totalorder %v474, %v2862
      %vm3197 = vcmp.eq.s32.totalorder %v474, %v2869
      %vm3198 = vcmp.eq.s32.totalorder %v474, %v2876
      %vm3199 = vcmp.eq.s32.totalorder %v474, %v2883
      %vm3200 = vcmp.eq.s32.totalorder %v474, %v2890
      %vm3201 = vcmp.eq.s32.totalorder %v474, %v2897
      %vm3202 = vcmp.eq.s32.totalorder %v474, %v2904
      %vm3203 = vcmp.eq.s32.totalorder %v474, %v2911
      %vm3204 = vcmp.eq.s32.totalorder %v474, %v2918
      %vm3205 = vcmp.eq.s32.totalorder %v474, %v2925
      %vm3206 = vcmp.eq.s32.totalorder %v474, %v2932
      %vm3207 = vcmp.eq.s32.totalorder %v474, %v2939
      %vm3208 = vcmp.eq.s32.totalorder %v474, %v2946
      %vm3209 = vcmp.eq.s32.totalorder %v474, %v2953
      %vm3210 = vcmp.eq.s32.totalorder %v474, %v2960
      %vm3211 = vcmp.eq.s32.totalorder %v474, %v2967
      %vm3212 = vcmp.eq.s32.totalorder %v474, %v2974
      %vm3213 = vcmp.eq.s32.totalorder %v474, %v2981
      %vm3214 = vcmp.eq.s32.totalorder %v474, %v2988
      %vm3215 = vcmp.eq.s32.totalorder %v474, %v2995
      %vm3216 = vcmp.eq.s32.totalorder %v474, %v3002
      %vm3217 = vcmp.eq.s32.totalorder %v474, %v3009
      %vm3218 = vcmp.eq.s32.totalorder %v474, %v3016
      %vm3219 = vcmp.eq.s32.totalorder %v474, %v3023
      %vm3220 = vcmp.eq.s32.totalorder %v474, %v3030
      %vm3221 = vcmp.eq.s32.totalorder %v474, %v3037
      %vm3222 = vcmp.eq.s32.totalorder %v474, %v3044
      %vm3223 = vcmp.eq.s32.totalorder %v474, %v3051
      %vm3224 = vcmp.eq.s32.totalorder %v474, %v3058
      %vm3225 = vcmp.eq.s32.totalorder %v474, %v3065
      %vm3226 = vcmp.eq.s32.totalorder %v474, %v3072
      %vm3227 = vcmp.eq.s32.totalorder %v474, %v3079
      %vm3228 = vcmp.eq.s32.totalorder %v474, %v3086
      %vm3229 = vcmp.eq.s32.totalorder %v474, %v3093
      %vm3230 = vcmp.eq.s32.totalorder %v474, %v3100
      %vm3231 = vcmp.eq.s32.totalorder %v474, %v3107
      %vm3232 = vcmp.eq.s32.totalorder %v474, %v3114
      %vm3233 = vcmp.eq.s32.totalorder %v474, %v3121
      %vm3234 = vcmp.eq.s32.totalorder %v474, %v3128
      %vm3235 = vcmp.eq.s32.totalorder %v474, %v3135
      %vm3236 = vcmp.eq.s32.totalorder %v474, %v3142
      %vm3237 = vcmp.eq.s32.totalorder %v474, %v3149
      %vm3238 = vcmp.eq.s32.totalorder %v474, %v3156
      %vm3239 = vcmp.eq.s32.totalorder %v474, %v3163
      %vm3240 = vcmp.eq.s32.totalorder %v474, %v3170
      %vm3241 = vcmp.eq.s32.totalorder %v474, %v3177
      %v3242 = vsel %vm3178, 1, 0
      %v3243 = vsel %vm3179, 1, 0
      %v3244 = vsel %vm3180, 1, 0
      %v3245 = vsel %vm3181, 1, 0
      %v3246 = vsel %vm3182, 1, 0
      %v3247 = vsel %vm3183, 1, 0
      %v3248 = vsel %vm3184, 1, 0
      %v3249 = vsel %vm3185, 1, 0
      %v3250 = vsel %vm3186, 1, 0
      %v3251 = vsel %vm3187, 1, 0
      %v3252 = vsel %vm3188, 1, 0
      %v3253 = vsel %vm3189, 1, 0
      %v3254 = vsel %vm3190, 1, 0
      %v3255 = vsel %vm3191, 1, 0
      %v3256 = vsel %vm3192, 1, 0
      %v3257 = vsel %vm3193, 1, 0
      %v3258 = vsel %vm3194, 1, 0
      %v3259 = vsel %vm3195, 1, 0
      %v3260 = vsel %vm3196, 1, 0
      %v3261 = vsel %vm3197, 1, 0
      %v3262 = vsel %vm3198, 1, 0
      %v3263 = vsel %vm3199, 1, 0
      %v3264 = vsel %vm3200, 1, 0
      %v3265 = vsel %vm3201, 1, 0
      %v3266 = vsel %vm3202, 1, 0
      %v3267 = vsel %vm3203, 1, 0
      %v3268 = vsel %vm3204, 1, 0
      %v3269 = vsel %vm3205, 1, 0
      %v3270 = vsel %vm3206, 1, 0
      %v3271 = vsel %vm3207, 1, 0
      %v3272 = vsel %vm3208, 1, 0
      %v3273 = vsel %vm3209, 1, 0
      %v3274 = vsel %vm3210, 1, 0
      %v3275 = vsel %vm3211, 1, 0
      %v3276 = vsel %vm3212, 1, 0
      %v3277 = vsel %vm3213, 1, 0
      %v3278 = vsel %vm3214, 1, 0
      %v3279 = vsel %vm3215, 1, 0
      %v3280 = vsel %vm3216, 1, 0
      %v3281 = vsel %vm3217, 1, 0
      %v3282 = vsel %vm3218, 1, 0
      %v3283 = vsel %vm3219, 1, 0
      %v3284 = vsel %vm3220, 1, 0
      %v3285 = vsel %vm3221, 1, 0
      %v3286 = vsel %vm3222, 1, 0
      %v3287 = vsel %vm3223, 1, 0
      %v3288 = vsel %vm3224, 1, 0
      %v3289 = vsel %vm3225, 1, 0
      %v3290 = vsel %vm3226, 1, 0
      %v3291 = vsel %vm3227, 1, 0
      %v3292 = vsel %vm3228, 1, 0
      %v3293 = vsel %vm3229, 1, 0
      %v3294 = vsel %vm3230, 1, 0
      %v3295 = vsel %vm3231, 1, 0
      %v3296 = vsel %vm3232, 1, 0
      %v3297 = vsel %vm3233, 1, 0
      %v3298 = vsel %vm3234, 1, 0
      %v3299 = vsel %vm3235, 1, 0
      %v3300 = vsel %vm3236, 1, 0
      %v3301 = vsel %vm3237, 1, 0
      %v3302 = vsel %vm3238, 1, 0
      %v3303 = vsel %vm3239, 1, 0
      %v3304 = vsel %vm3240, 1, 0
      %v3305 = vsel %vm3241, 1, 0
      %v3306 = vcvt.s32.f32 %v3242
      %v3307 = vcvt.s32.f32 %v3243
      %v3308 = vcvt.s32.f32 %v3244
      %v3309 = vcvt.s32.f32 %v3245
      %v3310 = vcvt.s32.f32 %v3246
      %v3311 = vcvt.s32.f32 %v3247
      %v3312 = vcvt.s32.f32 %v3248
      %v3313 = vcvt.s32.f32 %v3249
      %v3314 = vcvt.s32.f32 %v3250
      %v3315 = vcvt.s32.f32 %v3251
      %v3316 = vcvt.s32.f32 %v3252
      %v3317 = vcvt.s32.f32 %v3253
      %v3318 = vcvt.s32.f32 %v3254
      %v3319 = vcvt.s32.f32 %v3255
      %v3320 = vcvt.s32.f32 %v3256
      %v3321 = vcvt.s32.f32 %v3257
      %v3322 = vcvt.s32.f32 %v3258
      %v3323 = vcvt.s32.f32 %v3259
      %v3324 = vcvt.s32.f32 %v3260
      %v3325 = vcvt.s32.f32 %v3261
      %v3326 = vcvt.s32.f32 %v3262
      %v3327 = vcvt.s32.f32 %v3263
      %v3328 = vcvt.s32.f32 %v3264
      %v3329 = vcvt.s32.f32 %v3265
      %v3330 = vcvt.s32.f32 %v3266
      %v3331 = vcvt.s32.f32 %v3267
      %v3332 = vcvt.s32.f32 %v3268
      %v3333 = vcvt.s32.f32 %v3269
      %v3334 = vcvt.s32.f32 %v3270
      %v3335 = vcvt.s32.f32 %v3271
      %v3336 = vcvt.s32.f32 %v3272
      %v3337 = vcvt.s32.f32 %v3273
      %v3338 = vcvt.s32.f32 %v3274
      %v3339 = vcvt.s32.f32 %v3275
      %v3340 = vcvt.s32.f32 %v3276
      %v3341 = vcvt.s32.f32 %v3277
      %v3342 = vcvt.s32.f32 %v3278
      %v3343 = vcvt.s32.f32 %v3279
      %v3344 = vcvt.s32.f32 %v3280
      %v3345 = vcvt.s32.f32 %v3281
      %v3346 = vcvt.s32.f32 %v3282
      %v3347 = vcvt.s32.f32 %v3283
      %v3348 = vcvt.s32.f32 %v3284
      %v3349 = vcvt.s32.f32 %v3285
      %v3350 = vcvt.s32.f32 %v3286
      %v3351 = vcvt.s32.f32 %v3287
      %v3352 = vcvt.s32.f32 %v3288
      %v3353 = vcvt.s32.f32 %v3289
      %v3354 = vcvt.s32.f32 %v3290
      %v3355 = vcvt.s32.f32 %v3291
      %v3356 = vcvt.s32.f32 %v3292
      %v3357 = vcvt.s32.f32 %v3293
      %v3358 = vcvt.s32.f32 %v3294
      %v3359 = vcvt.s32.f32 %v3295
      %v3360 = vcvt.s32.f32 %v3296
      %v3361 = vcvt.s32.f32 %v3297
      %v3362 = vcvt.s32.f32 %v3298
      %v3363 = vcvt.s32.f32 %v3299
      %v3364 = vcvt.s32.f32 %v3300
      %v3365 = vcvt.s32.f32 %v3301
      %v3366 = vcvt.s32.f32 %v3302
      %v3367 = vcvt.s32.f32 %v3303
      %v3368 = vcvt.s32.f32 %v3304
      %v3369 = vcvt.s32.f32 %v3305
      %3370 = vmatprep.subr.mxu0 0.0
      %3371 = vmatpush1.msra.mxu0 %v345
      %3372 = vmatprep.subr.mxu0 0.0
      %3373 = vmatpush1.msra.mxu0 %v346
      %3374 = vmatprep.subr.mxu0 0.0
      %3375 = vmatpush1.msra.mxu0 %v347
      %3376 = vmatprep.subr.mxu0 0.0
      %3377 = vmatpush1.msra.mxu0 %v348
      %3378 = vmatprep.subr.mxu0 0.0
      %3379 = vmatpush1.msra.mxu0 %v349
      %3380 = vmatprep.subr.mxu0 0.0
      %3381 = vmatpush1.msra.mxu0 %v350
      %3382 = vmatprep.subr.mxu0 0.0
      %3383 = vmatpush1.msra.mxu0 %v351
      %3384 = vmatprep.subr.mxu0 0.0
      %3385 = vmatpush1.msra.mxu0 %v352
      %3386 = vmatprep.subr.mxu0 0.0
      %3387 = vmatpush1.msra.mxu0 %v353
      %3388 = vmatprep.subr.mxu0 0.0
      %3389 = vmatpush1.msra.mxu0 %v354
      %3390 = vmatprep.subr.mxu0 0.0
      %3391 = vmatpush1.msra.mxu0 %v355
      %3392 = vmatprep.subr.mxu0 0.0
      %3393 = vmatpush1.msra.mxu0 %v356
      %3394 = vmatprep.subr.mxu0 0.0
      %3395 = vmatpush1.msra.mxu0 %v357
      %3396 = vmatprep.subr.mxu0 0.0
      %3397 = vmatpush1.msra.mxu0 %v358
      %3398 = vmatprep.subr.mxu0 0.0
      %3399 = vmatpush1.msra.mxu0 %v359
      %3400 = vmatprep.subr.mxu0 0.0
      %3401 = vmatpush1.msra.mxu0 %v360
      %3402 = vmatprep.subr.mxu0 0.0
      %3403 = vmatpush1.msra.mxu0 0.0
      %3404 = vmatprep.subr.mxu0 0.0
      %3405 = vmatpush1.msra.mxu0 0.0
      %3406 = vmatprep.subr.mxu0 0.0
      %3407 = vmatpush1.msra.mxu0 0.0
      %3408 = vmatprep.subr.mxu0 0.0
      %3409 = vmatpush1.msra.mxu0 0.0
      %3410 = vmatprep.subr.mxu0 0.0
      %3411 = vmatpush1.msra.mxu0 0.0
      %3412 = vmatprep.subr.mxu0 0.0
      %3413 = vmatpush1.msra.mxu0 0.0
      %3414 = vmatprep.subr.mxu0 0.0
      %3415 = vmatpush1.msra.mxu0 0.0
      %3416 = vmatprep.subr.mxu0 0.0
      %3417 = vmatpush1.msra.mxu0 0.0
      %3418 = vmatprep.subr.mxu0 0.0
      %3419 = vmatpush1.msra.mxu0 0.0
      %3420 = vmatprep.subr.mxu0 0.0
      %3421 = vmatpush1.msra.mxu0 0.0
      %3422 = vmatprep.subr.mxu0 0.0
      %3423 = vmatpush1.msra.mxu0 0.0
      %3424 = vmatprep.subr.mxu0 0.0
      %3425 = vmatpush1.msra.mxu0 0.0
      %3426 = vmatprep.subr.mxu0 0.0
      %3427 = vmatpush1.msra.mxu0 0.0
      %3428 = vmatprep.subr.mxu0 0.0
      %3429 = vmatpush1.msra.mxu0 0.0
      %3430 = vmatprep.subr.mxu0 0.0
      %3431 = vmatpush1.msra.mxu0 0.0
      %3432 = vmatprep.subr.mxu0 0.0
      %3433 = vmatpush1.msra.mxu0 0.0
      %3434 = vmatprep.mubr.f32.mxu0 0.0
      %3435 = vmatmul.mubr.f32.gmra.mrb[0].mxu0 %v3306
      %v3436 = vpop.f32.mrb[0].mxu0
      %v3437 = vadd.f32 0.0, %v3436
      %v3438 = vpop.f32.mrb[0].mxu0
      %3439 = vmatprep.mubr.f32.mxu0 0.0
      %3440 = vmatmul.mubr.f32.gmra.mrb[0].mxu0 %v3307
      %v3441 = vpop.f32.mrb[0].mxu0
      %v3442 = vadd.f32 0.0, %v3441
      %v3443 = vpop.f32.mrb[0].mxu0
      %3444 = vmatprep.mubr.f32.mxu0 0.0
      %3445 = vmatmul.mubr.f32.gmra.mrb[0].mxu0 %v3308
      %v3446 = vpop.f32.mrb[0].mxu0
      %v3447 = vadd.f32 0.0, %v3446
      %v3448 = vpop.f32.mrb[0].mxu0
      %3449 = vmatprep.mubr.f32.mxu0 0.0
      %3450 = vmatmul.mubr.f32.gmra.mrb[0].mxu0 %v3309
      %v3451 = vpop.f32.mrb[0].mxu0
      %v3452 = vadd.f32 0.0, %v3451
      %v3453 = vpop.f32.mrb[0].mxu0
      %3454 = vmatprep.mubr.f32.mxu0 0.0
      %3455 = vmatmul.mubr.f32.gmra.mrb[0].mxu0 %v3310
      %v3456 = vpop.f32.mrb[0].mxu0
      %v3457 = vadd.f32 0.0, %v3456
      %v3458 = vpop.f32.mrb[0].mxu0
      %3459 = vmatprep.mubr.f32.mxu0 0.0
      %3460 = vmatmul.mubr.f32.gmra.mrb[0].mxu0 %v3311
      %v3461 = vpop.f32.mrb[0].mxu0
      %v3462 = vadd.f32 0.0, %v3461
      %v3463 = vpop.f32.mrb[0].mxu0
      %3464 = vmatprep.mubr.f32.mxu0 0.0
      %3465 = vmatmul.mubr.f32.gmra.mrb[0].mxu0 %v3312
      %v3466 = vpop.f32.mrb[0].mxu0
      %v3467 = vadd.f32 0.0, %v3466
      %v3468 = vpop.f32.mrb[0].mxu0
      %3469 = vmatprep.mubr.f32.mxu0 0.0
      %3470 = vmatmul.mubr.f32.gmra.mrb[0].mxu0 %v3313
      %v3471 = vpop.f32.mrb[0].mxu0
      %v3472 = vadd.f32 0.0, %v3471
      %v3473 = vpop.f32.mrb[0].mxu0
      %3474 = vdwg.mxu0
      %3475 = vmatprep.subr.mxu0 0.0
      %3476 = vmatpush1.msra.mxu0 %v361
      %3477 = vmatprep.subr.mxu0 0.0
      %3478 = vmatpush1.msra.mxu0 %v362
      %3479 = vmatprep.subr.mxu0 0.0
      %3480 = vmatpush1.msra.mxu0 %v363
      %3481 = vmatprep.subr.mxu0 0.0
      %3482 = vmatpush1.msra.mxu0 %v364
      %3483 = vmatprep.subr.mxu0 0.0
      %3484 = vmatpush1.msra.mxu0 %v365
      %3485 = vmatprep.subr.mxu0 0.0
      %3486 = vmatpush1.msra.mxu0 %v366
      %3487 = vmatprep.subr.mxu0 0.0
      %3488 = vmatpush1.msra.mxu0 %v367
      %3489 = vmatprep.subr.mxu0 0.0
      %3490 = vmatpush1.msra.mxu0 %v368
      %3491 = vmatprep.subr.mxu0 0.0
      %3492 = vmatpush1.msra.mxu0 %v369
      %3493 = vmatprep.subr.mxu0 0.0
      %3494 = vmatpush1.msra.mxu0 %v370
      %3495 = vmatprep.subr.mxu0 0.0
      %3496 = vmatpush1.msra.mxu0 %v371
      %3497 = vmatprep.subr.mxu0 0.0
      %3498 = vmatpush1.msra.mxu0 %v372
      %3499 = vmatprep.subr.mxu0 0.0
      %3500 = vmatpush1.msra.mxu0 %v373
      %3501 = vmatprep.subr.mxu0 0.0
      %3502 = vmatpush1.msra.mxu0 %v374
      %3503 = vmatprep.subr.mxu0 0.0
      %3504 = vmatpush1.msra.mxu0 %v375
      %3505 = vmatprep.subr.mxu0 0.0
      %3506 = vmatpush1.msra.mxu0 %v376
      %3507 = vmatprep.subr.mxu0 0.0
      %3508 = vmatpush1.msra.mxu0 0.0
      %3509 = vmatprep.subr.mxu0 0.0
      %3510 = vmatpush1.msra.mxu0 0.0
      %3511 = vmatprep.subr.mxu0 0.0
      %3512 = vmatpush1.msra.mxu0 0.0
      %3513 = vmatprep.subr.mxu0 0.0
      %3514 = vmatpush1.msra.mxu0 0.0
      %3515 = vmatprep.subr.mxu0 0.0
      %3516 = vmatpush1.msra.mxu0 0.0
      %3517 = vmatprep.subr.mxu0 0.0
      %3518 = vmatpush1.msra.mxu0 0.0
      %3519 = vmatprep.subr.mxu0 0.0
      %3520 = vmatpush1.msra.mxu0 0.0
      %3521 = vmatprep.subr.mxu0 0.0
      %3522 = vmatpush1.msra.mxu0 0.0
      %3523 = vmatprep.subr.mxu0 0.0
      %3524 = vmatpush1.msra.mxu0 0.0
      %3525 = vmatprep.subr.mxu0 0.0
      %3526 = vmatpush1.msra.mxu0 0.0
      %3527 = vmatprep.subr.mxu0 0.0
      %3528 = vmatpush1.msra.mxu0 0.0
      %3529 = vmatprep.subr.mxu0 0.0
      %3530 = vmatpush1.msra.mxu0 0.0
      %3531 = vmatprep.subr.mxu0 0.0
      %3532 = vmatpush1.msra.mxu0 0.0
      %3533 = vmatprep.subr.mxu0 0.0
      %3534 = vmatpush1.msra.mxu0 0.0
      %3535 = vmatprep.subr.mxu0 0.0
      %3536 = vmatpush1.msra.mxu0 0.0
      %3537 = vmatprep.subr.mxu0 0.0
      %3538 = vmatpush1.msra.mxu0 0.0
      %3539 = vmatprep.mubr.f32.mxu0 0.0
      %3540 = vmatmul.mubr.f32.gmra.mrb[0].mxu0 %v3314
      %v3541 = vpop.f32.mrb[0].mxu0
      %v3542 = vadd.f32 0.0, %v3541
      %v3543 = vpop.f32.mrb[0].mxu0
      %3544 = vmatprep.mubr.f32.mxu0 0.0
      %3545 = vmatmul.mubr.f32.gmra.mrb[0].mxu0 %v3315
      %v3546 = vpop.f32.mrb[0].mxu0
      %v3547 = vadd.f32 0.0, %v3546
      %v3548 = vpop.f32.mrb[0].mxu0
      %3549 = vmatprep.mubr.f32.mxu0 0.0
      %3550 = vmatmul.mubr.f32.gmra.mrb[0].mxu0 %v3316
      %v3551 = vpop.f32.mrb[0].mxu0
      %v3552 = vadd.f32 0.0, %v3551
      %v3553 = vpop.f32.mrb[0].mxu0
      %3554 = vmatprep.mubr.f32.mxu0 0.0
      %3555 = vmatmul.mubr.f32.gmra.mrb[0].mxu0 %v3317
      %v3556 = vpop.f32.mrb[0].mxu0
      %v3557 = vadd.f32 0.0, %v3556
      %v3558 = vpop.f32.mrb[0].mxu0
      %3559 = vmatprep.mubr.f32.mxu0 0.0
      %3560 = vmatmul.mubr.f32.gmra.mrb[0].mxu0 %v3318
      %v3561 = vpop.f32.mrb[0].mxu0
      %v3562 = vadd.f32 0.0, %v3561
      %v3563 = vpop.f32.mrb[0].mxu0
      %3564 = vmatprep.mubr.f32.mxu0 0.0
      %3565 = vmatmul.mubr.f32.gmra.mrb[0].mxu0 %v3319
      %v3566 = vpop.f32.mrb[0].mxu0
      %v3567 = vadd.f32 0.0, %v3566
      %v3568 = vpop.f32.mrb[0].mxu0
      %3569 = vmatprep.mubr.f32.mxu0 0.0
      %3570 = vmatmul.mubr.f32.gmra.mrb[0].mxu0 %v3320
      %v3571 = vpop.f32.mrb[0].mxu0
      %v3572 = vadd.f32 0.0, %v3571
      %v3573 = vpop.f32.mrb[0].mxu0
      %3574 = vmatprep.mubr.f32.mxu0 0.0
      %3575 = vmatmul.mubr.f32.gmra.mrb[0].mxu0 %v3321
      %v3576 = vpop.f32.mrb[0].mxu0
      %v3577 = vadd.f32 0.0, %v3576
      %v3578 = vpop.f32.mrb[0].mxu0
      %3579 = vdwg.mxu0
      %3580 = vmatprep.subr.mxu0 0.0
      %3581 = vmatpush1.msra.mxu0 %v377
      %3582 = vmatprep.subr.mxu0 0.0
      %3583 = vmatpush1.msra.mxu0 %v378
      %3584 = vmatprep.subr.mxu0 0.0
      %3585 = vmatpush1.msra.mxu0 %v379
      %3586 = vmatprep.subr.mxu0 0.0
      %3587 = vmatpush1.msra.mxu0 %v380
      %3588 = vmatprep.subr.mxu0 0.0
      %3589 = vmatpush1.msra.mxu0 %v381
      %3590 = vmatprep.subr.mxu0 0.0
      %3591 = vmatpush1.msra.mxu0 %v382
      %3592 = vmatprep.subr.mxu0 0.0
      %3593 = vmatpush1.msra.mxu0 %v383
      %3594 = vmatprep.subr.mxu0 0.0
      %3595 = vmatpush1.msra.mxu0 %v384
      %3596 = vmatprep.subr.mxu0 0.0
      %3597 = vmatpush1.msra.mxu0 %v385
      %3598 = vmatprep.subr.mxu0 0.0
      %3599 = vmatpush1.msra.mxu0 %v386
      %3600 = vmatprep.subr.mxu0 0.0
      %3601 = vmatpush1.msra.mxu0 %v387
      %3602 = vmatprep.subr.mxu0 0.0
      %3603 = vmatpush1.msra.mxu0 %v388
      %3604 = vmatprep.subr.mxu0 0.0
      %3605 = vmatpush1.msra.mxu0 %v389
      %3606 = vmatprep.subr.mxu0 0.0
      %3607 = vmatpush1.msra.mxu0 %v390
      %3608 = vmatprep.subr.mxu0 0.0
      %3609 = vmatpush1.msra.mxu0 %v391
      %3610 = vmatprep.subr.mxu0 0.0
      %3611 = vmatpush1.msra.mxu0 %v392
      %3612 = vmatprep.subr.mxu0 0.0
      %3613 = vmatpush1.msra.mxu0 0.0
      %3614 = vmatprep.subr.mxu0 0.0
      %3615 = vmatpush1.msra.mxu0 0.0
      %3616 = vmatprep.subr.mxu0 0.0
      %3617 = vmatpush1.msra.mxu0 0.0
      %3618 = vmatprep.subr.mxu0 0.0
      %3619 = vmatpush1.msra.mxu0 0.0
      %3620 = vmatprep.subr.mxu0 0.0
      %3621 = vmatpush1.msra.mxu0 0.0
      %3622 = vmatprep.subr.mxu0 0.0
      %3623 = vmatpush1.msra.mxu0 0.0
      %3624 = vmatprep.subr.mxu0 0.0
      %3625 = vmatpush1.msra.mxu0 0.0
      %3626 = vmatprep.subr.mxu0 0.0
      %3627 = vmatpush1.msra.mxu0 0.0
      %3628 = vmatprep.subr.mxu0 0.0
      %3629 = vmatpush1.msra.mxu0 0.0
      %3630 = vmatprep.subr.mxu0 0.0
      %3631 = vmatpush1.msra.mxu0 0.0
      %3632 = vmatprep.subr.mxu0 0.0
      %3633 = vmatpush1.msra.mxu0 0.0
      %3634 = vmatprep.subr.mxu0 0.0
      %3635 = vmatpush1.msra.mxu0 0.0
      %3636 = vmatprep.subr.mxu0 0.0
      %3637 = vmatpush1.msra.mxu0 0.0
      %3638 = vmatprep.subr.mxu0 0.0
      %3639 = vmatpush1.msra.mxu0 0.0
      %3640 = vmatprep.subr.mxu0 0.0
      %3641 = vmatpush1.msra.mxu0 0.0
      %3642 = vmatprep.subr.mxu0 0.0
      %3643 = vmatpush1.msra.mxu0 0.0
      %3644 = vmatprep.mubr.f32.mxu0 0.0
      %3645 = vmatmul.mubr.f32.gmra.mrb[0].mxu0 %v3322
      %v3646 = vpop.f32.mrb[0].mxu0
      %v3647 = vadd.f32 0.0, %v3646
      %v3648 = vpop.f32.mrb[0].mxu0
      %3649 = vmatprep.mubr.f32.mxu0 0.0
      %3650 = vmatmul.mubr.f32.gmra.mrb[0].mxu0 %v3323
      %v3651 = vpop.f32.mrb[0].mxu0
      %v3652 = vadd.f32 0.0, %v3651
      %v3653 = vpop.f32.mrb[0].mxu0
      %3654 = vmatprep.mubr.f32.mxu0 0.0
      %3655 = vmatmul.mubr.f32.gmra.mrb[0].mxu0 %v3324
      %v3656 = vpop.f32.mrb[0].mxu0
      %v3657 = vadd.f32 0.0, %v3656
      %v3658 = vpop.f32.mrb[0].mxu0
      %3659 = vmatprep.mubr.f32.mxu0 0.0
      %3660 = vmatmul.mubr.f32.gmra.mrb[0].mxu0 %v3325
      %v3661 = vpop.f32.mrb[0].mxu0
      %v3662 = vadd.f32 0.0, %v3661
      %v3663 = vpop.f32.mrb[0].mxu0
      %3664 = vmatprep.mubr.f32.mxu0 0.0
      %3665 = vmatmul.mubr.f32.gmra.mrb[0].mxu0 %v3326
      %v3666 = vpop.f32.mrb[0].mxu0
      %v3667 = vadd.f32 0.0, %v3666
      %v3668 = vpop.f32.mrb[0].mxu0
      %3669 = vmatprep.mubr.f32.mxu0 0.0
      %3670 = vmatmul.mubr.f32.gmra.mrb[0].mxu0 %v3327
      %v3671 = vpop.f32.mrb[0].mxu0
      %v3672 = vadd.f32 0.0, %v3671
      %v3673 = vpop.f32.mrb[0].mxu0
      %3674 = vmatprep.mubr.f32.mxu0 0.0
      %3675 = vmatmul.mubr.f32.gmra.mrb[0].mxu0 %v3328
      %v3676 = vpop.f32.mrb[0].mxu0
      %v3677 = vadd.f32 0.0, %v3676
      %v3678 = vpop.f32.mrb[0].mxu0
      %3679 = vmatprep.mubr.f32.mxu0 0.0
      %3680 = vmatmul.mubr.f32.gmra.mrb[0].mxu0 %v3329
      %v3681 = vpop.f32.mrb[0].mxu0
      %v3682 = vadd.f32 0.0, %v3681
      %v3683 = vpop.f32.mrb[0].mxu0
      %3684 = vdwg.mxu0
      %3685 = vmatprep.subr.mxu0 0.0
      %3686 = vmatpush1.msra.mxu0 %v393
      %3687 = vmatprep.subr.mxu0 0.0
      %3688 = vmatpush1.msra.mxu0 %v394
      %3689 = vmatprep.subr.mxu0 0.0
      %3690 = vmatpush1.msra.mxu0 %v395
      %3691 = vmatprep.subr.mxu0 0.0
      %3692 = vmatpush1.msra.mxu0 %v396
      %3693 = vmatprep.subr.mxu0 0.0
      %3694 = vmatpush1.msra.mxu0 %v397
      %3695 = vmatprep.subr.mxu0 0.0
      %3696 = vmatpush1.msra.mxu0 %v398
      %3697 = vmatprep.subr.mxu0 0.0
      %3698 = vmatpush1.msra.mxu0 %v399
      %3699 = vmatprep.subr.mxu0 0.0
      %3700 = vmatpush1.msra.mxu0 %v400
      %3701 = vmatprep.subr.mxu0 0.0
      %3702 = vmatpush1.msra.mxu0 %v401
      %3703 = vmatprep.subr.mxu0 0.0
      %3704 = vmatpush1.msra.mxu0 %v402
      %3705 = vmatprep.subr.mxu0 0.0
      %3706 = vmatpush1.msra.mxu0 %v403
      %3707 = vmatprep.subr.mxu0 0.0
      %3708 = vmatpush1.msra.mxu0 %v404
      %3709 = vmatprep.subr.mxu0 0.0
      %3710 = vmatpush1.msra.mxu0 %v405
      %3711 = vmatprep.subr.mxu0 0.0
      %3712 = vmatpush1.msra.mxu0 %v406
      %3713 = vmatprep.subr.mxu0 0.0
      %3714 = vmatpush1.msra.mxu0 %v407
      %3715 = vmatprep.subr.mxu0 0.0
      %3716 = vmatpush1.msra.mxu0 %v408
      %3717 = vmatprep.subr.mxu0 0.0
      %3718 = vmatpush1.msra.mxu0 0.0
      %3719 = vmatprep.subr.mxu0 0.0
      %3720 = vmatpush1.msra.mxu0 0.0
      %3721 = vmatprep.subr.mxu0 0.0
      %3722 = vmatpush1.msra.mxu0 0.0
      %3723 = vmatprep.subr.mxu0 0.0
      %3724 = vmatpush1.msra.mxu0 0.0
      %3725 = vmatprep.subr.mxu0 0.0
      %3726 = vmatpush1.msra.mxu0 0.0
      %3727 = vmatprep.subr.mxu0 0.0
      %3728 = vmatpush1.msra.mxu0 0.0
      %3729 = vmatprep.subr.mxu0 0.0
      %3730 = vmatpush1.msra.mxu0 0.0
      %3731 = vmatprep.subr.mxu0 0.0
      %3732 = vmatpush1.msra.mxu0 0.0
      %3733 = vmatprep.subr.mxu0 0.0
      %3734 = vmatpush1.msra.mxu0 0.0
      %3735 = vmatprep.subr.mxu0 0.0
      %3736 = vmatpush1.msra.mxu0 0.0
      %3737 = vmatprep.subr.mxu0 0.0
      %3738 = vmatpush1.msra.mxu0 0.0
      %3739 = vmatprep.subr.mxu0 0.0
      %3740 = vmatpush1.msra.mxu0 0.0
      %3741 = vmatprep.subr.mxu0 0.0
      %3742 = vmatpush1.msra.mxu0 0.0
      %3743 = vmatprep.subr.mxu0 0.0
      %3744 = vmatpush1.msra.mxu0 0.0
      %3745 = vmatprep.subr.mxu0 0.0
      %3746 = vmatpush1.msra.mxu0 0.0
      %3747 = vmatprep.subr.mxu0 0.0
      %3748 = vmatpush1.msra.mxu0 0.0
      %3749 = vmatprep.mubr.f32.mxu0 0.0
      %3750 = vmatmul.mubr.f32.gmra.mrb[0].mxu0 %v3330
      %v3751 = vpop.f32.mrb[0].mxu0
      %v3752 = vadd.f32 0.0, %v3751
      %v3753 = vpop.f32.mrb[0].mxu0
      %3754 = vmatprep.mubr.f32.mxu0 0.0
      %3755 = vmatmul.mubr.f32.gmra.mrb[0].mxu0 %v3331
      %v3756 = vpop.f32.mrb[0].mxu0
      %v3757 = vadd.f32 0.0, %v3756
      %v3758 = vpop.f32.mrb[0].mxu0
      %3759 = vmatprep.mubr.f32.mxu0 0.0
      %3760 = vmatmul.mubr.f32.gmra.mrb[0].mxu0 %v3332
      %v3761 = vpop.f32.mrb[0].mxu0
      %v3762 = vadd.f32 0.0, %v3761
      %v3763 = vpop.f32.mrb[0].mxu0
      %3764 = vmatprep.mubr.f32.mxu0 0.0
      %3765 = vmatmul.mubr.f32.gmra.mrb[0].mxu0 %v3333
      %v3766 = vpop.f32.mrb[0].mxu0
      %v3767 = vadd.f32 0.0, %v3766
      %v3768 = vpop.f32.mrb[0].mxu0
      %3769 = vmatprep.mubr.f32.mxu0 0.0
      %3770 = vmatmul.mubr.f32.gmra.mrb[0].mxu0 %v3334
      %v3771 = vpop.f32.mrb[0].mxu0
      %v3772 = vadd.f32 0.0, %v3771
      %v3773 = vpop.f32.mrb[0].mxu0
      %3774 = vmatprep.mubr.f32.mxu0 0.0
      %3775 = vmatmul.mubr.f32.gmra.mrb[0].mxu0 %v3335
      %v3776 = vpop.f32.mrb[0].mxu0
      %v3777 = vadd.f32 0.0, %v3776
      %v3778 = vpop.f32.mrb[0].mxu0
      %3779 = vmatprep.mubr.f32.mxu0 0.0
      %3780 = vmatmul.mubr.f32.gmra.mrb[0].mxu0 %v3336
      %v3781 = vpop.f32.mrb[0].mxu0
      %v3782 = vadd.f32 0.0, %v3781
      %v3783 = vpop.f32.mrb[0].mxu0
      %3784 = vmatprep.mubr.f32.mxu0 0.0
      %3785 = vmatmul.mubr.f32.gmra.mrb[0].mxu0 %v3337
      %v3786 = vpop.f32.mrb[0].mxu0
      %v3787 = vadd.f32 0.0, %v3786
      %v3788 = vpop.f32.mrb[0].mxu0
      %3789 = vdwg.mxu0
      %3790 = vmatprep.subr.mxu0 0.0
      %3791 = vmatpush1.msra.mxu0 %v409
      %3792 = vmatprep.subr.mxu0 0.0
      %3793 = vmatpush1.msra.mxu0 %v410
      %3794 = vmatprep.subr.mxu0 0.0
      %3795 = vmatpush1.msra.mxu0 %v411
      %3796 = vmatprep.subr.mxu0 0.0
      %3797 = vmatpush1.msra.mxu0 %v412
      %3798 = vmatprep.subr.mxu0 0.0
      %3799 = vmatpush1.msra.mxu0 %v413
      %3800 = vmatprep.subr.mxu0 0.0
      %3801 = vmatpush1.msra.mxu0 %v414
      %3802 = vmatprep.subr.mxu0 0.0
      %3803 = vmatpush1.msra.mxu0 %v415
      %3804 = vmatprep.subr.mxu0 0.0
      %3805 = vmatpush1.msra.mxu0 %v416
      %3806 = vmatprep.subr.mxu0 0.0
      %3807 = vmatpush1.msra.mxu0 %v417
      %3808 = vmatprep.subr.mxu0 0.0
      %3809 = vmatpush1.msra.mxu0 %v418
      %3810 = vmatprep.subr.mxu0 0.0
      %3811 = vmatpush1.msra.mxu0 %v419
      %3812 = vmatprep.subr.mxu0 0.0
      %3813 = vmatpush1.msra.mxu0 %v420
      %3814 = vmatprep.subr.mxu0 0.0
      %3815 = vmatpush1.msra.mxu0 %v421
      %3816 = vmatprep.subr.mxu0 0.0
      %3817 = vmatpush1.msra.mxu0 %v422
      %3818 = vmatprep.subr.mxu0 0.0
      %3819 = vmatpush1.msra.mxu0 %v423
      %3820 = vmatprep.subr.mxu0 0.0
      %3821 = vmatpush1.msra.mxu0 %v424
      %3822 = vmatprep.subr.mxu0 0.0
      %3823 = vmatpush1.msra.mxu0 0.0
      %3824 = vmatprep.subr.mxu0 0.0
      %3825 = vmatpush1.msra.mxu0 0.0
      %3826 = vmatprep.subr.mxu0 0.0
      %3827 = vmatpush1.msra.mxu0 0.0
      %3828 = vmatprep.subr.mxu0 0.0
      %3829 = vmatpush1.msra.mxu0 0.0
      %3830 = vmatprep.subr.mxu0 0.0
      %3831 = vmatpush1.msra.mxu0 0.0
      %3832 = vmatprep.subr.mxu0 0.0
      %3833 = vmatpush1.msra.mxu0 0.0
      %3834 = vmatprep.subr.mxu0 0.0
      %3835 = vmatpush1.msra.mxu0 0.0
      %3836 = vmatprep.subr.mxu0 0.0
      %3837 = vmatpush1.msra.mxu0 0.0
      %3838 = vmatprep.subr.mxu0 0.0
      %3839 = vmatpush1.msra.mxu0 0.0
      %3840 = vmatprep.subr.mxu0 0.0
      %3841 = vmatpush1.msra.mxu0 0.0
      %3842 = vmatprep.subr.mxu0 0.0
      %3843 = vmatpush1.msra.mxu0 0.0
      %3844 = vmatprep.subr.mxu0 0.0
      %3845 = vmatpush1.msra.mxu0 0.0
      %3846 = vmatprep.subr.mxu0 0.0
      %3847 = vmatpush1.msra.mxu0 0.0
      %3848 = vmatprep.subr.mxu0 0.0
      %3849 = vmatpush1.msra.mxu0 0.0
      %3850 = vmatprep.subr.mxu0 0.0
      %3851 = vmatpush1.msra.mxu0 0.0
      %3852 = vmatprep.subr.mxu0 0.0
      %3853 = vmatpush1.msra.mxu0 0.0
      %3854 = vmatprep.mubr.f32.mxu0 0.0
      %3855 = vmatmul.mubr.f32.gmra.mrb[0].mxu0 %v3338
      %v3856 = vpop.f32.mrb[0].mxu0
      %v3857 = vadd.f32 0.0, %v3856
      %v3858 = vpop.f32.mrb[0].mxu0
      %3859 = vmatprep.mubr.f32.mxu0 0.0
      %3860 = vmatmul.mubr.f32.gmra.mrb[0].mxu0 %v3339
      %v3861 = vpop.f32.mrb[0].mxu0
      %v3862 = vadd.f32 0.0, %v3861
      %v3863 = vpop.f32.mrb[0].mxu0
      %3864 = vmatprep.mubr.f32.mxu0 0.0
      %3865 = vmatmul.mubr.f32.gmra.mrb[0].mxu0 %v3340
      %v3866 = vpop.f32.mrb[0].mxu0
      %v3867 = vadd.f32 0.0, %v3866
      %v3868 = vpop.f32.mrb[0].mxu0
      %3869 = vmatprep.mubr.f32.mxu0 0.0
      %3870 = vmatmul.mubr.f32.gmra.mrb[0].mxu0 %v3341
      %v3871 = vpop.f32.mrb[0].mxu0
      %v3872 = vadd.f32 0.0, %v3871
      %v3873 = vpop.f32.mrb[0].mxu0
      %3874 = vmatprep.mubr.f32.mxu0 0.0
      %3875 = vmatmul.mubr.f32.gmra.mrb[0].mxu0 %v3342
      %v3876 = vpop.f32.mrb[0].mxu0
      %v3877 = vadd.f32 0.0, %v3876
      %v3878 = vpop.f32.mrb[0].mxu0
      %3879 = vmatprep.mubr.f32.mxu0 0.0
      %3880 = vmatmul.mubr.f32.gmra.mrb[0].mxu0 %v3343
      %v3881 = vpop.f32.mrb[0].mxu0
      %v3882 = vadd.f32 0.0, %v3881
      %v3883 = vpop.f32.mrb[0].mxu0
      %3884 = vmatprep.mubr.f32.mxu0 0.0
      %3885 = vmatmul.mubr.f32.gmra.mrb[0].mxu0 %v3344
      %v3886 = vpop.f32.mrb[0].mxu0
      %v3887 = vadd.f32 0.0, %v3886
      %v3888 = vpop.f32.mrb[0].mxu0
      %3889 = vmatprep.mubr.f32.mxu0 0.0
      %3890 = vmatmul.mubr.f32.gmra.mrb[0].mxu0 %v3345
      %v3891 = vpop.f32.mrb[0].mxu0
      %v3892 = vadd.f32 0.0, %v3891
      %v3893 = vpop.f32.mrb[0].mxu0
      %3894 = vdwg.mxu0
      %3895 = vmatprep.subr.mxu0 0.0
      %3896 = vmatpush1.msra.mxu0 %v425
      %3897 = vmatprep.subr.mxu0 0.0
      %3898 = vmatpush1.msra.mxu0 %v426
      %3899 = vmatprep.subr.mxu0 0.0
      %3900 = vmatpush1.msra.mxu0 %v427
      %3901 = vmatprep.subr.mxu0 0.0
      %3902 = vmatpush1.msra.mxu0 %v428
      %3903 = vmatprep.subr.mxu0 0.0
      %3904 = vmatpush1.msra.mxu0 %v429
      %3905 = vmatprep.subr.mxu0 0.0
      %3906 = vmatpush1.msra.mxu0 %v430
      %3907 = vmatprep.subr.mxu0 0.0
      %3908 = vmatpush1.msra.mxu0 %v431
      %3909 = vmatprep.subr.mxu0 0.0
      %3910 = vmatpush1.msra.mxu0 %v432
      %3911 = vmatprep.subr.mxu0 0.0
      %3912 = vmatpush1.msra.mxu0 %v433
      %3913 = vmatprep.subr.mxu0 0.0
      %3914 = vmatpush1.msra.mxu0 %v434
      %3915 = vmatprep.subr.mxu0 0.0
      %3916 = vmatpush1.msra.mxu0 %v435
      %3917 = vmatprep.subr.mxu0 0.0
      %3918 = vmatpush1.msra.mxu0 %v436
      %3919 = vmatprep.subr.mxu0 0.0
      %3920 = vmatpush1.msra.mxu0 %v437
      %3921 = vmatprep.subr.mxu0 0.0
      %3922 = vmatpush1.msra.mxu0 %v438
      %3923 = vmatprep.subr.mxu0 0.0
      %3924 = vmatpush1.msra.mxu0 %v439
      %3925 = vmatprep.subr.mxu0 0.0
      %3926 = vmatpush1.msra.mxu0 %v440
      %3927 = vmatprep.subr.mxu0 0.0
      %3928 = vmatpush1.msra.mxu0 0.0
      %3929 = vmatprep.subr.mxu0 0.0
      %3930 = vmatpush1.msra.mxu0 0.0
      %3931 = vmatprep.subr.mxu0 0.0
      %3932 = vmatpush1.msra.mxu0 0.0
      %3933 = vmatprep.subr.mxu0 0.0
      %3934 = vmatpush1.msra.mxu0 0.0
      %3935 = vmatprep.subr.mxu0 0.0
      %3936 = vmatpush1.msra.mxu0 0.0
      %3937 = vmatprep.subr.mxu0 0.0
      %3938 = vmatpush1.msra.mxu0 0.0
      %3939 = vmatprep.subr.mxu0 0.0
      %3940 = vmatpush1.msra.mxu0 0.0
      %3941 = vmatprep.subr.mxu0 0.0
      %3942 = vmatpush1.msra.mxu0 0.0
      %3943 = vmatprep.subr.mxu0 0.0
      %3944 = vmatpush1.msra.mxu0 0.0
      %3945 = vmatprep.subr.mxu0 0.0
      %3946 = vmatpush1.msra.mxu0 0.0
      %3947 = vmatprep.subr.mxu0 0.0
      %3948 = vmatpush1.msra.mxu0 0.0
      %3949 = vmatprep.subr.mxu0 0.0
      %3950 = vmatpush1.msra.mxu0 0.0
      %3951 = vmatprep.subr.mxu0 0.0
      %3952 = vmatpush1.msra.mxu0 0.0
      %3953 = vmatprep.subr.mxu0 0.0
      %3954 = vmatpush1.msra.mxu0 0.0
      %3955 = vmatprep.subr.mxu0 0.0
      %3956 = vmatpush1.msra.mxu0 0.0
      %3957 = vmatprep.subr.mxu0 0.0
      %3958 = vmatpush1.msra.mxu0 0.0
      %3959 = vmatprep.mubr.f32.mxu0 0.0
      %3960 = vmatmul.mubr.f32.gmra.mrb[0].mxu0 %v3346
      %v3961 = vpop.f32.mrb[0].mxu0
      %v3962 = vadd.f32 0.0, %v3961
      %v3963 = vpop.f32.mrb[0].mxu0
      %3964 = vmatprep.mubr.f32.mxu0 0.0
      %3965 = vmatmul.mubr.f32.gmra.mrb[0].mxu0 %v3347
      %v3966 = vpop.f32.mrb[0].mxu0
      %v3967 = vadd.f32 0.0, %v3966
      %v3968 = vpop.f32.mrb[0].mxu0
      %3969 = vmatprep.mubr.f32.mxu0 0.0
      %3970 = vmatmul.mubr.f32.gmra.mrb[0].mxu0 %v3348
      %v3971 = vpop.f32.mrb[0].mxu0
      %v3972 = vadd.f32 0.0, %v3971
      %v3973 = vpop.f32.mrb[0].mxu0
      %3974 = vmatprep.mubr.f32.mxu0 0.0
      %3975 = vmatmul.mubr.f32.gmra.mrb[0].mxu0 %v3349
      %v3976 = vpop.f32.mrb[0].mxu0
      %v3977 = vadd.f32 0.0, %v3976
      %v3978 = vpop.f32.mrb[0].mxu0
      %3979 = vmatprep.mubr.f32.mxu0 0.0
      %3980 = vmatmul.mubr.f32.gmra.mrb[0].mxu0 %v3350
      %v3981 = vpop.f32.mrb[0].mxu0
      %v3982 = vadd.f32 0.0, %v3981
      %v3983 = vpop.f32.mrb[0].mxu0
      %3984 = vmatprep.mubr.f32.mxu0 0.0
      %3985 = vmatmul.mubr.f32.gmra.mrb[0].mxu0 %v3351
      %v3986 = vpop.f32.mrb[0].mxu0
      %v3987 = vadd.f32 0.0, %v3986
      %v3988 = vpop.f32.mrb[0].mxu0
      %3989 = vmatprep.mubr.f32.mxu0 0.0
      %3990 = vmatmul.mubr.f32.gmra.mrb[0].mxu0 %v3352
      %v3991 = vpop.f32.mrb[0].mxu0
      %v3992 = vadd.f32 0.0, %v3991
      %v3993 = vpop.f32.mrb[0].mxu0
      %3994 = vmatprep.mubr.f32.mxu0 0.0
      %3995 = vmatmul.mubr.f32.gmra.mrb[0].mxu0 %v3353
      %v3996 = vpop.f32.mrb[0].mxu0
      %v3997 = vadd.f32 0.0, %v3996
      %v3998 = vpop.f32.mrb[0].mxu0
      %3999 = vdwg.mxu0
      %4000 = vmatprep.subr.mxu0 0.0
      %4001 = vmatpush1.msra.mxu0 %v441
      %4002 = vmatprep.subr.mxu0 0.0
      %4003 = vmatpush1.msra.mxu0 %v442
      %4004 = vmatprep.subr.mxu0 0.0
      %4005 = vmatpush1.msra.mxu0 %v443
      %4006 = vmatprep.subr.mxu0 0.0
      %4007 = vmatpush1.msra.mxu0 %v444
      %4008 = vmatprep.subr.mxu0 0.0
      %4009 = vmatpush1.msra.mxu0 %v445
      %4010 = vmatprep.subr.mxu0 0.0
      %4011 = vmatpush1.msra.mxu0 %v446
      %4012 = vmatprep.subr.mxu0 0.0
      %4013 = vmatpush1.msra.mxu0 %v447
      %4014 = vmatprep.subr.mxu0 0.0
      %4015 = vmatpush1.msra.mxu0 %v448
      %4016 = vmatprep.subr.mxu0 0.0
      %4017 = vmatpush1.msra.mxu0 %v449
      %4018 = vmatprep.subr.mxu0 0.0
      %4019 = vmatpush1.msra.mxu0 %v450
      %4020 = vmatprep.subr.mxu0 0.0
      %4021 = vmatpush1.msra.mxu0 %v451
      %4022 = vmatprep.subr.mxu0 0.0
      %4023 = vmatpush1.msra.mxu0 %v452
      %4024 = vmatprep.subr.mxu0 0.0
      %4025 = vmatpush1.msra.mxu0 %v453
      %4026 = vmatprep.subr.mxu0 0.0
      %4027 = vmatpush1.msra.mxu0 %v454
      %4028 = vmatprep.subr.mxu0 0.0
      %4029 = vmatpush1.msra.mxu0 %v455
      %4030 = vmatprep.subr.mxu0 0.0
      %4031 = vmatpush1.msra.mxu0 %v456
      %4032 = vmatprep.subr.mxu0 0.0
      %4033 = vmatpush1.msra.mxu0 0.0
      %4034 = vmatprep.subr.mxu0 0.0
      %4035 = vmatpush1.msra.mxu0 0.0
      %4036 = vmatprep.subr.mxu0 0.0
      %4037 = vmatpush1.msra.mxu0 0.0
      %4038 = vmatprep.subr.mxu0 0.0
      %4039 = vmatpush1.msra.mxu0 0.0
      %4040 = vmatprep.subr.mxu0 0.0
      %4041 = vmatpush1.msra.mxu0 0.0
      %4042 = vmatprep.subr.mxu0 0.0
      %4043 = vmatpush1.msra.mxu0 0.0
      %4044 = vmatprep.subr.mxu0 0.0
      %4045 = vmatpush1.msra.mxu0 0.0
      %4046 = vmatprep.subr.mxu0 0.0
      %4047 = vmatpush1.msra.mxu0 0.0
      %4048 = vmatprep.subr.mxu0 0.0
      %4049 = vmatpush1.msra.mxu0 0.0
      %4050 = vmatprep.subr.mxu0 0.0
      %4051 = vmatpush1.msra.mxu0 0.0
      %4052 = vmatprep.subr.mxu0 0.0
      %4053 = vmatpush1.msra.mxu0 0.0
      %4054 = vmatprep.subr.mxu0 0.0
      %4055 = vmatpush1.msra.mxu0 0.0
      %4056 = vmatprep.subr.mxu0 0.0
      %4057 = vmatpush1.msra.mxu0 0.0
      %4058 = vmatprep.subr.mxu0 0.0
      %4059 = vmatpush1.msra.mxu0 0.0
      %4060 = vmatprep.subr.mxu0 0.0
      %4061 = vmatpush1.msra.mxu0 0.0
      %4062 = vmatprep.subr.mxu0 0.0
      %4063 = vmatpush1.msra.mxu0 0.0
      %4064 = vmatprep.mubr.f32.mxu0 0.0
      %4065 = vmatmul.mubr.f32.gmra.mrb[0].mxu0 %v3354
      %v4066 = vpop.f32.mrb[0].mxu0
      %v4067 = vadd.f32 0.0, %v4066
      %v4068 = vpop.f32.mrb[0].mxu0
      %4069 = vmatprep.mubr.f32.mxu0 0.0
      %4070 = vmatmul.mubr.f32.gmra.mrb[0].mxu0 %v3355
      %v4071 = vpop.f32.mrb[0].mxu0
      %v4072 = vadd.f32 0.0, %v4071
      %v4073 = vpop.f32.mrb[0].mxu0
      %4074 = vmatprep.mubr.f32.mxu0 0.0
      %4075 = vmatmul.mubr.f32.gmra.mrb[0].mxu0 %v3356
      %v4076 = vpop.f32.mrb[0].mxu0
      %v4077 = vadd.f32 0.0, %v4076
      %v4078 = vpop.f32.mrb[0].mxu0
      %4079 = vmatprep.mubr.f32.mxu0 0.0
      %4080 = vmatmul.mubr.f32.gmra.mrb[0].mxu0 %v3357
      %v4081 = vpop.f32.mrb[0].mxu0
      %v4082 = vadd.f32 0.0, %v4081
      %v4083 = vpop.f32.mrb[0].mxu0
      %4084 = vmatprep.mubr.f32.mxu0 0.0
      %4085 = vmatmul.mubr.f32.gmra.mrb[0].mxu0 %v3358
      %v4086 = vpop.f32.mrb[0].mxu0
      %v4087 = vadd.f32 0.0, %v4086
      %v4088 = vpop.f32.mrb[0].mxu0
      %4089 = vmatprep.mubr.f32.mxu0 0.0
      %4090 = vmatmul.mubr.f32.gmra.mrb[0].mxu0 %v3359
      %v4091 = vpop.f32.mrb[0].mxu0
      %v4092 = vadd.f32 0.0, %v4091
      %v4093 = vpop.f32.mrb[0].mxu0
      %4094 = vmatprep.mubr.f32.mxu0 0.0
      %4095 = vmatmul.mubr.f32.gmra.mrb[0].mxu0 %v3360
      %v4096 = vpop.f32.mrb[0].mxu0
      %v4097 = vadd.f32 0.0, %v4096
      %v4098 = vpop.f32.mrb[0].mxu0
      %4099 = vmatprep.mubr.f32.mxu0 0.0
      %4100 = vmatmul.mubr.f32.gmra.mrb[0].mxu0 %v3361
      %v4101 = vpop.f32.mrb[0].mxu0
      %v4102 = vadd.f32 0.0, %v4101
      %v4103 = vpop.f32.mrb[0].mxu0
      %4104 = vdwg.mxu0
      %4105 = vmatprep.subr.mxu0 0.0
      %4106 = vmatpush1.msra.mxu0 %v457
      %4107 = vmatprep.subr.mxu0 0.0
      %4108 = vmatpush1.msra.mxu0 %v458
      %4109 = vmatprep.subr.mxu0 0.0
      %4110 = vmatpush1.msra.mxu0 %v459
      %4111 = vmatprep.subr.mxu0 0.0
      %4112 = vmatpush1.msra.mxu0 %v460
      %4113 = vmatprep.subr.mxu0 0.0
      %4114 = vmatpush1.msra.mxu0 %v461
      %4115 = vmatprep.subr.mxu0 0.0
      %4116 = vmatpush1.msra.mxu0 %v462
      %4117 = vmatprep.subr.mxu0 0.0
      %4118 = vmatpush1.msra.mxu0 %v463
      %4119 = vmatprep.subr.mxu0 0.0
      %4120 = vmatpush1.msra.mxu0 %v464
      %4121 = vmatprep.subr.mxu0 0.0
      %4122 = vmatpush1.msra.mxu0 %v465
      %4123 = vmatprep.subr.mxu0 0.0
      %4124 = vmatpush1.msra.mxu0 %v466
      %4125 = vmatprep.subr.mxu0 0.0
      %4126 = vmatpush1.msra.mxu0 %v467
      %4127 = vmatprep.subr.mxu0 0.0
      %4128 = vmatpush1.msra.mxu0 %v468
      %4129 = vmatprep.subr.mxu0 0.0
      %4130 = vmatpush1.msra.mxu0 %v469
      %4131 = vmatprep.subr.mxu0 0.0
      %4132 = vmatpush1.msra.mxu0 %v470
      %4133 = vmatprep.subr.mxu0 0.0
      %4134 = vmatpush1.msra.mxu0 %v471
      %4135 = vmatprep.subr.mxu0 0.0
      %4136 = vmatpush1.msra.mxu0 %v472
      %4137 = vmatprep.subr.mxu0 0.0
      %4138 = vmatpush1.msra.mxu0 0.0
      %4139 = vmatprep.subr.mxu0 0.0
      %4140 = vmatpush1.msra.mxu0 0.0
      %4141 = vmatprep.subr.mxu0 0.0
      %4142 = vmatpush1.msra.mxu0 0.0
      %4143 = vmatprep.subr.mxu0 0.0
      %4144 = vmatpush1.msra.mxu0 0.0
      %4145 = vmatprep.subr.mxu0 0.0
      %4146 = vmatpush1.msra.mxu0 0.0
      %4147 = vmatprep.subr.mxu0 0.0
      %4148 = vmatpush1.msra.mxu0 0.0
      %4149 = vmatprep.subr.mxu0 0.0
      %4150 = vmatpush1.msra.mxu0 0.0
      %4151 = vmatprep.subr.mxu0 0.0
      %4152 = vmatpush1.msra.mxu0 0.0
      %4153 = vmatprep.subr.mxu0 0.0
      %4154 = vmatpush1.msra.mxu0 0.0
      %4155 = vmatprep.subr.mxu0 0.0
      %4156 = vmatpush1.msra.mxu0 0.0
      %4157 = vmatprep.subr.mxu0 0.0
      %4158 = vmatpush1.msra.mxu0 0.0
      %4159 = vmatprep.subr.mxu0 0.0
      %4160 = vmatpush1.msra.mxu0 0.0
      %4161 = vmatprep.subr.mxu0 0.0
      %4162 = vmatpush1.msra.mxu0 0.0
      %4163 = vmatprep.subr.mxu0 0.0
      %4164 = vmatpush1.msra.mxu0 0.0
      %4165 = vmatprep.subr.mxu0 0.0
      %4166 = vmatpush1.msra.mxu0 0.0
      %4167 = vmatprep.subr.mxu0 0.0
      %4168 = vmatpush1.msra.mxu0 0.0
      %4169 = vmatprep.mubr.f32.mxu0 0.0
      %4170 = vmatmul.mubr.f32.gmra.mrb[0].mxu0 %v3362
      %v4171 = vpop.f32.mrb[0].mxu0
      %v4172 = vadd.f32 0.0, %v4171
      %v4173 = vpop.f32.mrb[0].mxu0
      %4174 = vmatprep.mubr.f32.mxu0 0.0
      %4175 = vmatmul.mubr.f32.gmra.mrb[0].mxu0 %v3363
      %v4176 = vpop.f32.mrb[0].mxu0
      %v4177 = vadd.f32 0.0, %v4176
      %v4178 = vpop.f32.mrb[0].mxu0
      %4179 = vmatprep.mubr.f32.mxu0 0.0
      %4180 = vmatmul.mubr.f32.gmra.mrb[0].mxu0 %v3364
      %v4181 = vpop.f32.mrb[0].mxu0
      %v4182 = vadd.f32 0.0, %v4181
      %v4183 = vpop.f32.mrb[0].mxu0
      %4184 = vmatprep.mubr.f32.mxu0 0.0
      %4185 = vmatmul.mubr.f32.gmra.mrb[0].mxu0 %v3365
      %v4186 = vpop.f32.mrb[0].mxu0
      %v4187 = vadd.f32 0.0, %v4186
      %v4188 = vpop.f32.mrb[0].mxu0
      %4189 = vmatprep.mubr.f32.mxu0 0.0
      %4190 = vmatmul.mubr.f32.gmra.mrb[0].mxu0 %v3366
      %v4191 = vpop.f32.mrb[0].mxu0
      %v4192 = vadd.f32 0.0, %v4191
      %v4193 = vpop.f32.mrb[0].mxu0
      %4194 = vmatprep.mubr.f32.mxu0 0.0
      %4195 = vmatmul.mubr.f32.gmra.mrb[0].mxu0 %v3367
      %v4196 = vpop.f32.mrb[0].mxu0
      %v4197 = vadd.f32 0.0, %v4196
      %v4198 = vpop.f32.mrb[0].mxu0
      %4199 = vmatprep.mubr.f32.mxu0 0.0
      %4200 = vmatmul.mubr.f32.gmra.mrb[0].mxu0 %v3368
      %v4201 = vpop.f32.mrb[0].mxu0
      %v4202 = vadd.f32 0.0, %v4201
      %v4203 = vpop.f32.mrb[0].mxu0
      %4204 = vmatprep.mubr.f32.mxu0 0.0
      %4205 = vmatmul.mubr.f32.gmra.mrb[0].mxu0 %v3369
      %v4206 = vpop.f32.mrb[0].mxu0
      %v4207 = vadd.f32 0.0, %v4206
      %v4208 = vpop.f32.mrb[0].mxu0
      %4209 = vdwg.mxu0
      %v4210 = vlaneseq
      %v4211 = vshrl.u32 %v4210, 7
      %v4212 = vsub.s32 0, %v4211
      %v4213 = vrot.slane %v1124, %v4212
      %v4214 = vlaneseq
      %v4215 = vshrl.u32 %v4214, 7
      %v4216 = vsub.s32 1, %v4215
      %v4217 = vrot.slane %v1124, %v4216
      %v4218 = vlaneseq
      %v4219 = vshrl.u32 %v4218, 7
      %v4220 = vsub.s32 2, %v4219
      %v4221 = vrot.slane %v1124, %v4220
      %v4222 = vlaneseq
      %v4223 = vshrl.u32 %v4222, 7
      %v4224 = vsub.s32 3, %v4223
      %v4225 = vrot.slane %v1124, %v4224
      %v4226 = vlaneseq
      %v4227 = vshrl.u32 %v4226, 7
      %v4228 = vsub.s32 4, %v4227
      %v4229 = vrot.slane %v1124, %v4228
      %v4230 = vlaneseq
      %v4231 = vshrl.u32 %v4230, 7
      %v4232 = vsub.s32 5, %v4231
      %v4233 = vrot.slane %v1124, %v4232
      %v4234 = vlaneseq
      %v4235 = vshrl.u32 %v4234, 7
      %v4236 = vsub.s32 6, %v4235
      %v4237 = vrot.slane %v1124, %v4236
      %v4238 = vlaneseq
      %v4239 = vshrl.u32 %v4238, 7
      %v4240 = vsub.s32 7, %v4239
      %v4241 = vrot.slane %v1124, %v4240
      %v4242 = vlaneseq
      %v4243 = vshrl.u32 %v4242, 7
      %v4244 = vsub.s32 0, %v4243
      %v4245 = vrot.slane %v1131, %v4244
      %v4246 = vlaneseq
      %v4247 = vshrl.u32 %v4246, 7
      %v4248 = vsub.s32 1, %v4247
      %v4249 = vrot.slane %v1131, %v4248
      %v4250 = vlaneseq
      %v4251 = vshrl.u32 %v4250, 7
      %v4252 = vsub.s32 2, %v4251
      %v4253 = vrot.slane %v1131, %v4252
      %v4254 = vlaneseq
      %v4255 = vshrl.u32 %v4254, 7
      %v4256 = vsub.s32 3, %v4255
      %v4257 = vrot.slane %v1131, %v4256
      %v4258 = vlaneseq
      %v4259 = vshrl.u32 %v4258, 7
      %v4260 = vsub.s32 4, %v4259
      %v4261 = vrot.slane %v1131, %v4260
      %v4262 = vlaneseq
      %v4263 = vshrl.u32 %v4262, 7
      %v4264 = vsub.s32 5, %v4263
      %v4265 = vrot.slane %v1131, %v4264
      %v4266 = vlaneseq
      %v4267 = vshrl.u32 %v4266, 7
      %v4268 = vsub.s32 6, %v4267
      %v4269 = vrot.slane %v1131, %v4268
      %v4270 = vlaneseq
      %v4271 = vshrl.u32 %v4270, 7
      %v4272 = vsub.s32 7, %v4271
      %v4273 = vrot.slane %v1131, %v4272
      %v4274 = vlaneseq
      %v4275 = vshrl.u32 %v4274, 7
      %v4276 = vsub.s32 0, %v4275
      %v4277 = vrot.slane %v1138, %v4276
      %v4278 = vlaneseq
      %v4279 = vshrl.u32 %v4278, 7
      %v4280 = vsub.s32 1, %v4279
      %v4281 = vrot.slane %v1138, %v4280
      %v4282 = vlaneseq
      %v4283 = vshrl.u32 %v4282, 7
      %v4284 = vsub.s32 2, %v4283
      %v4285 = vrot.slane %v1138, %v4284
      %v4286 = vlaneseq
      %v4287 = vshrl.u32 %v4286, 7
      %v4288 = vsub.s32 3, %v4287
      %v4289 = vrot.slane %v1138, %v4288
      %v4290 = vlaneseq
      %v4291 = vshrl.u32 %v4290, 7
      %v4292 = vsub.s32 4, %v4291
      %v4293 = vrot.slane %v1138, %v4292
      %v4294 = vlaneseq
      %v4295 = vshrl.u32 %v4294, 7
      %v4296 = vsub.s32 5, %v4295
      %v4297 = vrot.slane %v1138, %v4296
      %v4298 = vlaneseq
      %v4299 = vshrl.u32 %v4298, 7
      %v4300 = vsub.s32 6, %v4299
      %v4301 = vrot.slane %v1138, %v4300
      %v4302 = vlaneseq
      %v4303 = vshrl.u32 %v4302, 7
      %v4304 = vsub.s32 7, %v4303
      %v4305 = vrot.slane %v1138, %v4304
      %v4306 = vlaneseq
      %v4307 = vshrl.u32 %v4306, 7
      %v4308 = vsub.s32 0, %v4307
      %v4309 = vrot.slane %v1145, %v4308
      %v4310 = vlaneseq
      %v4311 = vshrl.u32 %v4310, 7
      %v4312 = vsub.s32 1, %v4311
      %v4313 = vrot.slane %v1145, %v4312
      %v4314 = vlaneseq
      %v4315 = vshrl.u32 %v4314, 7
      %v4316 = vsub.s32 2, %v4315
      %v4317 = vrot.slane %v1145, %v4316
      %v4318 = vlaneseq
      %v4319 = vshrl.u32 %v4318, 7
      %v4320 = vsub.s32 3, %v4319
      %v4321 = vrot.slane %v1145, %v4320
      %v4322 = vlaneseq
      %v4323 = vshrl.u32 %v4322, 7
      %v4324 = vsub.s32 4, %v4323
      %v4325 = vrot.slane %v1145, %v4324
      %v4326 = vlaneseq
      %v4327 = vshrl.u32 %v4326, 7
      %v4328 = vsub.s32 5, %v4327
      %v4329 = vrot.slane %v1145, %v4328
      %v4330 = vlaneseq
      %v4331 = vshrl.u32 %v4330, 7
      %v4332 = vsub.s32 6, %v4331
      %v4333 = vrot.slane %v1145, %v4332
      %v4334 = vlaneseq
      %v4335 = vshrl.u32 %v4334, 7
      %v4336 = vsub.s32 7, %v4335
      %v4337 = vrot.slane %v1145, %v4336
      %v4338 = vlaneseq
      %v4339 = vshrl.u32 %v4338, 7
      %v4340 = vsub.s32 0, %v4339
      %v4341 = vrot.slane %v1152, %v4340
      %v4342 = vlaneseq
      %v4343 = vshrl.u32 %v4342, 7
      %v4344 = vsub.s32 1, %v4343
      %v4345 = vrot.slane %v1152, %v4344
      %v4346 = vlaneseq
      %v4347 = vshrl.u32 %v4346, 7
      %v4348 = vsub.s32 2, %v4347
      %v4349 = vrot.slane %v1152, %v4348
      %v4350 = vlaneseq
      %v4351 = vshrl.u32 %v4350, 7
      %v4352 = vsub.s32 3, %v4351
      %v4353 = vrot.slane %v1152, %v4352
      %v4354 = vlaneseq
      %v4355 = vshrl.u32 %v4354, 7
      %v4356 = vsub.s32 4, %v4355
      %v4357 = vrot.slane %v1152, %v4356
      %v4358 = vlaneseq
      %v4359 = vshrl.u32 %v4358, 7
      %v4360 = vsub.s32 5, %v4359
      %v4361 = vrot.slane %v1152, %v4360
      %v4362 = vlaneseq
      %v4363 = vshrl.u32 %v4362, 7
      %v4364 = vsub.s32 6, %v4363
      %v4365 = vrot.slane %v1152, %v4364
      %v4366 = vlaneseq
      %v4367 = vshrl.u32 %v4366, 7
      %v4368 = vsub.s32 7, %v4367
      %v4369 = vrot.slane %v1152, %v4368
      %v4370 = vlaneseq
      %v4371 = vshrl.u32 %v4370, 7
      %v4372 = vsub.s32 0, %v4371
      %v4373 = vrot.slane %v1159, %v4372
      %v4374 = vlaneseq
      %v4375 = vshrl.u32 %v4374, 7
      %v4376 = vsub.s32 1, %v4375
      %v4377 = vrot.slane %v1159, %v4376
      %v4378 = vlaneseq
      %v4379 = vshrl.u32 %v4378, 7
      %v4380 = vsub.s32 2, %v4379
      %v4381 = vrot.slane %v1159, %v4380
      %v4382 = vlaneseq
      %v4383 = vshrl.u32 %v4382, 7
      %v4384 = vsub.s32 3, %v4383
      %v4385 = vrot.slane %v1159, %v4384
      %v4386 = vlaneseq
      %v4387 = vshrl.u32 %v4386, 7
      %v4388 = vsub.s32 4, %v4387
      %v4389 = vrot.slane %v1159, %v4388
      %v4390 = vlaneseq
      %v4391 = vshrl.u32 %v4390, 7
      %v4392 = vsub.s32 5, %v4391
      %v4393 = vrot.slane %v1159, %v4392
      %v4394 = vlaneseq
      %v4395 = vshrl.u32 %v4394, 7
      %v4396 = vsub.s32 6, %v4395
      %v4397 = vrot.slane %v1159, %v4396
      %v4398 = vlaneseq
      %v4399 = vshrl.u32 %v4398, 7
      %v4400 = vsub.s32 7, %v4399
      %v4401 = vrot.slane %v1159, %v4400
      %v4402 = vlaneseq
      %v4403 = vshrl.u32 %v4402, 7
      %v4404 = vsub.s32 0, %v4403
      %v4405 = vrot.slane %v1166, %v4404
      %v4406 = vlaneseq
      %v4407 = vshrl.u32 %v4406, 7
      %v4408 = vsub.s32 1, %v4407
      %v4409 = vrot.slane %v1166, %v4408
      %v4410 = vlaneseq
      %v4411 = vshrl.u32 %v4410, 7
      %v4412 = vsub.s32 2, %v4411
      %v4413 = vrot.slane %v1166, %v4412
      %v4414 = vlaneseq
      %v4415 = vshrl.u32 %v4414, 7
      %v4416 = vsub.s32 3, %v4415
      %v4417 = vrot.slane %v1166, %v4416
      %v4418 = vlaneseq
      %v4419 = vshrl.u32 %v4418, 7
      %v4420 = vsub.s32 4, %v4419
      %v4421 = vrot.slane %v1166, %v4420
      %v4422 = vlaneseq
      %v4423 = vshrl.u32 %v4422, 7
      %v4424 = vsub.s32 5, %v4423
      %v4425 = vrot.slane %v1166, %v4424
      %v4426 = vlaneseq
      %v4427 = vshrl.u32 %v4426, 7
      %v4428 = vsub.s32 6, %v4427
      %v4429 = vrot.slane %v1166, %v4428
      %v4430 = vlaneseq
      %v4431 = vshrl.u32 %v4430, 7
      %v4432 = vsub.s32 7, %v4431
      %v4433 = vrot.slane %v1166, %v4432
      %v4434 = vlaneseq
      %v4435 = vshrl.u32 %v4434, 7
      %v4436 = vsub.s32 0, %v4435
      %v4437 = vrot.slane %v1173, %v4436
      %v4438 = vlaneseq
      %v4439 = vshrl.u32 %v4438, 7
      %v4440 = vsub.s32 1, %v4439
      %v4441 = vrot.slane %v1173, %v4440
      %v4442 = vlaneseq
      %v4443 = vshrl.u32 %v4442, 7
      %v4444 = vsub.s32 2, %v4443
      %v4445 = vrot.slane %v1173, %v4444
      %v4446 = vlaneseq
      %v4447 = vshrl.u32 %v4446, 7
      %v4448 = vsub.s32 3, %v4447
      %v4449 = vrot.slane %v1173, %v4448
      %v4450 = vlaneseq
      %v4451 = vshrl.u32 %v4450, 7
      %v4452 = vsub.s32 4, %v4451
      %v4453 = vrot.slane %v1173, %v4452
      %v4454 = vlaneseq
      %v4455 = vshrl.u32 %v4454, 7
      %v4456 = vsub.s32 5, %v4455
      %v4457 = vrot.slane %v1173, %v4456
      %v4458 = vlaneseq
      %v4459 = vshrl.u32 %v4458, 7
      %v4460 = vsub.s32 6, %v4459
      %v4461 = vrot.slane %v1173, %v4460
      %v4462 = vlaneseq
      %v4463 = vshrl.u32 %v4462, 7
      %v4464 = vsub.s32 7, %v4463
      %v4465 = vrot.slane %v1173, %v4464
      %v4466 = vsel %vm491, %v4213, 0.0
      %v4467 = vsel %vm491, %v4217, 0.0
      %v4468 = vsel %vm491, %v4221, 0.0
      %v4469 = vsel %vm491, %v4225, 0.0
      %v4470 = vsel %vm491, %v4229, 0.0
      %v4471 = vsel %vm491, %v4233, 0.0
      %v4472 = vsel %vm491, %v4237, 0.0
      %v4473 = vsel %vm491, %v4241, 0.0
      %v4474 = vsel %vm491, %v4245, 0.0
      %v4475 = vsel %vm491, %v4249, 0.0
      %v4476 = vsel %vm491, %v4253, 0.0
      %v4477 = vsel %vm491, %v4257, 0.0
      %v4478 = vsel %vm491, %v4261, 0.0
      %v4479 = vsel %vm491, %v4265, 0.0
      %v4480 = vsel %vm491, %v4269, 0.0
      %v4481 = vsel %vm491, %v4273, 0.0
      %v4482 = vsel %vm491, %v4277, 0.0
      %v4483 = vsel %vm491, %v4281, 0.0
      %v4484 = vsel %vm491, %v4285, 0.0
      %v4485 = vsel %vm491, %v4289, 0.0
      %v4486 = vsel %vm491, %v4293, 0.0
      %v4487 = vsel %vm491, %v4297, 0.0
      %v4488 = vsel %vm491, %v4301, 0.0
      %v4489 = vsel %vm491, %v4305, 0.0
      %v4490 = vsel %vm491, %v4309, 0.0
      %v4491 = vsel %vm491, %v4313, 0.0
      %v4492 = vsel %vm491, %v4317, 0.0
      %v4493 = vsel %vm491, %v4321, 0.0
      %v4494 = vsel %vm491, %v4325, 0.0
      %v4495 = vsel %vm491, %v4329, 0.0
      %v4496 = vsel %vm491, %v4333, 0.0
      %v4497 = vsel %vm491, %v4337, 0.0
      %v4498 = vsel %vm491, %v4341, 0.0
      %v4499 = vsel %vm491, %v4345, 0.0
      %v4500 = vsel %vm491, %v4349, 0.0
      %v4501 = vsel %vm491, %v4353, 0.0
      %v4502 = vsel %vm491, %v4357, 0.0
      %v4503 = vsel %vm491, %v4361, 0.0
      %v4504 = vsel %vm491, %v4365, 0.0
      %v4505 = vsel %vm491, %v4369, 0.0
      %v4506 = vsel %vm491, %v4373, 0.0
      %v4507 = vsel %vm491, %v4377, 0.0
      %v4508 = vsel %vm491, %v4381, 0.0
      %v4509 = vsel %vm491, %v4385, 0.0
      %v4510 = vsel %vm491, %v4389, 0.0
      %v4511 = vsel %vm491, %v4393, 0.0
      %v4512 = vsel %vm491, %v4397, 0.0
      %v4513 = vsel %vm491, %v4401, 0.0
      %v4514 = vsel %vm491, %v4405, 0.0
      %v4515 = vsel %vm491, %v4409, 0.0
      %v4516 = vsel %vm491, %v4413, 0.0
      %v4517 = vsel %vm491, %v4417, 0.0
      %v4518 = vsel %vm491, %v4421, 0.0
      %v4519 = vsel %vm491, %v4425, 0.0
      %v4520 = vsel %vm491, %v4429, 0.0
      %v4521 = vsel %vm491, %v4433, 0.0
      %v4522 = vsel %vm491, %v4437, 0.0
      %v4523 = vsel %vm491, %v4441, 0.0
      %v4524 = vsel %vm491, %v4445, 0.0
      %v4525 = vsel %vm491, %v4449, 0.0
      %v4526 = vsel %vm491, %v4453, 0.0
      %v4527 = vsel %vm491, %v4457, 0.0
      %v4528 = vsel %vm491, %v4461, 0.0
      %v4529 = vsel %vm491, %v4465, 0.0
      %v4530 = vlaneseq
      %v4531 = vshrl.u32 %v4530, 7
      %v4532 = vsub.s32 0, %v4531
      %v4533 = vrot.slane %v1278, %v4532
      %v4534 = vlaneseq
      %v4535 = vshrl.u32 %v4534, 7
      %v4536 = vsub.s32 1, %v4535
      %v4537 = vrot.slane %v1278, %v4536
      %v4538 = vlaneseq
      %v4539 = vshrl.u32 %v4538, 7
      %v4540 = vsub.s32 2, %v4539
      %v4541 = vrot.slane %v1278, %v4540
      %v4542 = vlaneseq
      %v4543 = vshrl.u32 %v4542, 7
      %v4544 = vsub.s32 3, %v4543
      %v4545 = vrot.slane %v1278, %v4544
      %v4546 = vlaneseq
      %v4547 = vshrl.u32 %v4546, 7
      %v4548 = vsub.s32 4, %v4547
      %v4549 = vrot.slane %v1278, %v4548
      %v4550 = vlaneseq
      %v4551 = vshrl.u32 %v4550, 7
      %v4552 = vsub.s32 5, %v4551
      %v4553 = vrot.slane %v1278, %v4552
      %v4554 = vlaneseq
      %v4555 = vshrl.u32 %v4554, 7
      %v4556 = vsub.s32 6, %v4555
      %v4557 = vrot.slane %v1278, %v4556
      %v4558 = vlaneseq
      %v4559 = vshrl.u32 %v4558, 7
      %v4560 = vsub.s32 7, %v4559
      %v4561 = vrot.slane %v1278, %v4560
      %v4562 = vlaneseq
      %v4563 = vshrl.u32 %v4562, 7
      %v4564 = vsub.s32 0, %v4563
      %v4565 = vrot.slane %v1285, %v4564
      %v4566 = vlaneseq
      %v4567 = vshrl.u32 %v4566, 7
      %v4568 = vsub.s32 1, %v4567
      %v4569 = vrot.slane %v1285, %v4568
      %v4570 = vlaneseq
      %v4571 = vshrl.u32 %v4570, 7
      %v4572 = vsub.s32 2, %v4571
      %v4573 = vrot.slane %v1285, %v4572
      %v4574 = vlaneseq
      %v4575 = vshrl.u32 %v4574, 7
      %v4576 = vsub.s32 3, %v4575
      %v4577 = vrot.slane %v1285, %v4576
      %v4578 = vlaneseq
      %v4579 = vshrl.u32 %v4578, 7
      %v4580 = vsub.s32 4, %v4579
      %v4581 = vrot.slane %v1285, %v4580
      %v4582 = vlaneseq
      %v4583 = vshrl.u32 %v4582, 7
      %v4584 = vsub.s32 5, %v4583
      %v4585 = vrot.slane %v1285, %v4584
      %v4586 = vlaneseq
      %v4587 = vshrl.u32 %v4586, 7
      %v4588 = vsub.s32 6, %v4587
      %v4589 = vrot.slane %v1285, %v4588
      %v4590 = vlaneseq
      %v4591 = vshrl.u32 %v4590, 7
      %v4592 = vsub.s32 7, %v4591
      %v4593 = vrot.slane %v1285, %v4592
      %v4594 = vlaneseq
      %v4595 = vshrl.u32 %v4594, 7
      %v4596 = vsub.s32 0, %v4595
      %v4597 = vrot.slane %v1292, %v4596
      %v4598 = vlaneseq
      %v4599 = vshrl.u32 %v4598, 7
      %v4600 = vsub.s32 1, %v4599
      %v4601 = vrot.slane %v1292, %v4600
      %v4602 = vlaneseq
      %v4603 = vshrl.u32 %v4602, 7
      %v4604 = vsub.s32 2, %v4603
      %v4605 = vrot.slane %v1292, %v4604
      %v4606 = vlaneseq
      %v4607 = vshrl.u32 %v4606, 7
      %v4608 = vsub.s32 3, %v4607
      %v4609 = vrot.slane %v1292, %v4608
      %v4610 = vlaneseq
      %v4611 = vshrl.u32 %v4610, 7
      %v4612 = vsub.s32 4, %v4611
      %v4613 = vrot.slane %v1292, %v4612
      %v4614 = vlaneseq
      %v4615 = vshrl.u32 %v4614, 7
      %v4616 = vsub.s32 5, %v4615
      %v4617 = vrot.slane %v1292, %v4616
      %v4618 = vlaneseq
      %v4619 = vshrl.u32 %v4618, 7
      %v4620 = vsub.s32 6, %v4619
      %v4621 = vrot.slane %v1292, %v4620
      %v4622 = vlaneseq
      %v4623 = vshrl.u32 %v4622, 7
      %v4624 = vsub.s32 7, %v4623
      %v4625 = vrot.slane %v1292, %v4624
      %v4626 = vlaneseq
      %v4627 = vshrl.u32 %v4626, 7
      %v4628 = vsub.s32 0, %v4627
      %v4629 = vrot.slane %v1299, %v4628
      %v4630 = vlaneseq
      %v4631 = vshrl.u32 %v4630, 7
      %v4632 = vsub.s32 1, %v4631
      %v4633 = vrot.slane %v1299, %v4632
      %v4634 = vlaneseq
      %v4635 = vshrl.u32 %v4634, 7
      %v4636 = vsub.s32 2, %v4635
      %v4637 = vrot.slane %v1299, %v4636
      %v4638 = vlaneseq
      %v4639 = vshrl.u32 %v4638, 7
      %v4640 = vsub.s32 3, %v4639
      %v4641 = vrot.slane %v1299, %v4640
      %v4642 = vlaneseq
      %v4643 = vshrl.u32 %v4642, 7
      %v4644 = vsub.s32 4, %v4643
      %v4645 = vrot.slane %v1299, %v4644
      %v4646 = vlaneseq
      %v4647 = vshrl.u32 %v4646, 7
      %v4648 = vsub.s32 5, %v4647
      %v4649 = vrot.slane %v1299, %v4648
      %v4650 = vlaneseq
      %v4651 = vshrl.u32 %v4650, 7
      %v4652 = vsub.s32 6, %v4651
      %v4653 = vrot.slane %v1299, %v4652
      %v4654 = vlaneseq
      %v4655 = vshrl.u32 %v4654, 7
      %v4656 = vsub.s32 7, %v4655
      %v4657 = vrot.slane %v1299, %v4656
      %v4658 = vlaneseq
      %v4659 = vshrl.u32 %v4658, 7
      %v4660 = vsub.s32 0, %v4659
      %v4661 = vrot.slane %v1306, %v4660
      %v4662 = vlaneseq
      %v4663 = vshrl.u32 %v4662, 7
      %v4664 = vsub.s32 1, %v4663
      %v4665 = vrot.slane %v1306, %v4664
      %v4666 = vlaneseq
      %v4667 = vshrl.u32 %v4666, 7
      %v4668 = vsub.s32 2, %v4667
      %v4669 = vrot.slane %v1306, %v4668
      %v4670 = vlaneseq
      %v4671 = vshrl.u32 %v4670, 7
      %v4672 = vsub.s32 3, %v4671
      %v4673 = vrot.slane %v1306, %v4672
      %v4674 = vlaneseq
      %v4675 = vshrl.u32 %v4674, 7
      %v4676 = vsub.s32 4, %v4675
      %v4677 = vrot.slane %v1306, %v4676
      %v4678 = vlaneseq
      %v4679 = vshrl.u32 %v4678, 7
      %v4680 = vsub.s32 5, %v4679
      %v4681 = vrot.slane %v1306, %v4680
      %v4682 = vlaneseq
      %v4683 = vshrl.u32 %v4682, 7
      %v4684 = vsub.s32 6, %v4683
      %v4685 = vrot.slane %v1306, %v4684
      %v4686 = vlaneseq
      %v4687 = vshrl.u32 %v4686, 7
      %v4688 = vsub.s32 7, %v4687
      %v4689 = vrot.slane %v1306, %v4688
      %v4690 = vlaneseq
      %v4691 = vshrl.u32 %v4690, 7
      %v4692 = vsub.s32 0, %v4691
      %v4693 = vrot.slane %v1313, %v4692
      %v4694 = vlaneseq
      %v4695 = vshrl.u32 %v4694, 7
      %v4696 = vsub.s32 1, %v4695
      %v4697 = vrot.slane %v1313, %v4696
      %v4698 = vlaneseq
      %v4699 = vshrl.u32 %v4698, 7
      %v4700 = vsub.s32 2, %v4699
      %v4701 = vrot.slane %v1313, %v4700
      %v4702 = vlaneseq
      %v4703 = vshrl.u32 %v4702, 7
      %v4704 = vsub.s32 3, %v4703
      %v4705 = vrot.slane %v1313, %v4704
      %v4706 = vlaneseq
      %v4707 = vshrl.u32 %v4706, 7
      %v4708 = vsub.s32 4, %v4707
      %v4709 = vrot.slane %v1313, %v4708
      %v4710 = vlaneseq
      %v4711 = vshrl.u32 %v4710, 7
      %v4712 = vsub.s32 5, %v4711
      %v4713 = vrot.slane %v1313, %v4712
      %v4714 = vlaneseq
      %v4715 = vshrl.u32 %v4714, 7
      %v4716 = vsub.s32 6, %v4715
      %v4717 = vrot.slane %v1313, %v4716
      %v4718 = vlaneseq
      %v4719 = vshrl.u32 %v4718, 7
      %v4720 = vsub.s32 7, %v4719
      %v4721 = vrot.slane %v1313, %v4720
      %v4722 = vlaneseq
      %v4723 = vshrl.u32 %v4722, 7
      %v4724 = vsub.s32 0, %v4723
      %v4725 = vrot.slane %v1320, %v4724
      %v4726 = vlaneseq
      %v4727 = vshrl.u32 %v4726, 7
      %v4728 = vsub.s32 1, %v4727
      %v4729 = vrot.slane %v1320, %v4728
      %v4730 = vlaneseq
      %v4731 = vshrl.u32 %v4730, 7
      %v4732 = vsub.s32 2, %v4731
      %v4733 = vrot.slane %v1320, %v4732
      %v4734 = vlaneseq
      %v4735 = vshrl.u32 %v4734, 7
      %v4736 = vsub.s32 3, %v4735
      %v4737 = vrot.slane %v1320, %v4736
      %v4738 = vlaneseq
      %v4739 = vshrl.u32 %v4738, 7
      %v4740 = vsub.s32 4, %v4739
      %v4741 = vrot.slane %v1320, %v4740
      %v4742 = vlaneseq
      %v4743 = vshrl.u32 %v4742, 7
      %v4744 = vsub.s32 5, %v4743
      %v4745 = vrot.slane %v1320, %v4744
      %v4746 = vlaneseq
      %v4747 = vshrl.u32 %v4746, 7
      %v4748 = vsub.s32 6, %v4747
      %v4749 = vrot.slane %v1320, %v4748
      %v4750 = vlaneseq
      %v4751 = vshrl.u32 %v4750, 7
      %v4752 = vsub.s32 7, %v4751
      %v4753 = vrot.slane %v1320, %v4752
      %v4754 = vlaneseq
      %v4755 = vshrl.u32 %v4754, 7
      %v4756 = vsub.s32 0, %v4755
      %v4757 = vrot.slane %v1327, %v4756
      %v4758 = vlaneseq
      %v4759 = vshrl.u32 %v4758, 7
      %v4760 = vsub.s32 1, %v4759
      %v4761 = vrot.slane %v1327, %v4760
      %v4762 = vlaneseq
      %v4763 = vshrl.u32 %v4762, 7
      %v4764 = vsub.s32 2, %v4763
      %v4765 = vrot.slane %v1327, %v4764
      %v4766 = vlaneseq
      %v4767 = vshrl.u32 %v4766, 7
      %v4768 = vsub.s32 3, %v4767
      %v4769 = vrot.slane %v1327, %v4768
      %v4770 = vlaneseq
      %v4771 = vshrl.u32 %v4770, 7
      %v4772 = vsub.s32 4, %v4771
      %v4773 = vrot.slane %v1327, %v4772
      %v4774 = vlaneseq
      %v4775 = vshrl.u32 %v4774, 7
      %v4776 = vsub.s32 5, %v4775
      %v4777 = vrot.slane %v1327, %v4776
      %v4778 = vlaneseq
      %v4779 = vshrl.u32 %v4778, 7
      %v4780 = vsub.s32 6, %v4779
      %v4781 = vrot.slane %v1327, %v4780
      %v4782 = vlaneseq
      %v4783 = vshrl.u32 %v4782, 7
      %v4784 = vsub.s32 7, %v4783
      %v4785 = vrot.slane %v1327, %v4784
      %v4786 = vsel %vm535, %v4533, 0.0
      %v4787 = vsel %vm535, %v4537, 0.0
      %v4788 = vsel %vm535, %v4541, 0.0
      %v4789 = vsel %vm535, %v4545, 0.0
      %v4790 = vsel %vm535, %v4549, 0.0
      %v4791 = vsel %vm535, %v4553, 0.0
      %v4792 = vsel %vm535, %v4557, 0.0
      %v4793 = vsel %vm535, %v4561, 0.0
      %v4794 = vsel %vm535, %v4565, 0.0
      %v4795 = vsel %vm535, %v4569, 0.0
      %v4796 = vsel %vm535, %v4573, 0.0
      %v4797 = vsel %vm535, %v4577, 0.0
      %v4798 = vsel %vm535, %v4581, 0.0
      %v4799 = vsel %vm535, %v4585, 0.0
      %v4800 = vsel %vm535, %v4589, 0.0
      %v4801 = vsel %vm535, %v4593, 0.0
      %v4802 = vsel %vm535, %v4597, 0.0
      %v4803 = vsel %vm535, %v4601, 0.0
      %v4804 = vsel %vm535, %v4605, 0.0
      %v4805 = vsel %vm535, %v4609, 0.0
      %v4806 = vsel %vm535, %v4613, 0.0
      %v4807 = vsel %vm535, %v4617, 0.0
      %v4808 = vsel %vm535, %v4621, 0.0
      %v4809 = vsel %vm535, %v4625, 0.0
      %v4810 = vsel %vm535, %v4629, 0.0
      %v4811 = vsel %vm535, %v4633, 0.0
      %v4812 = vsel %vm535, %v4637, 0.0
      %v4813 = vsel %vm535, %v4641, 0.0
      %v4814 = vsel %vm535, %v4645, 0.0
      %v4815 = vsel %vm535, %v4649, 0.0
      %v4816 = vsel %vm535, %v4653, 0.0
      %v4817 = vsel %vm535, %v4657, 0.0
      %v4818 = vsel %vm535, %v4661, 0.0
      %v4819 = vsel %vm535, %v4665, 0.0
      %v4820 = vsel %vm535, %v4669, 0.0
      %v4821 = vsel %vm535, %v4673, 0.0
      %v4822 = vsel %vm535, %v4677, 0.0
      %v4823 = vsel %vm535, %v4681, 0.0
      %v4824 = vsel %vm535, %v4685, 0.0
      %v4825 = vsel %vm535, %v4689, 0.0
      %v4826 = vsel %vm535, %v4693, 0.0
      %v4827 = vsel %vm535, %v4697, 0.0
      %v4828 = vsel %vm535, %v4701, 0.0
      %v4829 = vsel %vm535, %v4705, 0.0
      %v4830 = vsel %vm535, %v4709, 0.0
      %v4831 = vsel %vm535, %v4713, 0.0
      %v4832 = vsel %vm535, %v4717, 0.0
      %v4833 = vsel %vm535, %v4721, 0.0
      %v4834 = vsel %vm535, %v4725, 0.0
      %v4835 = vsel %vm535, %v4729, 0.0
      %v4836 = vsel %vm535, %v4733, 0.0
      %v4837 = vsel %vm535, %v4737, 0.0
      %v4838 = vsel %vm535, %v4741, 0.0
      %v4839 = vsel %vm535, %v4745, 0.0
      %v4840 = vsel %vm535, %v4749, 0.0
      %v4841 = vsel %vm535, %v4753, 0.0
      %v4842 = vsel %vm535, %v4757, 0.0
      %v4843 = vsel %vm535, %v4761, 0.0
      %v4844 = vsel %vm535, %v4765, 0.0
      %v4845 = vsel %vm535, %v4769, 0.0
      %v4846 = vsel %vm535, %v4773, 0.0
      %v4847 = vsel %vm535, %v4777, 0.0
      %v4848 = vsel %vm535, %v4781, 0.0
      %v4849 = vsel %vm535, %v4785, 0.0
      %v4850 = vadd.f32 %v4466, %v4786
      %v4851 = vadd.f32 %v4467, %v4787
      %v4852 = vadd.f32 %v4468, %v4788
      %v4853 = vadd.f32 %v4469, %v4789
      %v4854 = vadd.f32 %v4470, %v4790
      %v4855 = vadd.f32 %v4471, %v4791
      %v4856 = vadd.f32 %v4472, %v4792
      %v4857 = vadd.f32 %v4473, %v4793
      %v4858 = vadd.f32 %v4474, %v4794
      %v4859 = vadd.f32 %v4475, %v4795
      %v4860 = vadd.f32 %v4476, %v4796
      %v4861 = vadd.f32 %v4477, %v4797
      %v4862 = vadd.f32 %v4478, %v4798
      %v4863 = vadd.f32 %v4479, %v4799
      %v4864 = vadd.f32 %v4480, %v4800
      %v4865 = vadd.f32 %v4481, %v4801
      %v4866 = vadd.f32 %v4482, %v4802
      %v4867 = vadd.f32 %v4483, %v4803
      %v4868 = vadd.f32 %v4484, %v4804
      %v4869 = vadd.f32 %v4485, %v4805
      %v4870 = vadd.f32 %v4486, %v4806
      %v4871 = vadd.f32 %v4487, %v4807
      %v4872 = vadd.f32 %v4488, %v4808
      %v4873 = vadd.f32 %v4489, %v4809
      %v4874 = vadd.f32 %v4490, %v4810
      %v4875 = vadd.f32 %v4491, %v4811
      %v4876 = vadd.f32 %v4492, %v4812
      %v4877 = vadd.f32 %v4493, %v4813
      %v4878 = vadd.f32 %v4494, %v4814
      %v4879 = vadd.f32 %v4495, %v4815
      %v4880 = vadd.f32 %v4496, %v4816
      %v4881 = vadd.f32 %v4497, %v4817
      %v4882 = vadd.f32 %v4498, %v4818
      %v4883 = vadd.f32 %v4499, %v4819
      %v4884 = vadd.f32 %v4500, %v4820
      %v4885 = vadd.f32 %v4501, %v4821
      %v4886 = vadd.f32 %v4502, %v4822
      %v4887 = vadd.f32 %v4503, %v4823
      %v4888 = vadd.f32 %v4504, %v4824
      %v4889 = vadd.f32 %v4505, %v4825
      %v4890 = vadd.f32 %v4506, %v4826
      %v4891 = vadd.f32 %v4507, %v4827
      %v4892 = vadd.f32 %v4508, %v4828
      %v4893 = vadd.f32 %v4509, %v4829
      %v4894 = vadd.f32 %v4510, %v4830
      %v4895 = vadd.f32 %v4511, %v4831
      %v4896 = vadd.f32 %v4512, %v4832
      %v4897 = vadd.f32 %v4513, %v4833
      %v4898 = vadd.f32 %v4514, %v4834
      %v4899 = vadd.f32 %v4515, %v4835
      %v4900 = vadd.f32 %v4516, %v4836
      %v4901 = vadd.f32 %v4517, %v4837
      %v4902 = vadd.f32 %v4518, %v4838
      %v4903 = vadd.f32 %v4519, %v4839
      %v4904 = vadd.f32 %v4520, %v4840
      %v4905 = vadd.f32 %v4521, %v4841
      %v4906 = vadd.f32 %v4522, %v4842
      %v4907 = vadd.f32 %v4523, %v4843
      %v4908 = vadd.f32 %v4524, %v4844
      %v4909 = vadd.f32 %v4525, %v4845
      %v4910 = vadd.f32 %v4526, %v4846
      %v4911 = vadd.f32 %v4527, %v4847
      %v4912 = vadd.f32 %v4528, %v4848
      %v4913 = vadd.f32 %v4529, %v4849
      %v4914 = vlaneseq
      %v4915 = vshrl.u32 %v4914, 7
      %v4916 = vsub.s32 0, %v4915
      %v4917 = vrot.slane %v1432, %v4916
      %v4918 = vlaneseq
      %v4919 = vshrl.u32 %v4918, 7
      %v4920 = vsub.s32 1, %v4919
      %v4921 = vrot.slane %v1432, %v4920
      %v4922 = vlaneseq
      %v4923 = vshrl.u32 %v4922, 7
      %v4924 = vsub.s32 2, %v4923
      %v4925 = vrot.slane %v1432, %v4924
      %v4926 = vlaneseq
      %v4927 = vshrl.u32 %v4926, 7
      %v4928 = vsub.s32 3, %v4927
      %v4929 = vrot.slane %v1432, %v4928
      %v4930 = vlaneseq
      %v4931 = vshrl.u32 %v4930, 7
      %v4932 = vsub.s32 4, %v4931
      %v4933 = vrot.slane %v1432, %v4932
      %v4934 = vlaneseq
      %v4935 = vshrl.u32 %v4934, 7
      %v4936 = vsub.s32 5, %v4935
      %v4937 = vrot.slane %v1432, %v4936
      %v4938 = vlaneseq
      %v4939 = vshrl.u32 %v4938, 7
      %v4940 = vsub.s32 6, %v4939
      %v4941 = vrot.slane %v1432, %v4940
      %v4942 = vlaneseq
      %v4943 = vshrl.u32 %v4942, 7
      %v4944 = vsub.s32 7, %v4943
      %v4945 = vrot.slane %v1432, %v4944
      %v4946 = vlaneseq
      %v4947 = vshrl.u32 %v4946, 7
      %v4948 = vsub.s32 0, %v4947
      %v4949 = vrot.slane %v1439, %v4948
      %v4950 = vlaneseq
      %v4951 = vshrl.u32 %v4950, 7
      %v4952 = vsub.s32 1, %v4951
      %v4953 = vrot.slane %v1439, %v4952
      %v4954 = vlaneseq
      %v4955 = vshrl.u32 %v4954, 7
      %v4956 = vsub.s32 2, %v4955
      %v4957 = vrot.slane %v1439, %v4956
      %v4958 = vlaneseq
      %v4959 = vshrl.u32 %v4958, 7
      %v4960 = vsub.s32 3, %v4959
      %v4961 = vrot.slane %v1439, %v4960
      %v4962 = vlaneseq
      %v4963 = vshrl.u32 %v4962, 7
      %v4964 = vsub.s32 4, %v4963
      %v4965 = vrot.slane %v1439, %v4964
      %v4966 = vlaneseq
      %v4967 = vshrl.u32 %v4966, 7
      %v4968 = vsub.s32 5, %v4967
      %v4969 = vrot.slane %v1439, %v4968
      %v4970 = vlaneseq
      %v4971 = vshrl.u32 %v4970, 7
      %v4972 = vsub.s32 6, %v4971
      %v4973 = vrot.slane %v1439, %v4972
      %v4974 = vlaneseq
      %v4975 = vshrl.u32 %v4974, 7
      %v4976 = vsub.s32 7, %v4975
      %v4977 = vrot.slane %v1439, %v4976
      %v4978 = vlaneseq
      %v4979 = vshrl.u32 %v4978, 7
      %v4980 = vsub.s32 0, %v4979
      %v4981 = vrot.slane %v1446, %v4980
      %v4982 = vlaneseq
      %v4983 = vshrl.u32 %v4982, 7
      %v4984 = vsub.s32 1, %v4983
      %v4985 = vrot.slane %v1446, %v4984
      %v4986 = vlaneseq
      %v4987 = vshrl.u32 %v4986, 7
      %v4988 = vsub.s32 2, %v4987
      %v4989 = vrot.slane %v1446, %v4988
      %v4990 = vlaneseq
      %v4991 = vshrl.u32 %v4990, 7
      %v4992 = vsub.s32 3, %v4991
      %v4993 = vrot.slane %v1446, %v4992
      %v4994 = vlaneseq
      %v4995 = vshrl.u32 %v4994, 7
      %v4996 = vsub.s32 4, %v4995
      %v4997 = vrot.slane %v1446, %v4996
      %v4998 = vlaneseq
      %v4999 = vshrl.u32 %v4998, 7
      %v5000 = vsub.s32 5, %v4999
      %v5001 = vrot.slane %v1446, %v5000
      %v5002 = vlaneseq
      %v5003 = vshrl.u32 %v5002, 7
      %v5004 = vsub.s32 6, %v5003
      %v5005 = vrot.slane %v1446, %v5004
      %v5006 = vlaneseq
      %v5007 = vshrl.u32 %v5006, 7
      %v5008 = vsub.s32 7, %v5007
      %v5009 = vrot.slane %v1446, %v5008
      %v5010 = vlaneseq
      %v5011 = vshrl.u32 %v5010, 7
      %v5012 = vsub.s32 0, %v5011
      %v5013 = vrot.slane %v1453, %v5012
      %v5014 = vlaneseq
      %v5015 = vshrl.u32 %v5014, 7
      %v5016 = vsub.s32 1, %v5015
      %v5017 = vrot.slane %v1453, %v5016
      %v5018 = vlaneseq
      %v5019 = vshrl.u32 %v5018, 7
      %v5020 = vsub.s32 2, %v5019
      %v5021 = vrot.slane %v1453, %v5020
      %v5022 = vlaneseq
      %v5023 = vshrl.u32 %v5022, 7
      %v5024 = vsub.s32 3, %v5023
      %v5025 = vrot.slane %v1453, %v5024
      %v5026 = vlaneseq
      %v5027 = vshrl.u32 %v5026, 7
      %v5028 = vsub.s32 4, %v5027
      %v5029 = vrot.slane %v1453, %v5028
      %v5030 = vlaneseq
      %v5031 = vshrl.u32 %v5030, 7
      %v5032 = vsub.s32 5, %v5031
      %v5033 = vrot.slane %v1453, %v5032
      %v5034 = vlaneseq
      %v5035 = vshrl.u32 %v5034, 7
      %v5036 = vsub.s32 6, %v5035
      %v5037 = vrot.slane %v1453, %v5036
      %v5038 = vlaneseq
      %v5039 = vshrl.u32 %v5038, 7
      %v5040 = vsub.s32 7, %v5039
      %v5041 = vrot.slane %v1453, %v5040
      %v5042 = vlaneseq
      %v5043 = vshrl.u32 %v5042, 7
      %v5044 = vsub.s32 0, %v5043
      %v5045 = vrot.slane %v1460, %v5044
      %v5046 = vlaneseq
      %v5047 = vshrl.u32 %v5046, 7
      %v5048 = vsub.s32 1, %v5047
      %v5049 = vrot.slane %v1460, %v5048
      %v5050 = vlaneseq
      %v5051 = vshrl.u32 %v5050, 7
      %v5052 = vsub.s32 2, %v5051
      %v5053 = vrot.slane %v1460, %v5052
      %v5054 = vlaneseq
      %v5055 = vshrl.u32 %v5054, 7
      %v5056 = vsub.s32 3, %v5055
      %v5057 = vrot.slane %v1460, %v5056
      %v5058 = vlaneseq
      %v5059 = vshrl.u32 %v5058, 7
      %v5060 = vsub.s32 4, %v5059
      %v5061 = vrot.slane %v1460, %v5060
      %v5062 = vlaneseq
      %v5063 = vshrl.u32 %v5062, 7
      %v5064 = vsub.s32 5, %v5063
      %v5065 = vrot.slane %v1460, %v5064
      %v5066 = vlaneseq
      %v5067 = vshrl.u32 %v5066, 7
      %v5068 = vsub.s32 6, %v5067
      %v5069 = vrot.slane %v1460, %v5068
      %v5070 = vlaneseq
      %v5071 = vshrl.u32 %v5070, 7
      %v5072 = vsub.s32 7, %v5071
      %v5073 = vrot.slane %v1460, %v5072
      %v5074 = vlaneseq
      %v5075 = vshrl.u32 %v5074, 7
      %v5076 = vsub.s32 0, %v5075
      %v5077 = vrot.slane %v1467, %v5076
      %v5078 = vlaneseq
      %v5079 = vshrl.u32 %v5078, 7
      %v5080 = vsub.s32 1, %v5079
      %v5081 = vrot.slane %v1467, %v5080
      %v5082 = vlaneseq
      %v5083 = vshrl.u32 %v5082, 7
      %v5084 = vsub.s32 2, %v5083
      %v5085 = vrot.slane %v1467, %v5084
      %v5086 = vlaneseq
      %v5087 = vshrl.u32 %v5086, 7
      %v5088 = vsub.s32 3, %v5087
      %v5089 = vrot.slane %v1467, %v5088
      %v5090 = vlaneseq
      %v5091 = vshrl.u32 %v5090, 7
      %v5092 = vsub.s32 4, %v5091
      %v5093 = vrot.slane %v1467, %v5092
      %v5094 = vlaneseq
      %v5095 = vshrl.u32 %v5094, 7
      %v5096 = vsub.s32 5, %v5095
      %v5097 = vrot.slane %v1467, %v5096
      %v5098 = vlaneseq
      %v5099 = vshrl.u32 %v5098, 7
      %v5100 = vsub.s32 6, %v5099
      %v5101 = vrot.slane %v1467, %v5100
      %v5102 = vlaneseq
      %v5103 = vshrl.u32 %v5102, 7
      %v5104 = vsub.s32 7, %v5103
      %v5105 = vrot.slane %v1467, %v5104
      %v5106 = vlaneseq
      %v5107 = vshrl.u32 %v5106, 7
      %v5108 = vsub.s32 0, %v5107
      %v5109 = vrot.slane %v1474, %v5108
      %v5110 = vlaneseq
      %v5111 = vshrl.u32 %v5110, 7
      %v5112 = vsub.s32 1, %v5111
      %v5113 = vrot.slane %v1474, %v5112
      %v5114 = vlaneseq
      %v5115 = vshrl.u32 %v5114, 7
      %v5116 = vsub.s32 2, %v5115
      %v5117 = vrot.slane %v1474, %v5116
      %v5118 = vlaneseq
      %v5119 = vshrl.u32 %v5118, 7
      %v5120 = vsub.s32 3, %v5119
      %v5121 = vrot.slane %v1474, %v5120
      %v5122 = vlaneseq
      %v5123 = vshrl.u32 %v5122, 7
      %v5124 = vsub.s32 4, %v5123
      %v5125 = vrot.slane %v1474, %v5124
      %v5126 = vlaneseq
      %v5127 = vshrl.u32 %v5126, 7
      %v5128 = vsub.s32 5, %v5127
      %v5129 = vrot.slane %v1474, %v5128
      %v5130 = vlaneseq
      %v5131 = vshrl.u32 %v5130, 7
      %v5132 = vsub.s32 6, %v5131
      %v5133 = vrot.slane %v1474, %v5132
      %v5134 = vlaneseq
      %v5135 = vshrl.u32 %v5134, 7
      %v5136 = vsub.s32 7, %v5135
      %v5137 = vrot.slane %v1474, %v5136
      %v5138 = vlaneseq
      %v5139 = vshrl.u32 %v5138, 7
      %v5140 = vsub.s32 0, %v5139
      %v5141 = vrot.slane %v1481, %v5140
      %v5142 = vlaneseq
      %v5143 = vshrl.u32 %v5142, 7
      %v5144 = vsub.s32 1, %v5143
      %v5145 = vrot.slane %v1481, %v5144
      %v5146 = vlaneseq
      %v5147 = vshrl.u32 %v5146, 7
      %v5148 = vsub.s32 2, %v5147
      %v5149 = vrot.slane %v1481, %v5148
      %v5150 = vlaneseq
      %v5151 = vshrl.u32 %v5150, 7
      %v5152 = vsub.s32 3, %v5151
      %v5153 = vrot.slane %v1481, %v5152
      %v5154 = vlaneseq
      %v5155 = vshrl.u32 %v5154, 7
      %v5156 = vsub.s32 4, %v5155
      %v5157 = vrot.slane %v1481, %v5156
      %v5158 = vlaneseq
      %v5159 = vshrl.u32 %v5158, 7
      %v5160 = vsub.s32 5, %v5159
      %v5161 = vrot.slane %v1481, %v5160
      %v5162 = vlaneseq
      %v5163 = vshrl.u32 %v5162, 7
      %v5164 = vsub.s32 6, %v5163
      %v5165 = vrot.slane %v1481, %v5164
      %v5166 = vlaneseq
      %v5167 = vshrl.u32 %v5166, 7
      %v5168 = vsub.s32 7, %v5167
      %v5169 = vrot.slane %v1481, %v5168
      %v5170 = vsel %vm579, %v4917, 0.0
      %v5171 = vsel %vm579, %v4921, 0.0
      %v5172 = vsel %vm579, %v4925, 0.0
      %v5173 = vsel %vm579, %v4929, 0.0
      %v5174 = vsel %vm579, %v4933, 0.0
      %v5175 = vsel %vm579, %v4937, 0.0
      %v5176 = vsel %vm579, %v4941, 0.0
      %v5177 = vsel %vm579, %v4945, 0.0
      %v5178 = vsel %vm579, %v4949, 0.0
      %v5179 = vsel %vm579, %v4953, 0.0
      %v5180 = vsel %vm579, %v4957, 0.0
      %v5181 = vsel %vm579, %v4961, 0.0
      %v5182 = vsel %vm579, %v4965, 0.0
      %v5183 = vsel %vm579, %v4969, 0.0
      %v5184 = vsel %vm579, %v4973, 0.0
      %v5185 = vsel %vm579, %v4977, 0.0
      %v5186 = vsel %vm579, %v4981, 0.0
      %v5187 = vsel %vm579, %v4985, 0.0
      %v5188 = vsel %vm579, %v4989, 0.0
      %v5189 = vsel %vm579, %v4993, 0.0
      %v5190 = vsel %vm579, %v4997, 0.0
      %v5191 = vsel %vm579, %v5001, 0.0
      %v5192 = vsel %vm579, %v5005, 0.0
      %v5193 = vsel %vm579, %v5009, 0.0
      %v5194 = vsel %vm579, %v5013, 0.0
      %v5195 = vsel %vm579, %v5017, 0.0
      %v5196 = vsel %vm579, %v5021, 0.0
      %v5197 = vsel %vm579, %v5025, 0.0
      %v5198 = vsel %vm579, %v5029, 0.0
      %v5199 = vsel %vm579, %v5033, 0.0
      %v5200 = vsel %vm579, %v5037, 0.0
      %v5201 = vsel %vm579, %v5041, 0.0
      %v5202 = vsel %vm579, %v5045, 0.0
      %v5203 = vsel %vm579, %v5049, 0.0
      %v5204 = vsel %vm579, %v5053, 0.0
      %v5205 = vsel %vm579, %v5057, 0.0
      %v5206 = vsel %vm579, %v5061, 0.0
      %v5207 = vsel %vm579, %v5065, 0.0
      %v5208 = vsel %vm579, %v5069, 0.0
      %v5209 = vsel %vm579, %v5073, 0.0
      %v5210 = vsel %vm579, %v5077, 0.0
      %v5211 = vsel %vm579, %v5081, 0.0
      %v5212 = vsel %vm579, %v5085, 0.0
      %v5213 = vsel %vm579, %v5089, 0.0
      %v5214 = vsel %vm579, %v5093, 0.0
      %v5215 = vsel %vm579, %v5097, 0.0
      %v5216 = vsel %vm579, %v5101, 0.0
      %v5217 = vsel %vm579, %v5105, 0.0
      %v5218 = vsel %vm579, %v5109, 0.0
      %v5219 = vsel %vm579, %v5113, 0.0
      %v5220 = vsel %vm579, %v5117, 0.0
      %v5221 = vsel %vm579, %v5121, 0.0
      %v5222 = vsel %vm579, %v5125, 0.0
      %v5223 = vsel %vm579, %v5129, 0.0
      %v5224 = vsel %vm579, %v5133, 0.0
      %v5225 = vsel %vm579, %v5137, 0.0
      %v5226 = vsel %vm579, %v5141, 0.0
      %v5227 = vsel %vm579, %v5145, 0.0
      %v5228 = vsel %vm579, %v5149, 0.0
      %v5229 = vsel %vm579, %v5153, 0.0
      %v5230 = vsel %vm579, %v5157, 0.0
      %v5231 = vsel %vm579, %v5161, 0.0
      %v5232 = vsel %vm579, %v5165, 0.0
      %v5233 = vsel %vm579, %v5169, 0.0
      %v5234 = vadd.f32 %v4850, %v5170
      %v5235 = vadd.f32 %v4851, %v5171
      %v5236 = vadd.f32 %v4852, %v5172
      %v5237 = vadd.f32 %v4853, %v5173
      %v5238 = vadd.f32 %v4854, %v5174
      %v5239 = vadd.f32 %v4855, %v5175
      %v5240 = vadd.f32 %v4856, %v5176
      %v5241 = vadd.f32 %v4857, %v5177
      %v5242 = vadd.f32 %v4858, %v5178
      %v5243 = vadd.f32 %v4859, %v5179
      %v5244 = vadd.f32 %v4860, %v5180
      %v5245 = vadd.f32 %v4861, %v5181
      %v5246 = vadd.f32 %v4862, %v5182
      %v5247 = vadd.f32 %v4863, %v5183
      %v5248 = vadd.f32 %v4864, %v5184
      %v5249 = vadd.f32 %v4865, %v5185
      %v5250 = vadd.f32 %v4866, %v5186
      %v5251 = vadd.f32 %v4867, %v5187
      %v5252 = vadd.f32 %v4868, %v5188
      %v5253 = vadd.f32 %v4869, %v5189
      %v5254 = vadd.f32 %v4870, %v5190
      %v5255 = vadd.f32 %v4871, %v5191
      %v5256 = vadd.f32 %v4872, %v5192
      %v5257 = vadd.f32 %v4873, %v5193
      %v5258 = vadd.f32 %v4874, %v5194
      %v5259 = vadd.f32 %v4875, %v5195
      %v5260 = vadd.f32 %v4876, %v5196
      %v5261 = vadd.f32 %v4877, %v5197
      %v5262 = vadd.f32 %v4878, %v5198
      %v5263 = vadd.f32 %v4879, %v5199
      %v5264 = vadd.f32 %v4880, %v5200
      %v5265 = vadd.f32 %v4881, %v5201
      %v5266 = vadd.f32 %v4882, %v5202
      %v5267 = vadd.f32 %v4883, %v5203
      %v5268 = vadd.f32 %v4884, %v5204
      %v5269 = vadd.f32 %v4885, %v5205
      %v5270 = vadd.f32 %v4886, %v5206
      %v5271 = vadd.f32 %v4887, %v5207
      %v5272 = vadd.f32 %v4888, %v5208
      %v5273 = vadd.f32 %v4889, %v5209
      %v5274 = vadd.f32 %v4890, %v5210
      %v5275 = vadd.f32 %v4891, %v5211
      %v5276 = vadd.f32 %v4892, %v5212
      %v5277 = vadd.f32 %v4893, %v5213
      %v5278 = vadd.f32 %v4894, %v5214
      %v5279 = vadd.f32 %v4895, %v5215
      %v5280 = vadd.f32 %v4896, %v5216
      %v5281 = vadd.f32 %v4897, %v5217
      %v5282 = vadd.f32 %v4898, %v5218
      %v5283 = vadd.f32 %v4899, %v5219
      %v5284 = vadd.f32 %v4900, %v5220
      %v5285 = vadd.f32 %v4901, %v5221
      %v5286 = vadd.f32 %v4902, %v5222
      %v5287 = vadd.f32 %v4903, %v5223
      %v5288 = vadd.f32 %v4904, %v5224
      %v5289 = vadd.f32 %v4905, %v5225
      %v5290 = vadd.f32 %v4906, %v5226
      %v5291 = vadd.f32 %v4907, %v5227
      %v5292 = vadd.f32 %v4908, %v5228
      %v5293 = vadd.f32 %v4909, %v5229
      %v5294 = vadd.f32 %v4910, %v5230
      %v5295 = vadd.f32 %v4911, %v5231
      %v5296 = vadd.f32 %v4912, %v5232
      %v5297 = vadd.f32 %v4913, %v5233
      %v5298 = vsub.f32 %v3437, %v5234
      %v5299 = vsub.f32 %v3442, %v5235
      %v5300 = vsub.f32 %v3447, %v5236
      %v5301 = vsub.f32 %v3452, %v5237
      %v5302 = vsub.f32 %v3457, %v5238
      %v5303 = vsub.f32 %v3462, %v5239
      %v5304 = vsub.f32 %v3467, %v5240
      %v5305 = vsub.f32 %v3472, %v5241
      %v5306 = vsub.f32 %v3542, %v5242
      %v5307 = vsub.f32 %v3547, %v5243
      %v5308 = vsub.f32 %v3552, %v5244
      %v5309 = vsub.f32 %v3557, %v5245
      %v5310 = vsub.f32 %v3562, %v5246
      %v5311 = vsub.f32 %v3567, %v5247
      %v5312 = vsub.f32 %v3572, %v5248
      %v5313 = vsub.f32 %v3577, %v5249
      %v5314 = vsub.f32 %v3647, %v5250
      %v5315 = vsub.f32 %v3652, %v5251
      %v5316 = vsub.f32 %v3657, %v5252
      %v5317 = vsub.f32 %v3662, %v5253
      %v5318 = vsub.f32 %v3667, %v5254
      %v5319 = vsub.f32 %v3672, %v5255
      %v5320 = vsub.f32 %v3677, %v5256
      %v5321 = vsub.f32 %v3682, %v5257
      %v5322 = vsub.f32 %v3752, %v5258
      %v5323 = vsub.f32 %v3757, %v5259
      %v5324 = vsub.f32 %v3762, %v5260
      %v5325 = vsub.f32 %v3767, %v5261
      %v5326 = vsub.f32 %v3772, %v5262
      %v5327 = vsub.f32 %v3777, %v5263
      %v5328 = vsub.f32 %v3782, %v5264
      %v5329 = vsub.f32 %v3787, %v5265
      %v5330 = vsub.f32 %v3857, %v5266
      %v5331 = vsub.f32 %v3862, %v5267
      %v5332 = vsub.f32 %v3867, %v5268
      %v5333 = vsub.f32 %v3872, %v5269
      %v5334 = vsub.f32 %v3877, %v5270
      %v5335 = vsub.f32 %v3882, %v5271
      %v5336 = vsub.f32 %v3887, %v5272
      %v5337 = vsub.f32 %v3892, %v5273
      %v5338 = vsub.f32 %v3962, %v5274
      %v5339 = vsub.f32 %v3967, %v5275
      %v5340 = vsub.f32 %v3972, %v5276
      %v5341 = vsub.f32 %v3977, %v5277
      %v5342 = vsub.f32 %v3982, %v5278
      %v5343 = vsub.f32 %v3987, %v5279
      %v5344 = vsub.f32 %v3992, %v5280
      %v5345 = vsub.f32 %v3997, %v5281
      %v5346 = vsub.f32 %v4067, %v5282
      %v5347 = vsub.f32 %v4072, %v5283
      %v5348 = vsub.f32 %v4077, %v5284
      %v5349 = vsub.f32 %v4082, %v5285
      %v5350 = vsub.f32 %v4087, %v5286
      %v5351 = vsub.f32 %v4092, %v5287
      %v5352 = vsub.f32 %v4097, %v5288
      %v5353 = vsub.f32 %v4102, %v5289
      %v5354 = vsub.f32 %v4172, %v5290
      %v5355 = vsub.f32 %v4177, %v5291
      %v5356 = vsub.f32 %v4182, %v5292
      %v5357 = vsub.f32 %v4187, %v5293
      %v5358 = vsub.f32 %v4192, %v5294
      %v5359 = vsub.f32 %v4197, %v5295
      %v5360 = vsub.f32 %v4202, %v5296
      %v5361 = vsub.f32 %v4207, %v5297
      %vm5362 = vcmask 48128
      %5363 = vst.msk [vmem:[%s334] sm:$0xff] %vm5362, %v5298
      %5364 = vst.msk [vmem:[%s334 + $0x8] sm:$0xff] %vm5362, %v5299
      %5365 = vst.msk [vmem:[%s334 + $0x10] sm:$0xff] %vm5362, %v5300
      %5366 = vst.msk [vmem:[%s334 + $0x18] sm:$0xff] %vm5362, %v5301
      %5367 = vst.msk [vmem:[%s334 + $0x20] sm:$0xff] %vm5362, %v5302
      %5368 = vst.msk [vmem:[%s334 + $0x28] sm:$0xff] %vm5362, %v5303
      %5369 = vst.msk [vmem:[%s334 + $0x30] sm:$0xff] %vm5362, %v5304
      %5370 = vst.msk [vmem:[%s334 + $0x38] sm:$0xff] %vm5362, %v5305
      %5371 = vst.msk [vmem:[%s334 + $0x40] sm:$0xff] %vm5362, %v5306
      %5372 = vst.msk [vmem:[%s334 + $0x48] sm:$0xff] %vm5362, %v5307
      %5373 = vst.msk [vmem:[%s334 + $0x50] sm:$0xff] %vm5362, %v5308
      %5374 = vst.msk [vmem:[%s334 + $0x58] sm:$0xff] %vm5362, %v5309
      %5375 = vst.msk [vmem:[%s334 + $0x60] sm:$0xff] %vm5362, %v5310
      %5376 = vst.msk [vmem:[%s334 + $0x68] sm:$0xff] %vm5362, %v5311
      %5377 = vst.msk [vmem:[%s334 + $0x70] sm:$0xff] %vm5362, %v5312
      %5378 = vst.msk [vmem:[%s334 + $0x78] sm:$0xff] %vm5362, %v5313
      %5379 = vst.msk [vmem:[%s334 + $0x80] sm:$0xff] %vm5362, %v5314
      %5380 = vst.msk [vmem:[%s334 + $0x88] sm:$0xff] %vm5362, %v5315
      %5381 = vst.msk [vmem:[%s334 + $0x90] sm:$0xff] %vm5362, %v5316
      %5382 = vst.msk [vmem:[%s334 + $0x98] sm:$0xff] %vm5362, %v5317
      %5383 = vst.msk [vmem:[%s334 + $0xa0] sm:$0xff] %vm5362, %v5318
      %5384 = vst.msk [vmem:[%s334 + $0xa8] sm:$0xff] %vm5362, %v5319
      %5385 = vst.msk [vmem:[%s334 + $0xb0] sm:$0xff] %vm5362, %v5320
      %5386 = vst.msk [vmem:[%s334 + $0xb8] sm:$0xff] %vm5362, %v5321
      %5387 = vst.msk [vmem:[%s334 + $0xc0] sm:$0xff] %vm5362, %v5322
      %5388 = vst.msk [vmem:[%s334 + $0xc8] sm:$0xff] %vm5362, %v5323
      %5389 = vst.msk [vmem:[%s334 + $0xd0] sm:$0xff] %vm5362, %v5324
      %5390 = vst.msk [vmem:[%s334 + $0xd8] sm:$0xff] %vm5362, %v5325
      %5391 = vst.msk [vmem:[%s334 + $0xe0] sm:$0xff] %vm5362, %v5326
      %5392 = vst.msk [vmem:[%s334 + $0xe8] sm:$0xff] %vm5362, %v5327
      %5393 = vst.msk [vmem:[%s334 + $0xf0] sm:$0xff] %vm5362, %v5328
      %5394 = vst.msk [vmem:[%s334 + $0xf8] sm:$0xff] %vm5362, %v5329
      %5395 = vst.msk [vmem:[%s334 + $0x100] sm:$0xff] %vm5362, %v5330
      %5396 = vst.msk [vmem:[%s334 + $0x108] sm:$0xff] %vm5362, %v5331
      %5397 = vst.msk [vmem:[%s334 + $0x110] sm:$0xff] %vm5362, %v5332
      %5398 = vst.msk [vmem:[%s334 + $0x118] sm:$0xff] %vm5362, %v5333
      %5399 = vst.msk [vmem:[%s334 + $0x120] sm:$0xff] %vm5362, %v5334
      %5400 = vst.msk [vmem:[%s334 + $0x128] sm:$0xff] %vm5362, %v5335
      %5401 = vst.msk [vmem:[%s334 + $0x130] sm:$0xff] %vm5362, %v5336
      %5402 = vst.msk [vmem:[%s334 + $0x138] sm:$0xff] %vm5362, %v5337
      %5403 = vst.msk [vmem:[%s334 + $0x140] sm:$0xff] %vm5362, %v5338
      %5404 = vst.msk [vmem:[%s334 + $0x148] sm:$0xff] %vm5362, %v5339
      %5405 = vst.msk [vmem:[%s334 + $0x150] sm:$0xff] %vm5362, %v5340
      %5406 = vst.msk [vmem:[%s334 + $0x158] sm:$0xff] %vm5362, %v5341
      %5407 = vst.msk [vmem:[%s334 + $0x160] sm:$0xff] %vm5362, %v5342
      %5408 = vst.msk [vmem:[%s334 + $0x168] sm:$0xff] %vm5362, %v5343
      %5409 = vst.msk [vmem:[%s334 + $0x170] sm:$0xff] %vm5362, %v5344
      %5410 = vst.msk [vmem:[%s334 + $0x178] sm:$0xff] %vm5362, %v5345
      %5411 = vst.msk [vmem:[%s334 + $0x180] sm:$0xff] %vm5362, %v5346
      %5412 = vst.msk [vmem:[%s334 + $0x188] sm:$0xff] %vm5362, %v5347
      %5413 = vst.msk [vmem:[%s334 + $0x190] sm:$0xff] %vm5362, %v5348
      %5414 = vst.msk [vmem:[%s334 + $0x198] sm:$0xff] %vm5362, %v5349
      %5415 = vst.msk [vmem:[%s334 + $0x1a0] sm:$0xff] %vm5362, %v5350
      %5416 = vst.msk [vmem:[%s334 + $0x1a8] sm:$0xff] %vm5362, %v5351
      %5417 = vst.msk [vmem:[%s334 + $0x1b0] sm:$0xff] %vm5362, %v5352
      %5418 = vst.msk [vmem:[%s334 + $0x1b8] sm:$0xff] %vm5362, %v5353
      %5419 = vst.msk [vmem:[%s334 + $0x1c0] sm:$0xff] %vm5362, %v5354
      %5420 = vst.msk [vmem:[%s334 + $0x1c8] sm:$0xff] %vm5362, %v5355
      %5421 = vst.msk [vmem:[%s334 + $0x1d0] sm:$0xff] %vm5362, %v5356
      %5422 = vst.msk [vmem:[%s334 + $0x1d8] sm:$0xff] %vm5362, %v5357
      %5423 = vst.msk [vmem:[%s334 + $0x1e0] sm:$0xff] %vm5362, %v5358
      %5424 = vst.msk [vmem:[%s334 + $0x1e8] sm:$0xff] %vm5362, %v5359
      %5425 = vst.msk [vmem:[%s334 + $0x1f0] sm:$0xff] %vm5362, %v5360
      %5426 = vst.msk [vmem:[%s334 + $0x1f8] sm:$0xff] %vm5362, %v5361
      %s5427 = smul.u32 8, %s18
      %p5428 = scmp.lt.s32.totalorder %s5427, 15
      %s5429 = scalar_select %p5428, %s5427, 15
      %s5430 = smul.addr %s5429, 8
      %s5431 = smul.addr %s5430, 8
      %s5432 = scalar_lea.vmem %s5, %s5431
      %s5433 = smul.u32 8, %s18
      %p5434 = scmp.lt.s32.totalorder %s5433, 15
      %s5435 = scalar_select %p5434, %s5433, 15
      %s5436 = smul.addr %s5435, 4
      %s5437 = scalar_lea.vmem %s6, %s5436
      // Predicated region
      $region41: #{tpu_custom_call.1} parent=39 // pred_check
        %p5438 = pneg %p166
      $region42: #{tpu_custom_call.1} parent=39 // pred_check_branch
        %5440 = sbr.rel (%p5438) target = $region44
      $region43: #{tpu_custom_call.1} parent=39 // pred_region
        %s5441 = smul.u32 8, %s18
      $region44: #{tpu_custom_call.1} parent=39 // pred_fallthru
        _
      // Predicated region
      $region45: #{tpu_custom_call.1} parent=39 // pred_check
        %p5442 = pneg %p192
      $region46: #{tpu_custom_call.1} parent=39 // pred_check_branch
        %5444 = sbr.rel (%p5442) target = $region48
      $region47: #{tpu_custom_call.1} parent=39 // pred_region
        %s5445 = smul.u32 8, %s18
      $region48: #{tpu_custom_call.1} parent=39 // pred_fallthru
        _
    $region40: #{tpu_custom_call.1} parent=5 // pred_fallthru
      _
    %p5446 = scmp.le.s32.totalorder 2, %s13
    // Predicated region
    $region49: #{tpu_custom_call.1} parent=5 // pred_check
      %p5447 = pneg %p5446
    $region50: #{tpu_custom_call.1} parent=5 // pred_check_branch
      %5449 = sbr.rel (%p5447) target = $region52
    $region51: #{tpu_custom_call.1} parent=5 // pred_region
      %s5450 = ssub.s32 %s13, 2
      // Predicated region
      $region53: #{tpu_custom_call.1} parent=51 // pred_check
        %p5451 = pneg %p172
      $region54: #{tpu_custom_call.1} parent=51 // pred_check_branch
        %5453 = sbr.rel (%p5451) target = $region56
      $region55: #{tpu_custom_call.1} parent=51 // pred_region
        %s5454 = smul.u32 8, %s19
        %p5455 = scmp.lt.s32.totalorder %s5454, 15
        %s5456 = scalar_select %p5455, %s5454, 15
        %s5457 = smul.addr %s5456, 8
        %s5458 = smul.addr %s5457, 8
        %s5459 = scalar_lea.vmem %s5, %s5458
      $region56: #{tpu_custom_call.1} parent=51 // pred_fallthru
        _
      // Predicated region
      $region57: #{tpu_custom_call.1} parent=51 // pred_check
        %p5460 = pneg %p198
      $region58: #{tpu_custom_call.1} parent=51 // pred_check_branch
        %5462 = sbr.rel (%p5460) target = $region60
      $region59: #{tpu_custom_call.1} parent=51 // pred_region
        %s5463 = smul.u32 8, %s19
        %p5464 = scmp.lt.s32.totalorder %s5463, 15
        %s5465 = scalar_select %p5464, %s5463, 15
        %s5466 = smul.addr %s5465, 4
        %s5467 = scalar_lea.vmem %s6, %s5466
      $region60: #{tpu_custom_call.1} parent=51 // pred_fallthru
        _
    $region52: #{tpu_custom_call.1} parent=5 // pred_fallthru
      _
  $region6: #{tpu_custom_call.1} parent=0 // loop_footer
    %s17 = sadd.s32 1, %s13
  $region7: #{tpu_custom_call.1} parent=0 // loop_footer_branch
    %12 = sbr.rel target = $region3
  $region8: #{tpu_custom_call.1} parent=0 // loop_exit
    _

</llo_original>
